<compile_context>
chip_gen: v7x
topology: tpu7x:2x2x1
jax: 0.10.0
libtpu: 0.0.40
codegen_flags: <defaults>
</compile_context>

<pallas_src>
import functools

import jax
import jax.numpy as jnp
from jax.experimental import pallas as pl
from jax.experimental.pallas import tpu as pltpu

EPS = 1e-5  # PyTorch BatchNorm2d default eps


# ---------------------------------------------------------------- fused Pallas kernel
def _resblk_kernel(xph_ref, w1_ref, w2_ref, wsc_ref,
                   g1_ref, b1_ref, gsc_ref, bsc_ref,
                   o_ref, pad1_ref, *, n, ho, wo, ch_in, ch_out):
    rows = n * ho * wo
    inv_rows = 1.0 / rows

    def bn(y, gamma, beta):
        # training-mode BatchNorm over the N*Ho*Wo rows, single pass over y
        mean = jnp.sum(y, axis=0, keepdims=True) * inv_rows
        mean_sq = jnp.sum(y * y, axis=0, keepdims=True) * inv_rows
        var = mean_sq - mean * mean                     # biased var, like PyTorch BN fwd
        return (y - mean) * jax.lax.rsqrt(var + EPS) * gamma + beta

    # ---- conv1 (3x3, stride 2): implicit GEMM over the 9 taps of the phase-split x.
    # Phase p = 2*(dy%2)+(dx%2) holds xpad[:, dy%2::2, dx%2::2, :], so tap (dy,dx) is a
    # plain unstrided window [dy//2 : dy//2+ho, dx//2 : dx//2+wo] of that phase.
    acc1 = jnp.zeros((rows, ch_out), jnp.float32)
    for dy in range(3):
        for dx in range(3):
            p = (dy % 2) * 2 + (dx % 2)
            qy, qx = dy // 2, dx // 2
            tap = xph_ref[p, :, qy:qy + ho, qx:qx + wo, :]       # (n, ho, wo, ch_in) f32
            tap2d = tap.reshape(rows, ch_in).astype(jnp.bfloat16)
            acc1 = acc1 + jnp.dot(tap2d, w1_ref[dy * 3 + dx],
                                  preferred_element_type=jnp.float32)
    out1 = jnp.maximum(bn(acc1, g1_ref[...], b1_ref[...]), 0.0)

    # stage out1 zero-padded (NHWC) in VMEM scratch: conv2 reads it without touching HBM
    pad1_ref[...] = jnp.zeros(pad1_ref.shape, pad1_ref.dtype)
    pad1_ref[:, 1:1 + ho, 1:1 + wo, :] = out1.reshape(n, ho, wo, ch_out)

    # ---- conv2 (3x3, stride 1, pad 1): implicit GEMM on the VMEM-resident out1.
    acc2 = jnp.zeros((rows, ch_out), jnp.float32)
    for dy in range(3):
        for dx in range(3):
            tap2d = pad1_ref[:, dy:dy + ho, dx:dx + wo, :].reshape(rows, ch_out)
            acc2 = acc2 + jnp.dot(tap2d.astype(jnp.bfloat16), w2_ref[dy * 3 + dx],
                                  preferred_element_type=jnp.float32)
    # NOTE: the PyTorch forward applies bn1 (not bn2) here as well -- reproduced.
    out2 = jnp.maximum(bn(acc2, g1_ref[...], b1_ref[...]), 0.0)

    # ---- projection shortcut: 1x1 conv, stride 2  ==  phase (1,1) of the padded input.
    sc2d = xph_ref[3, :, 0:ho, 0:wo, :].reshape(rows, ch_in).astype(jnp.bfloat16)
    ysc = jnp.dot(sc2d, wsc_ref[...], preferred_element_type=jnp.float32)
    res = bn(ysc, gsc_ref[...], bsc_ref[...]) + out2              # (rows, ch_out) f32

    # ---- lane-dense store: (rows, ch_out) -> (ch_out, rows) via identity matmul on the
    # MXU (out[c, r] = res[r, c]); with ch_out=8, rows=128 this is exactly one full vreg.
    rr = jax.lax.broadcasted_iota(jnp.int32, (ch_out, ch_out), 0)
    cc = jax.lax.broadcasted_iota(jnp.int32, (ch_out, ch_out), 1)
    eye = (rr == cc).astype(jnp.float32)
    o_ref[...] = jax.lax.dot_general(eye, res, (((1,), (1,)), ((), ())),
                                     preferred_element_type=jnp.float32)


# ---------------------------------------------------------------- JAX-side wrapper
def resblk_forward(x_nchw, params, stride):
    n, ch_in, h, w = x_nchw.shape
    ch_out = params["w1"].shape[0]
    # TODO(synk): identity-shortcut (ch_in == ch_out) and stride != 2 paths not wired up.
    assert ch_in != ch_out, "demo exercises the projection-shortcut branch (`extra`)"
    assert stride == 2 and h % 2 == 0 and w % 2 == 0
    ho, wo = h // stride, w // stride
    rows = n * ho * wo
    # keeps the in-kernel (n,ho,wo,c)->(rows,c) reshapes layout-preserving (sublane aligned)
    assert wo % 8 == 0

    # --- cheap XLA-side prep (1x data): pad + space-to-depth(2) phase split, NHWC,
    # kept in f32 so all in-kernel slicing/reshapes stay on the native (8,128) layout;
    # operands are cast to bf16 per tap right before the MXU dot.
    x_nhwc = jnp.transpose(x_nchw, (0, 2, 3, 1))
    xp = jnp.pad(x_nhwc, ((0, 0), (1, 1), (1, 1), (0, 0)))
    phases = jnp.stack([xp[:, ry::2, rx::2, :] for ry in (0, 1) for rx in (0, 1)],
                       axis=0)                                  # (4, n, h/2+1, w/2+1, ch_in)

    def wmat3(wt):  # (Cout, Cin, 3, 3) -> (9, Cin, Cout) bf16, tap-major
        return jnp.transpose(wt, (2, 3, 1, 0)).reshape(9, wt.shape[1], wt.shape[0]) \
                  .astype(jnp.bfloat16)

    w1 = wmat3(params["w1"])
    w2 = wmat3(params["w2"])
    wsc = jnp.transpose(params["wsc"][:, :, 0, 0], (1, 0)).astype(jnp.bfloat16)  # (Cin, Cout)
    row2 = lambda v: v.reshape(1, -1).astype(jnp.float32)
    # conv biases are NOT passed: a per-channel constant is exactly cancelled by the
    # batch-stat BN that immediately follows each conv.

    kernel = functools.partial(_resblk_kernel, n=n, ho=ho, wo=wo,
                               ch_in=ch_in, ch_out=ch_out)
    out_t = pl.pallas_call(
        kernel,
        out_shape=jax.ShapeDtypeStruct((ch_out, rows), jnp.float32),
        in_specs=[pl.BlockSpec(memory_space=pltpu.MemorySpace.VMEM)] * 8,
        out_specs=pl.BlockSpec(memory_space=pltpu.MemorySpace.VMEM),
        scratch_shapes=[pltpu.VMEM((n, ho + 2, wo + 2, ch_out), jnp.float32)],
    )(phases, w1, w2, wsc,
      row2(params["bn1_g"]), row2(params["bn1_b"]),
      row2(params["bnsc_g"]), row2(params["bnsc_b"]))

    # (Cout, n*ho*wo) -> NCHW
    return jnp.transpose(out_t.reshape(ch_out, n, ho, wo), (1, 0, 2, 3))


# ---------------------------------------------------------------- params
def init_params(key, ch_in, ch_out):
    ks = jax.random.split(key, 10)

    def rn(k, shape, scale=0.1):
        return scale * jax.random.normal(k, shape, jnp.float32)

    return {
        "w1": rn(ks[0], (ch_out, ch_in, 3, 3)),
        "b1": rn(ks[1], (ch_out,)),          # used by reference only (BN cancels bias)
        "w2": rn(ks[2], (ch_out, ch_out, 3, 3)),
        "b2": rn(ks[3], (ch_out,)),          # used by reference only
        "bn1_g": 1.0 + rn(ks[4], (ch_out,)),
        "bn1_b": rn(ks[5], (ch_out,)),
        # bn2 exists in the PyTorch module but forward never uses it (bn1 applied twice),
        # reproduced faithfully, so bn2 params are omitted.
        "wsc": rn(ks[6], (ch_out, ch_in, 1, 1)),
        "bsc": rn(ks[7], (ch_out,)),         # used by reference only
        "bnsc_g": 1.0 + rn(ks[8], (ch_out,)),
        "bnsc_b": rn(ks[9], (ch_out,)),
    }


# ---------------------------------------------------------------- pure-JAX reference
def resblk_ref(x_nchw, params, stride):
    x = jnp.transpose(x_nchw, (0, 2, 3, 1))  # NHWC

    def conv(inp, wt, b, s, pad):
        return jax.lax.conv_general_dilated(
            inp, jnp.transpose(wt, (2, 3, 1, 0)), (s, s), [(pad, pad), (pad, pad)],
            dimension_numbers=("NHWC", "HWIO", "NHWC")) + b

    def bn(y, g, b):
        m = jnp.mean(y, axis=(0, 1, 2), keepdims=True)
        v = jnp.mean((y - m) ** 2, axis=(0, 1, 2), keepdims=True)
        return (y - m) / jnp.sqrt(v + EPS) * g + b

    y1 = jnp.maximum(bn(conv(x, params["w1"], params["b1"], stride, 1),
                        params["bn1_g"], params["bn1_b"]), 0.0)
    y2 = jnp.maximum(bn(conv(y1, params["w2"], params["b2"], 1, 1),
                        params["bn1_g"], params["bn1_b"]), 0.0)
    ysc = bn(conv(x, params["wsc"], params["bsc"], stride, 0),
             params["bnsc_g"], params["bnsc_b"])
    return jnp.transpose(ysc + y2, (0, 3, 1, 2))


# ---------------------------------------------------------------- main
if __name__ == "__main__":
    N, CH_IN, CH_OUT, H, W, STRIDE = 2, 4, 8, 16, 16, 2

    key = jax.random.PRNGKey(0)
    kx, kp = jax.random.split(key)
    x = jax.random.normal(kx, (N, CH_IN, H, W), jnp.float32)
    params = init_params(kp, CH_IN, CH_OUT)

    fwd = jax.jit(functools.partial(resblk_forward, stride=STRIDE))
    out = jax.block_until_ready(fwd(x, params))

    assert out.shape == (N, CH_OUT, H // STRIDE, W // STRIDE), out.shape
    ref = resblk_ref(x, params, STRIDE)
    # tolerance sized for bf16 MXU operands in the kernel vs the f32 XLA reference
    if not jnp.allclose(out, ref, rtol=5e-2, atol=5e-2):
        err = float(jnp.max(jnp.abs(out - ref)))
        raise AssertionError(f"Pallas output mismatch vs reference (max abs err {err})")

    print("KERNEL_OK")
</pallas_src>

<mosaic_0001>
module attributes {stable_mosaic.version = 11 : i64} {
  func.func @_resblk_kernel(%arg0: memref<4x2x9x9x4xf32, #tpu.memory_space<vmem>>, %arg1: memref<9x4x8xbf16, #tpu.memory_space<vmem>>, %arg2: memref<9x8x8xbf16, #tpu.memory_space<vmem>>, %arg3: memref<4x8xbf16, #tpu.memory_space<vmem>>, %arg4: memref<1x8xf32, #tpu.memory_space<vmem>>, %arg5: memref<1x8xf32, #tpu.memory_space<vmem>>, %arg6: memref<1x8xf32, #tpu.memory_space<vmem>>, %arg7: memref<1x8xf32, #tpu.memory_space<vmem>>, %arg8: memref<8x128xf32, #tpu.memory_space<vmem>>, %arg9: memref<2x10x10x8xf32, #tpu.memory_space<vmem>>) attributes {dimension_semantics = [], scalar_prefetch = 0 : i64, scratch_operands = 1 : i64, tpu.core_type = #tpu.core_type<tc>} {
    %cst = arith.constant 0.000000e+00 : f32
    %0 = vector.broadcast %cst : f32 to vector<128x8xf32>
    %c0 = arith.constant 0 : index
    %c0_0 = arith.constant 0 : index
    %c0_1 = arith.constant 0 : index
    %c0_2 = arith.constant 0 : index
    %c0_3 = arith.constant 0 : index
    %1 = vector.load %arg0[%c0, %c0_0, %c0_1, %c0_2, %c0_3] : memref<4x2x9x9x4xf32, #tpu.memory_space<vmem>>, vector<1x2x8x8x4xf32>
    %2 = vector.shape_cast %1 : vector<1x2x8x8x4xf32> to vector<2x8x8x4xf32>
    %3 = vector.shape_cast %2 : vector<2x8x8x4xf32> to vector<128x4xf32>
    %4 = arith.truncf %3 : vector<128x4xf32> to vector<128x4xbf16>
    %c0_4 = arith.constant 0 : index
    %c0_5 = arith.constant 0 : index
    %c0_6 = arith.constant 0 : index
    %5 = vector.load %arg1[%c0_4, %c0_5, %c0_6] : memref<9x4x8xbf16, #tpu.memory_space<vmem>>, vector<1x4x8xbf16>
    %6 = vector.shape_cast %5 : vector<1x4x8xbf16> to vector<4x8xbf16>
    %cst_7 = arith.constant dense<0.000000e+00> : vector<128x8xf32>
    %7 = tpu.matmul %4, %6, %cst_7 {dimension_numbers = #tpu.dot_dimension_numbers<[1], [0], [0], [1], [0, 0, 1, 1], [], []>} : vector<128x4xbf16>, vector<4x8xbf16>, vector<128x8xf32> -> vector<128x8xf32>
    %8 = arith.addf %0, %7 : vector<128x8xf32>
    %c1 = arith.constant 1 : index
    %c0_8 = arith.constant 0 : index
    %c0_9 = arith.constant 0 : index
    %c0_10 = arith.constant 0 : index
    %c0_11 = arith.constant 0 : index
    %9 = vector.load %arg0[%c1, %c0_8, %c0_9, %c0_10, %c0_11] : memref<4x2x9x9x4xf32, #tpu.memory_space<vmem>>, vector<1x2x8x8x4xf32>
    %10 = vector.shape_cast %9 : vector<1x2x8x8x4xf32> to vector<2x8x8x4xf32>
    %11 = vector.shape_cast %10 : vector<2x8x8x4xf32> to vector<128x4xf32>
    %12 = arith.truncf %11 : vector<128x4xf32> to vector<128x4xbf16>
    %c1_12 = arith.constant 1 : index
    %c0_13 = arith.constant 0 : index
    %c0_14 = arith.constant 0 : index
    %13 = vector.load %arg1[%c1_12, %c0_13, %c0_14] : memref<9x4x8xbf16, #tpu.memory_space<vmem>>, vector<1x4x8xbf16>
    %14 = vector.shape_cast %13 : vector<1x4x8xbf16> to vector<4x8xbf16>
    %cst_15 = arith.constant dense<0.000000e+00> : vector<128x8xf32>
    %15 = tpu.matmul %12, %14, %cst_15 {dimension_numbers = #tpu.dot_dimension_numbers<[1], [0], [0], [1], [0, 0, 1, 1], [], []>} : vector<128x4xbf16>, vector<4x8xbf16>, vector<128x8xf32> -> vector<128x8xf32>
    %16 = arith.addf %8, %15 : vector<128x8xf32>
    %c0_16 = arith.constant 0 : index
    %c0_17 = arith.constant 0 : index
    %c0_18 = arith.constant 0 : index
    %c1_19 = arith.constant 1 : index
    %c0_20 = arith.constant 0 : index
    %17 = vector.load %arg0[%c0_16, %c0_17, %c0_18, %c1_19, %c0_20] : memref<4x2x9x9x4xf32, #tpu.memory_space<vmem>>, vector<1x2x8x8x4xf32>
    %18 = vector.shape_cast %17 : vector<1x2x8x8x4xf32> to vector<2x8x8x4xf32>
    %19 = vector.shape_cast %18 : vector<2x8x8x4xf32> to vector<128x4xf32>
    %20 = arith.truncf %19 : vector<128x4xf32> to vector<128x4xbf16>
    %c2 = arith.constant 2 : index
    %c0_21 = arith.constant 0 : index
    %c0_22 = arith.constant 0 : index
    %21 = vector.load %arg1[%c2, %c0_21, %c0_22] : memref<9x4x8xbf16, #tpu.memory_space<vmem>>, vector<1x4x8xbf16>
    %22 = vector.shape_cast %21 : vector<1x4x8xbf16> to vector<4x8xbf16>
    %cst_23 = arith.constant dense<0.000000e+00> : vector<128x8xf32>
    %23 = tpu.matmul %20, %22, %cst_23 {dimension_numbers = #tpu.dot_dimension_numbers<[1], [0], [0], [1], [0, 0, 1, 1], [], []>} : vector<128x4xbf16>, vector<4x8xbf16>, vector<128x8xf32> -> vector<128x8xf32>
    %24 = arith.addf %16, %23 : vector<128x8xf32>
    %c2_24 = arith.constant 2 : index
    %c0_25 = arith.constant 0 : index
    %c0_26 = arith.constant 0 : index
    %c0_27 = arith.constant 0 : index
    %c0_28 = arith.constant 0 : index
    %25 = vector.load %arg0[%c2_24, %c0_25, %c0_26, %c0_27, %c0_28] : memref<4x2x9x9x4xf32, #tpu.memory_space<vmem>>, vector<1x2x8x8x4xf32>
    %26 = vector.shape_cast %25 : vector<1x2x8x8x4xf32> to vector<2x8x8x4xf32>
    %27 = vector.shape_cast %26 : vector<2x8x8x4xf32> to vector<128x4xf32>
    %28 = arith.truncf %27 : vector<128x4xf32> to vector<128x4xbf16>
    %c3 = arith.constant 3 : index
    %c0_29 = arith.constant 0 : index
    %c0_30 = arith.constant 0 : index
    %29 = vector.load %arg1[%c3, %c0_29, %c0_30] : memref<9x4x8xbf16, #tpu.memory_space<vmem>>, vector<1x4x8xbf16>
    %30 = vector.shape_cast %29 : vector<1x4x8xbf16> to vector<4x8xbf16>
    %cst_31 = arith.constant dense<0.000000e+00> : vector<128x8xf32>
    %31 = tpu.matmul %28, %30, %cst_31 {dimension_numbers = #tpu.dot_dimension_numbers<[1], [0], [0], [1], [0, 0, 1, 1], [], []>} : vector<128x4xbf16>, vector<4x8xbf16>, vector<128x8xf32> -> vector<128x8xf32>
    %32 = arith.addf %24, %31 : vector<128x8xf32>
    %c3_32 = arith.constant 3 : index
    %c0_33 = arith.constant 0 : index
    %c0_34 = arith.constant 0 : index
    %c0_35 = arith.constant 0 : index
    %c0_36 = arith.constant 0 : index
    %33 = vector.load %arg0[%c3_32, %c0_33, %c0_34, %c0_35, %c0_36] : memref<4x2x9x9x4xf32, #tpu.memory_space<vmem>>, vector<1x2x8x8x4xf32>
    %34 = vector.shape_cast %33 : vector<1x2x8x8x4xf32> to vector<2x8x8x4xf32>
    %35 = vector.shape_cast %34 : vector<2x8x8x4xf32> to vector<128x4xf32>
    %36 = arith.truncf %35 : vector<128x4xf32> to vector<128x4xbf16>
    %c4 = arith.constant 4 : index
    %c0_37 = arith.constant 0 : index
    %c0_38 = arith.constant 0 : index
    %37 = vector.load %arg1[%c4, %c0_37, %c0_38] : memref<9x4x8xbf16, #tpu.memory_space<vmem>>, vector<1x4x8xbf16>
    %38 = vector.shape_cast %37 : vector<1x4x8xbf16> to vector<4x8xbf16>
    %cst_39 = arith.constant dense<0.000000e+00> : vector<128x8xf32>
    %39 = tpu.matmul %36, %38, %cst_39 {dimension_numbers = #tpu.dot_dimension_numbers<[1], [0], [0], [1], [0, 0, 1, 1], [], []>} : vector<128x4xbf16>, vector<4x8xbf16>, vector<128x8xf32> -> vector<128x8xf32>
    %40 = arith.addf %32, %39 : vector<128x8xf32>
    %c2_40 = arith.constant 2 : index
    %c0_41 = arith.constant 0 : index
    %c0_42 = arith.constant 0 : index
    %c1_43 = arith.constant 1 : index
    %c0_44 = arith.constant 0 : index
    %41 = vector.load %arg0[%c2_40, %c0_41, %c0_42, %c1_43, %c0_44] : memref<4x2x9x9x4xf32, #tpu.memory_space<vmem>>, vector<1x2x8x8x4xf32>
    %42 = vector.shape_cast %41 : vector<1x2x8x8x4xf32> to vector<2x8x8x4xf32>
    %43 = vector.shape_cast %42 : vector<2x8x8x4xf32> to vector<128x4xf32>
    %44 = arith.truncf %43 : vector<128x4xf32> to vector<128x4xbf16>
    %c5 = arith.constant 5 : index
    %c0_45 = arith.constant 0 : index
    %c0_46 = arith.constant 0 : index
    %45 = vector.load %arg1[%c5, %c0_45, %c0_46] : memref<9x4x8xbf16, #tpu.memory_space<vmem>>, vector<1x4x8xbf16>
    %46 = vector.shape_cast %45 : vector<1x4x8xbf16> to vector<4x8xbf16>
    %cst_47 = arith.constant dense<0.000000e+00> : vector<128x8xf32>
    %47 = tpu.matmul %44, %46, %cst_47 {dimension_numbers = #tpu.dot_dimension_numbers<[1], [0], [0], [1], [0, 0, 1, 1], [], []>} : vector<128x4xbf16>, vector<4x8xbf16>, vector<128x8xf32> -> vector<128x8xf32>
    %48 = arith.addf %40, %47 : vector<128x8xf32>
    %c0_48 = arith.constant 0 : index
    %c0_49 = arith.constant 0 : index
    %c1_50 = arith.constant 1 : index
    %c0_51 = arith.constant 0 : index
    %c0_52 = arith.constant 0 : index
    %49 = vector.load %arg0[%c0_48, %c0_49, %c1_50, %c0_51, %c0_52] : memref<4x2x9x9x4xf32, #tpu.memory_space<vmem>>, vector<1x2x8x8x4xf32>
    %50 = vector.shape_cast %49 : vector<1x2x8x8x4xf32> to vector<2x8x8x4xf32>
    %51 = vector.shape_cast %50 : vector<2x8x8x4xf32> to vector<128x4xf32>
    %52 = arith.truncf %51 : vector<128x4xf32> to vector<128x4xbf16>
    %c6 = arith.constant 6 : index
    %c0_53 = arith.constant 0 : index
    %c0_54 = arith.constant 0 : index
    %53 = vector.load %arg1[%c6, %c0_53, %c0_54] : memref<9x4x8xbf16, #tpu.memory_space<vmem>>, vector<1x4x8xbf16>
    %54 = vector.shape_cast %53 : vector<1x4x8xbf16> to vector<4x8xbf16>
    %cst_55 = arith.constant dense<0.000000e+00> : vector<128x8xf32>
    %55 = tpu.matmul %52, %54, %cst_55 {dimension_numbers = #tpu.dot_dimension_numbers<[1], [0], [0], [1], [0, 0, 1, 1], [], []>} : vector<128x4xbf16>, vector<4x8xbf16>, vector<128x8xf32> -> vector<128x8xf32>
    %56 = arith.addf %48, %55 : vector<128x8xf32>
    %c1_56 = arith.constant 1 : index
    %c0_57 = arith.constant 0 : index
    %c1_58 = arith.constant 1 : index
    %c0_59 = arith.constant 0 : index
    %c0_60 = arith.constant 0 : index
    %57 = vector.load %arg0[%c1_56, %c0_57, %c1_58, %c0_59, %c0_60] : memref<4x2x9x9x4xf32, #tpu.memory_space<vmem>>, vector<1x2x8x8x4xf32>
    %58 = vector.shape_cast %57 : vector<1x2x8x8x4xf32> to vector<2x8x8x4xf32>
    %59 = vector.shape_cast %58 : vector<2x8x8x4xf32> to vector<128x4xf32>
    %60 = arith.truncf %59 : vector<128x4xf32> to vector<128x4xbf16>
    %c7 = arith.constant 7 : index
    %c0_61 = arith.constant 0 : index
    %c0_62 = arith.constant 0 : index
    %61 = vector.load %arg1[%c7, %c0_61, %c0_62] : memref<9x4x8xbf16, #tpu.memory_space<vmem>>, vector<1x4x8xbf16>
    %62 = vector.shape_cast %61 : vector<1x4x8xbf16> to vector<4x8xbf16>
    %cst_63 = arith.constant dense<0.000000e+00> : vector<128x8xf32>
    %63 = tpu.matmul %60, %62, %cst_63 {dimension_numbers = #tpu.dot_dimension_numbers<[1], [0], [0], [1], [0, 0, 1, 1], [], []>} : vector<128x4xbf16>, vector<4x8xbf16>, vector<128x8xf32> -> vector<128x8xf32>
    %64 = arith.addf %56, %63 : vector<128x8xf32>
    %c0_64 = arith.constant 0 : index
    %c0_65 = arith.constant 0 : index
    %c1_66 = arith.constant 1 : index
    %c1_67 = arith.constant 1 : index
    %c0_68 = arith.constant 0 : index
    %65 = vector.load %arg0[%c0_64, %c0_65, %c1_66, %c1_67, %c0_68] : memref<4x2x9x9x4xf32, #tpu.memory_space<vmem>>, vector<1x2x8x8x4xf32>
    %66 = vector.shape_cast %65 : vector<1x2x8x8x4xf32> to vector<2x8x8x4xf32>
    %67 = vector.shape_cast %66 : vector<2x8x8x4xf32> to vector<128x4xf32>
    %68 = arith.truncf %67 : vector<128x4xf32> to vector<128x4xbf16>
    %c8 = arith.constant 8 : index
    %c0_69 = arith.constant 0 : index
    %c0_70 = arith.constant 0 : index
    %69 = vector.load %arg1[%c8, %c0_69, %c0_70] : memref<9x4x8xbf16, #tpu.memory_space<vmem>>, vector<1x4x8xbf16>
    %70 = vector.shape_cast %69 : vector<1x4x8xbf16> to vector<4x8xbf16>
    %cst_71 = arith.constant dense<0.000000e+00> : vector<128x8xf32>
    %71 = tpu.matmul %68, %70, %cst_71 {dimension_numbers = #tpu.dot_dimension_numbers<[1], [0], [0], [1], [0, 0, 1, 1], [], []>} : vector<128x4xbf16>, vector<4x8xbf16>, vector<128x8xf32> -> vector<128x8xf32>
    %72 = arith.addf %64, %71 : vector<128x8xf32>
    %c0_72 = arith.constant 0 : index
    %c0_73 = arith.constant 0 : index
    %73 = vector.load %arg4[%c0_72, %c0_73] : memref<1x8xf32, #tpu.memory_space<vmem>>, vector<1x8xf32>
    %c0_74 = arith.constant 0 : index
    %c0_75 = arith.constant 0 : index
    %74 = vector.load %arg5[%c0_74, %c0_75] : memref<1x8xf32, #tpu.memory_space<vmem>>, vector<1x8xf32>
    %cst_76 = arith.constant dense<0.000000e+00> : vector<8xf32>
    %75 = vector.multi_reduction <add>, %72, %cst_76 [0] : vector<128x8xf32> to vector<8xf32>
    %76 = vector.shape_cast %75 : vector<8xf32> to vector<1x8xf32>
    %cst_77 = arith.constant 7.812500e-03 : f32
    %77 = vector.broadcast %cst_77 : f32 to vector<1x8xf32>
    %78 = arith.mulf %76, %77 : vector<1x8xf32>
    %79 = arith.mulf %72, %72 : vector<128x8xf32>
    %cst_78 = arith.constant dense<0.000000e+00> : vector<8xf32>
    %80 = vector.multi_reduction <add>, %79, %cst_78 [0] : vector<128x8xf32> to vector<8xf32>
    %81 = vector.shape_cast %80 : vector<8xf32> to vector<1x8xf32>
    %cst_79 = arith.constant 7.812500e-03 : f32
    %82 = vector.broadcast %cst_79 : f32 to vector<1x8xf32>
    %83 = arith.mulf %81, %82 : vector<1x8xf32>
    %84 = arith.mulf %78, %78 : vector<1x8xf32>
    %85 = arith.subf %83, %84 : vector<1x8xf32>
    %86 = vector.broadcast %78 : vector<1x8xf32> to vector<128x8xf32>
    %87 = arith.subf %72, %86 : vector<128x8xf32>
    %cst_80 = arith.constant 9.99999974E-6 : f32
    %88 = vector.broadcast %cst_80 : f32 to vector<1x8xf32>
    %89 = arith.addf %85, %88 : vector<1x8xf32>
    %90 = math.rsqrt %89 : vector<1x8xf32>
    %91 = vector.broadcast %90 : vector<1x8xf32> to vector<128x8xf32>
    %92 = arith.mulf %87, %91 : vector<128x8xf32>
    %93 = vector.broadcast %73 : vector<1x8xf32> to vector<128x8xf32>
    %94 = arith.mulf %92, %93 : vector<128x8xf32>
    %95 = vector.broadcast %74 : vector<1x8xf32> to vector<128x8xf32>
    %96 = arith.addf %94, %95 : vector<128x8xf32>
    %cst_81 = arith.constant 0.000000e+00 : f32
    %97 = vector.broadcast %cst_81 : f32 to vector<128x8xf32>
    %98 = arith.maximumf %96, %97 : vector<128x8xf32>
    %cst_82 = arith.constant 0.000000e+00 : f32
    %99 = vector.broadcast %cst_82 : f32 to vector<2x10x10x8xf32>
    %c0_83 = arith.constant 0 : index
    %c0_84 = arith.constant 0 : index
    %c0_85 = arith.constant 0 : index
    %c0_86 = arith.constant 0 : index
    %100 = vector.load %arg9[%c0_83, %c0_84, %c0_85, %c0_86] : memref<2x10x10x8xf32, #tpu.memory_space<vmem>>, vector<2x10x10x8xf32>
    tpu.vector_store %arg9[%c0_83, %c0_84, %c0_85, %c0_86], %99 {strides = array<i32>} : memref<2x10x10x8xf32, #tpu.memory_space<vmem>>, vector<2x10x10x8xf32>,
    %101 = vector.shape_cast %98 : vector<128x8xf32> to vector<2x8x8x8xf32>
    %c0_87 = arith.constant 0 : index
    %c1_88 = arith.constant 1 : index
    %c1_89 = arith.constant 1 : index
    %c0_90 = arith.constant 0 : index
    %102 = vector.load %arg9[%c0_87, %c1_88, %c1_89, %c0_90] : memref<2x10x10x8xf32, #tpu.memory_space<vmem>>, vector<2x8x8x8xf32>
    tpu.vector_store %arg9[%c0_87, %c1_88, %c1_89, %c0_90], %101 {strides = array<i32>} : memref<2x10x10x8xf32, #tpu.memory_space<vmem>>, vector<2x8x8x8xf32>,
    %cst_91 = arith.constant 0.000000e+00 : f32
    %103 = vector.broadcast %cst_91 : f32 to vector<128x8xf32>
    %c0_92 = arith.constant 0 : index
    %c0_93 = arith.constant 0 : index
    %c0_94 = arith.constant 0 : index
    %c0_95 = arith.constant 0 : index
    %104 = vector.load %arg9[%c0_92, %c0_93, %c0_94, %c0_95] : memref<2x10x10x8xf32, #tpu.memory_space<vmem>>, vector<2x8x8x8xf32>
    %105 = vector.shape_cast %104 : vector<2x8x8x8xf32> to vector<128x8xf32>
    %106 = arith.truncf %105 : vector<128x8xf32> to vector<128x8xbf16>
    %c0_96 = arith.constant 0 : index
    %c0_97 = arith.constant 0 : index
    %c0_98 = arith.constant 0 : index
    %107 = vector.load %arg2[%c0_96, %c0_97, %c0_98] : memref<9x8x8xbf16, #tpu.memory_space<vmem>>, vector<1x8x8xbf16>
    %108 = vector.shape_cast %107 : vector<1x8x8xbf16> to vector<8x8xbf16>
    %cst_99 = arith.constant dense<0.000000e+00> : vector<128x8xf32>
    %109 = tpu.matmul %106, %108, %cst_99 {dimension_numbers = #tpu.dot_dimension_numbers<[1], [0], [0], [1], [0, 0, 1, 1], [], []>} : vector<128x8xbf16>, vector<8x8xbf16>, vector<128x8xf32> -> vector<128x8xf32>
    %110 = arith.addf %103, %109 : vector<128x8xf32>
    %c0_100 = arith.constant 0 : index
    %c0_101 = arith.constant 0 : index
    %c1_102 = arith.constant 1 : index
    %c0_103 = arith.constant 0 : index
    %111 = vector.load %arg9[%c0_100, %c0_101, %c1_102, %c0_103] : memref<2x10x10x8xf32, #tpu.memory_space<vmem>>, vector<2x8x8x8xf32>
    %112 = vector.shape_cast %111 : vector<2x8x8x8xf32> to vector<128x8xf32>
    %113 = arith.truncf %112 : vector<128x8xf32> to vector<128x8xbf16>
    %c1_104 = arith.constant 1 : index
    %c0_105 = arith.constant 0 : index
    %c0_106 = arith.constant 0 : index
    %114 = vector.load %arg2[%c1_104, %c0_105, %c0_106] : memref<9x8x8xbf16, #tpu.memory_space<vmem>>, vector<1x8x8xbf16>
    %115 = vector.shape_cast %114 : vector<1x8x8xbf16> to vector<8x8xbf16>
    %cst_107 = arith.constant dense<0.000000e+00> : vector<128x8xf32>
    %116 = tpu.matmul %113, %115, %cst_107 {dimension_numbers = #tpu.dot_dimension_numbers<[1], [0], [0], [1], [0, 0, 1, 1], [], []>} : vector<128x8xbf16>, vector<8x8xbf16>, vector<128x8xf32> -> vector<128x8xf32>
    %117 = arith.addf %110, %116 : vector<128x8xf32>
    %c0_108 = arith.constant 0 : index
    %c0_109 = arith.constant 0 : index
    %c2_110 = arith.constant 2 : index
    %c0_111 = arith.constant 0 : index
    %118 = vector.load %arg9[%c0_108, %c0_109, %c2_110, %c0_111] : memref<2x10x10x8xf32, #tpu.memory_space<vmem>>, vector<2x8x8x8xf32>
    %119 = vector.shape_cast %118 : vector<2x8x8x8xf32> to vector<128x8xf32>
    %120 = arith.truncf %119 : vector<128x8xf32> to vector<128x8xbf16>
    %c2_112 = arith.constant 2 : index
    %c0_113 = arith.constant 0 : index
    %c0_114 = arith.constant 0 : index
    %121 = vector.load %arg2[%c2_112, %c0_113, %c0_114] : memref<9x8x8xbf16, #tpu.memory_space<vmem>>, vector<1x8x8xbf16>
    %122 = vector.shape_cast %121 : vector<1x8x8xbf16> to vector<8x8xbf16>
    %cst_115 = arith.constant dense<0.000000e+00> : vector<128x8xf32>
    %123 = tpu.matmul %120, %122, %cst_115 {dimension_numbers = #tpu.dot_dimension_numbers<[1], [0], [0], [1], [0, 0, 1, 1], [], []>} : vector<128x8xbf16>, vector<8x8xbf16>, vector<128x8xf32> -> vector<128x8xf32>
    %124 = arith.addf %117, %123 : vector<128x8xf32>
    %c0_116 = arith.constant 0 : index
    %c1_117 = arith.constant 1 : index
    %c0_118 = arith.constant 0 : index
    %c0_119 = arith.constant 0 : index
    %125 = vector.load %arg9[%c0_116, %c1_117, %c0_118, %c0_119] : memref<2x10x10x8xf32, #tpu.memory_space<vmem>>, vector<2x8x8x8xf32>
    %126 = vector.shape_cast %125 : vector<2x8x8x8xf32> to vector<128x8xf32>
    %127 = arith.truncf %126 : vector<128x8xf32> to vector<128x8xbf16>
    %c3_120 = arith.constant 3 : index
    %c0_121 = arith.constant 0 : index
    %c0_122 = arith.constant 0 : index
    %128 = vector.load %arg2[%c3_120, %c0_121, %c0_122] : memref<9x8x8xbf16, #tpu.memory_space<vmem>>, vector<1x8x8xbf16>
    %129 = vector.shape_cast %128 : vector<1x8x8xbf16> to vector<8x8xbf16>
    %cst_123 = arith.constant dense<0.000000e+00> : vector<128x8xf32>
    %130 = tpu.matmul %127, %129, %cst_123 {dimension_numbers = #tpu.dot_dimension_numbers<[1], [0], [0], [1], [0, 0, 1, 1], [], []>} : vector<128x8xbf16>, vector<8x8xbf16>, vector<128x8xf32> -> vector<128x8xf32>
    %131 = arith.addf %124, %130 : vector<128x8xf32>
    %c0_124 = arith.constant 0 : index
    %c1_125 = arith.constant 1 : index
    %c1_126 = arith.constant 1 : index
    %c0_127 = arith.constant 0 : index
    %132 = vector.load %arg9[%c0_124, %c1_125, %c1_126, %c0_127] : memref<2x10x10x8xf32, #tpu.memory_space<vmem>>, vector<2x8x8x8xf32>
    %133 = vector.shape_cast %132 : vector<2x8x8x8xf32> to vector<128x8xf32>
    %134 = arith.truncf %133 : vector<128x8xf32> to vector<128x8xbf16>
    %c4_128 = arith.constant 4 : index
    %c0_129 = arith.constant 0 : index
    %c0_130 = arith.constant 0 : index
    %135 = vector.load %arg2[%c4_128, %c0_129, %c0_130] : memref<9x8x8xbf16, #tpu.memory_space<vmem>>, vector<1x8x8xbf16>
    %136 = vector.shape_cast %135 : vector<1x8x8xbf16> to vector<8x8xbf16>
    %cst_131 = arith.constant dense<0.000000e+00> : vector<128x8xf32>
    %137 = tpu.matmul %134, %136, %cst_131 {dimension_numbers = #tpu.dot_dimension_numbers<[1], [0], [0], [1], [0, 0, 1, 1], [], []>} : vector<128x8xbf16>, vector<8x8xbf16>, vector<128x8xf32> -> vector<128x8xf32>
    %138 = arith.addf %131, %137 : vector<128x8xf32>
    %c0_132 = arith.constant 0 : index
    %c1_133 = arith.constant 1 : index
    %c2_134 = arith.constant 2 : index
    %c0_135 = arith.constant 0 : index
    %139 = vector.load %arg9[%c0_132, %c1_133, %c2_134, %c0_135] : memref<2x10x10x8xf32, #tpu.memory_space<vmem>>, vector<2x8x8x8xf32>
    %140 = vector.shape_cast %139 : vector<2x8x8x8xf32> to vector<128x8xf32>
    %141 = arith.truncf %140 : vector<128x8xf32> to vector<128x8xbf16>
    %c5_136 = arith.constant 5 : index
    %c0_137 = arith.constant 0 : index
    %c0_138 = arith.constant 0 : index
    %142 = vector.load %arg2[%c5_136, %c0_137, %c0_138] : memref<9x8x8xbf16, #tpu.memory_space<vmem>>, vector<1x8x8xbf16>
    %143 = vector.shape_cast %142 : vector<1x8x8xbf16> to vector<8x8xbf16>
    %cst_139 = arith.constant dense<0.000000e+00> : vector<128x8xf32>
    %144 = tpu.matmul %141, %143, %cst_139 {dimension_numbers = #tpu.dot_dimension_numbers<[1], [0], [0], [1], [0, 0, 1, 1], [], []>} : vector<128x8xbf16>, vector<8x8xbf16>, vector<128x8xf32> -> vector<128x8xf32>
    %145 = arith.addf %138, %144 : vector<128x8xf32>
    %c0_140 = arith.constant 0 : index
    %c2_141 = arith.constant 2 : index
    %c0_142 = arith.constant 0 : index
    %c0_143 = arith.constant 0 : index
    %146 = vector.load %arg9[%c0_140, %c2_141, %c0_142, %c0_143] : memref<2x10x10x8xf32, #tpu.memory_space<vmem>>, vector<2x8x8x8xf32>
    %147 = vector.shape_cast %146 : vector<2x8x8x8xf32> to vector<128x8xf32>
    %148 = arith.truncf %147 : vector<128x8xf32> to vector<128x8xbf16>
    %c6_144 = arith.constant 6 : index
    %c0_145 = arith.constant 0 : index
    %c0_146 = arith.constant 0 : index
    %149 = vector.load %arg2[%c6_144, %c0_145, %c0_146] : memref<9x8x8xbf16, #tpu.memory_space<vmem>>, vector<1x8x8xbf16>
    %150 = vector.shape_cast %149 : vector<1x8x8xbf16> to vector<8x8xbf16>
    %cst_147 = arith.constant dense<0.000000e+00> : vector<128x8xf32>
    %151 = tpu.matmul %148, %150, %cst_147 {dimension_numbers = #tpu.dot_dimension_numbers<[1], [0], [0], [1], [0, 0, 1, 1], [], []>} : vector<128x8xbf16>, vector<8x8xbf16>, vector<128x8xf32> -> vector<128x8xf32>
    %152 = arith.addf %145, %151 : vector<128x8xf32>
    %c0_148 = arith.constant 0 : index
    %c2_149 = arith.constant 2 : index
    %c1_150 = arith.constant 1 : index
    %c0_151 = arith.constant 0 : index
    %153 = vector.load %arg9[%c0_148, %c2_149, %c1_150, %c0_151] : memref<2x10x10x8xf32, #tpu.memory_space<vmem>>, vector<2x8x8x8xf32>
    %154 = vector.shape_cast %153 : vector<2x8x8x8xf32> to vector<128x8xf32>
    %155 = arith.truncf %154 : vector<128x8xf32> to vector<128x8xbf16>
    %c7_152 = arith.constant 7 : index
    %c0_153 = arith.constant 0 : index
    %c0_154 = arith.constant 0 : index
    %156 = vector.load %arg2[%c7_152, %c0_153, %c0_154] : memref<9x8x8xbf16, #tpu.memory_space<vmem>>, vector<1x8x8xbf16>
    %157 = vector.shape_cast %156 : vector<1x8x8xbf16> to vector<8x8xbf16>
    %cst_155 = arith.constant dense<0.000000e+00> : vector<128x8xf32>
    %158 = tpu.matmul %155, %157, %cst_155 {dimension_numbers = #tpu.dot_dimension_numbers<[1], [0], [0], [1], [0, 0, 1, 1], [], []>} : vector<128x8xbf16>, vector<8x8xbf16>, vector<128x8xf32> -> vector<128x8xf32>
    %159 = arith.addf %152, %158 : vector<128x8xf32>
    %c0_156 = arith.constant 0 : index
    %c2_157 = arith.constant 2 : index
    %c2_158 = arith.constant 2 : index
    %c0_159 = arith.constant 0 : index
    %160 = vector.load %arg9[%c0_156, %c2_157, %c2_158, %c0_159] : memref<2x10x10x8xf32, #tpu.memory_space<vmem>>, vector<2x8x8x8xf32>
    %161 = vector.shape_cast %160 : vector<2x8x8x8xf32> to vector<128x8xf32>
    %162 = arith.truncf %161 : vector<128x8xf32> to vector<128x8xbf16>
    %c8_160 = arith.constant 8 : index
    %c0_161 = arith.constant 0 : index
    %c0_162 = arith.constant 0 : index
    %163 = vector.load %arg2[%c8_160, %c0_161, %c0_162] : memref<9x8x8xbf16, #tpu.memory_space<vmem>>, vector<1x8x8xbf16>
    %164 = vector.shape_cast %163 : vector<1x8x8xbf16> to vector<8x8xbf16>
    %cst_163 = arith.constant dense<0.000000e+00> : vector<128x8xf32>
    %165 = tpu.matmul %162, %164, %cst_163 {dimension_numbers = #tpu.dot_dimension_numbers<[1], [0], [0], [1], [0, 0, 1, 1], [], []>} : vector<128x8xbf16>, vector<8x8xbf16>, vector<128x8xf32> -> vector<128x8xf32>
    %166 = arith.addf %159, %165 : vector<128x8xf32>
    %c0_164 = arith.constant 0 : index
    %c0_165 = arith.constant 0 : index
    %167 = vector.load %arg4[%c0_164, %c0_165] : memref<1x8xf32, #tpu.memory_space<vmem>>, vector<1x8xf32>
    %c0_166 = arith.constant 0 : index
    %c0_167 = arith.constant 0 : index
    %168 = vector.load %arg5[%c0_166, %c0_167] : memref<1x8xf32, #tpu.memory_space<vmem>>, vector<1x8xf32>
    %cst_168 = arith.constant dense<0.000000e+00> : vector<8xf32>
    %169 = vector.multi_reduction <add>, %166, %cst_168 [0] : vector<128x8xf32> to vector<8xf32>
    %170 = vector.shape_cast %169 : vector<8xf32> to vector<1x8xf32>
    %cst_169 = arith.constant 7.812500e-03 : f32
    %171 = vector.broadcast %cst_169 : f32 to vector<1x8xf32>
    %172 = arith.mulf %170, %171 : vector<1x8xf32>
    %173 = arith.mulf %166, %166 : vector<128x8xf32>
    %cst_170 = arith.constant dense<0.000000e+00> : vector<8xf32>
    %174 = vector.multi_reduction <add>, %173, %cst_170 [0] : vector<128x8xf32> to vector<8xf32>
    %175 = vector.shape_cast %174 : vector<8xf32> to vector<1x8xf32>
    %cst_171 = arith.constant 7.812500e-03 : f32
    %176 = vector.broadcast %cst_171 : f32 to vector<1x8xf32>
    %177 = arith.mulf %175, %176 : vector<1x8xf32>
    %178 = arith.mulf %172, %172 : vector<1x8xf32>
    %179 = arith.subf %177, %178 : vector<1x8xf32>
    %180 = vector.broadcast %172 : vector<1x8xf32> to vector<128x8xf32>
    %181 = arith.subf %166, %180 : vector<128x8xf32>
    %cst_172 = arith.constant 9.99999974E-6 : f32
    %182 = vector.broadcast %cst_172 : f32 to vector<1x8xf32>
    %183 = arith.addf %179, %182 : vector<1x8xf32>
    %184 = math.rsqrt %183 : vector<1x8xf32>
    %185 = vector.broadcast %184 : vector<1x8xf32> to vector<128x8xf32>
    %186 = arith.mulf %181, %185 : vector<128x8xf32>
    %187 = vector.broadcast %167 : vector<1x8xf32> to vector<128x8xf32>
    %188 = arith.mulf %186, %187 : vector<128x8xf32>
    %189 = vector.broadcast %168 : vector<1x8xf32> to vector<128x8xf32>
    %190 = arith.addf %188, %189 : vector<128x8xf32>
    %cst_173 = arith.constant 0.000000e+00 : f32
    %191 = vector.broadcast %cst_173 : f32 to vector<128x8xf32>
    %192 = arith.maximumf %190, %191 : vector<128x8xf32>
    %c3_174 = arith.constant 3 : index
    %c0_175 = arith.constant 0 : index
    %c0_176 = arith.constant 0 : index
    %c0_177 = arith.constant 0 : index
    %c0_178 = arith.constant 0 : index
    %193 = vector.load %arg0[%c3_174, %c0_175, %c0_176, %c0_177, %c0_178] : memref<4x2x9x9x4xf32, #tpu.memory_space<vmem>>, vector<1x2x8x8x4xf32>
    %194 = vector.shape_cast %193 : vector<1x2x8x8x4xf32> to vector<2x8x8x4xf32>
    %195 = vector.shape_cast %194 : vector<2x8x8x4xf32> to vector<128x4xf32>
    %196 = arith.truncf %195 : vector<128x4xf32> to vector<128x4xbf16>
    %c0_179 = arith.constant 0 : index
    %c0_180 = arith.constant 0 : index
    %197 = vector.load %arg3[%c0_179, %c0_180] : memref<4x8xbf16, #tpu.memory_space<vmem>>, vector<4x8xbf16>
    %cst_181 = arith.constant dense<0.000000e+00> : vector<128x8xf32>
    %198 = tpu.matmul %196, %197, %cst_181 {dimension_numbers = #tpu.dot_dimension_numbers<[1], [0], [0], [1], [0, 0, 1, 1], [], []>} : vector<128x4xbf16>, vector<4x8xbf16>, vector<128x8xf32> -> vector<128x8xf32>
    %c0_182 = arith.constant 0 : index
    %c0_183 = arith.constant 0 : index
    %199 = vector.load %arg6[%c0_182, %c0_183] : memref<1x8xf32, #tpu.memory_space<vmem>>, vector<1x8xf32>
    %c0_184 = arith.constant 0 : index
    %c0_185 = arith.constant 0 : index
    %200 = vector.load %arg7[%c0_184, %c0_185] : memref<1x8xf32, #tpu.memory_space<vmem>>, vector<1x8xf32>
    %cst_186 = arith.constant dense<0.000000e+00> : vector<8xf32>
    %201 = vector.multi_reduction <add>, %198, %cst_186 [0] : vector<128x8xf32> to vector<8xf32>
    %202 = vector.shape_cast %201 : vector<8xf32> to vector<1x8xf32>
    %cst_187 = arith.constant 7.812500e-03 : f32
    %203 = vector.broadcast %cst_187 : f32 to vector<1x8xf32>
    %204 = arith.mulf %202, %203 : vector<1x8xf32>
    %205 = arith.mulf %198, %198 : vector<128x8xf32>
    %cst_188 = arith.constant dense<0.000000e+00> : vector<8xf32>
    %206 = vector.multi_reduction <add>, %205, %cst_188 [0] : vector<128x8xf32> to vector<8xf32>
    %207 = vector.shape_cast %206 : vector<8xf32> to vector<1x8xf32>
    %cst_189 = arith.constant 7.812500e-03 : f32
    %208 = vector.broadcast %cst_189 : f32 to vector<1x8xf32>
    %209 = arith.mulf %207, %208 : vector<1x8xf32>
    %210 = arith.mulf %204, %204 : vector<1x8xf32>
    %211 = arith.subf %209, %210 : vector<1x8xf32>
    %212 = vector.broadcast %204 : vector<1x8xf32> to vector<128x8xf32>
    %213 = arith.subf %198, %212 : vector<128x8xf32>
    %cst_190 = arith.constant 9.99999974E-6 : f32
    %214 = vector.broadcast %cst_190 : f32 to vector<1x8xf32>
    %215 = arith.addf %211, %214 : vector<1x8xf32>
    %216 = math.rsqrt %215 : vector<1x8xf32>
    %217 = vector.broadcast %216 : vector<1x8xf32> to vector<128x8xf32>
    %218 = arith.mulf %213, %217 : vector<128x8xf32>
    %219 = vector.broadcast %199 : vector<1x8xf32> to vector<128x8xf32>
    %220 = arith.mulf %218, %219 : vector<128x8xf32>
    %221 = vector.broadcast %200 : vector<1x8xf32> to vector<128x8xf32>
    %222 = arith.addf %220, %221 : vector<128x8xf32>
    %223 = arith.addf %222, %192 : vector<128x8xf32>
    %224 = tpu.iota {dimensions = array<i32: 0>} : vector<8x8xi32>
    %225 = tpu.iota {dimensions = array<i32: 1>} : vector<8x8xi32>
    %226 = arith.cmpi eq, %224, %225 : vector<8x8xi32>
    %227 = arith.extui %226 : vector<8x8xi1> to vector<8x8xi32>
    %228 = arith.sitofp %227 : vector<8x8xi32> to vector<8x8xf32>
    %cst_191 = arith.constant dense<0.000000e+00> : vector<8x128xf32>
    %229 = tpu.matmul %228, %223, %cst_191 {dimension_numbers = #tpu.dot_dimension_numbers<[1], [1], [0], [0], [0, 0, 1, 0], [], []>} : vector<8x8xf32>, vector<128x8xf32>, vector<8x128xf32> -> vector<8x128xf32>
    %c0_192 = arith.constant 0 : index
    %c0_193 = arith.constant 0 : index
    %230 = vector.load %arg8[%c0_192, %c0_193] : memref<8x128xf32, #tpu.memory_space<vmem>>, vector<8x128xf32>
    tpu.vector_store %arg8[%c0_192, %c0_193], %229 {strides = array<i32>} : memref<8x128xf32, #tpu.memory_space<vmem>>, vector<8x128xf32>,
    return
  }
}

</mosaic_0001>

<llo_original>
// kernel: resblk_forward.1
$region0: #{resblk_forward.1}
  #allocation0 [shape = 'u32[]', space=smem, size = 0x4, offset = 0x4, fixed_abs, tag = 'smem constant byte address 0x4 - core index']
  #allocation1 [shape = 'u32[144,128]{1,0:T(1,128)}', space=vmem, size = 0x12000, scoped, tag = 'internal scratch']
  #allocation2 [shape = 'f32[2,10,10,8]{3,2,1,0:T(8,128)}', space=vmem, size = 0x28000, scoped, tag = 'scratch operand']
  %s0 = inlined_call_operand.vmem [shape: f32[4,2,9,9,4], index: 0, kind: input, shape index: {}]
  %s1 = inlined_call_operand.vmem [shape: bf16[9,4,8], index: 1, kind: input, shape index: {}]
  %s2 = inlined_call_operand.vmem [shape: bf16[9,8,8], index: 2, kind: input, shape index: {}]
  %s3 = inlined_call_operand.vmem [shape: bf16[4,8], index: 3, kind: input, shape index: {}]
  %s4 = inlined_call_operand.vmem [shape: f32[1,8], index: 4, kind: input, shape index: {}]
  %s5 = inlined_call_operand.vmem [shape: f32[1,8], index: 5, kind: input, shape index: {}]
  %s6 = inlined_call_operand.vmem [shape: f32[1,8], index: 6, kind: input, shape index: {}]
  %s7 = inlined_call_operand.vmem [shape: f32[1,8], index: 7, kind: input, shape index: {}]
  %s8 = inlined_call_operand.vmem [shape: f32[8,128], index: 8, kind: output, shape index: {}]
  %s9 = sld [smem:[#allocation0]]
  $region42: #{resblk_forward.1} parent=0
    _
  %s11 = ssub.s32 1, %s9
  %s12 = scalar_select 0, %s11, %s9
  // Predicated region
  $region2: #{resblk_forward.1} parent=0 // pred_check
    _
  $region3: #{resblk_forward.1} parent=0 // pred_check_branch
    %14 = sbr.rel (0) target = $region5
  $region4: #{resblk_forward.1} parent=0 // pred_region
    _
  $region5: #{resblk_forward.1} parent=0 // pred_fallthru
    _
  // Predicated region
  $region6: #{resblk_forward.1} parent=0 // pred_check
    _
  $region7: #{resblk_forward.1} parent=0 // pred_check_branch
    %16 = sbr.rel (0) target = $region9
  $region8: #{resblk_forward.1} parent=0 // pred_region
    _
  $region9: #{resblk_forward.1} parent=0 // pred_fallthru
    _
  // Predicated region
  $region10: #{resblk_forward.1} parent=0 // pred_check
    _
  $region11: #{resblk_forward.1} parent=0 // pred_check_branch
    %18 = sbr.rel (0) target = $region13
  $region12: #{resblk_forward.1} parent=0 // pred_region
    _
  $region13: #{resblk_forward.1} parent=0 // pred_fallthru
    _
  // Predicated region
  $region14: #{resblk_forward.1} parent=0 // pred_check
    _
  $region15: #{resblk_forward.1} parent=0 // pred_check_branch
    %20 = sbr.rel (0) target = $region17
  $region16: #{resblk_forward.1} parent=0 // pred_region
    _
  $region17: #{resblk_forward.1} parent=0 // pred_fallthru
    _
  // Predicated region
  $region18: #{resblk_forward.1} parent=0 // pred_check
    _
  $region19: #{resblk_forward.1} parent=0 // pred_check_branch
    %22 = sbr.rel (0) target = $region21
  $region20: #{resblk_forward.1} parent=0 // pred_region
    _
  $region21: #{resblk_forward.1} parent=0 // pred_fallthru
    _
  // Predicated region
  $region22: #{resblk_forward.1} parent=0 // pred_check
    _
  $region23: #{resblk_forward.1} parent=0 // pred_check_branch
    %24 = sbr.rel (0) target = $region25
  $region24: #{resblk_forward.1} parent=0 // pred_region
    _
  $region25: #{resblk_forward.1} parent=0 // pred_fallthru
    _
  // Predicated region
  $region26: #{resblk_forward.1} parent=0 // pred_check
    _
  $region27: #{resblk_forward.1} parent=0 // pred_check_branch
    %26 = sbr.rel (0) target = $region29
  $region28: #{resblk_forward.1} parent=0 // pred_region
    _
  $region29: #{resblk_forward.1} parent=0 // pred_fallthru
    _
  // Predicated region
  $region30: #{resblk_forward.1} parent=0 // pred_check
    _
  $region31: #{resblk_forward.1} parent=0 // pred_check_branch
    %28 = sbr.rel (0) target = $region33
  $region32: #{resblk_forward.1} parent=0 // pred_region
    _
  $region33: #{resblk_forward.1} parent=0 // pred_fallthru
    _
  %v30 = vld [vmem:[%s0] sm:$0xff]
  %v31 = vld [vmem:[%s0 + $0x10] sm:$0xff]
  %v32 = vld [vmem:[%s0 + $0x20] sm:$0xff]
  %v33 = vld [vmem:[%s0 + $0x30] sm:$0xff]
  %v34 = vld [vmem:[%s0 + $0x40] sm:$0xff]
  %v35 = vld [vmem:[%s0 + $0x50] sm:$0xff]
  %v36 = vld [vmem:[%s0 + $0x60] sm:$0xff]
  %v37 = vld [vmem:[%s0 + $0x70] sm:$0xff]
  %v38 = vld [vmem:[%s0 + $0x90] sm:$0xff]
  %v39 = vld [vmem:[%s0 + $0xa0] sm:$0xff]
  %v40 = vld [vmem:[%s0 + $0xb0] sm:$0xff]
  %v41 = vld [vmem:[%s0 + $0xc0] sm:$0xff]
  %v42 = vld [vmem:[%s0 + $0xd0] sm:$0xff]
  %v43 = vld [vmem:[%s0 + $0xe0] sm:$0xff]
  %v44 = vld [vmem:[%s0 + $0xf0] sm:$0xff]
  %v45 = vld [vmem:[%s0 + $0x100] sm:$0xff]
  %v46 = vpack.c.bf16 %v31, %v30
  %v47 = vpack.c.bf16 %v33, %v32
  %v48 = vpack.c.bf16 %v35, %v34
  %v49 = vpack.c.bf16 %v37, %v36
  %v50 = vpack.c.bf16 %v39, %v38
  %v51 = vpack.c.bf16 %v41, %v40
  %v52 = vpack.c.bf16 %v43, %v42
  %v53 = vpack.c.bf16 %v45, %v44
  %v54 = vld [vmem:[%s1] sm:$0x3]
  %s55 = scalar_lea.vmem %s0, 288
  %v56 = vld [vmem:[%s55] sm:$0xff]
  %v57 = vld [vmem:[%s55 + $0x10] sm:$0xff]
  %v58 = vld [vmem:[%s55 + $0x20] sm:$0xff]
  %v59 = vld [vmem:[%s55 + $0x30] sm:$0xff]
  %v60 = vld [vmem:[%s55 + $0x40] sm:$0xff]
  %v61 = vld [vmem:[%s55 + $0x50] sm:$0xff]
  %v62 = vld [vmem:[%s55 + $0x60] sm:$0xff]
  %v63 = vld [vmem:[%s55 + $0x70] sm:$0xff]
  %v64 = vld [vmem:[%s55 + $0x90] sm:$0xff]
  %v65 = vld [vmem:[%s55 + $0xa0] sm:$0xff]
  %v66 = vld [vmem:[%s55 + $0xb0] sm:$0xff]
  %v67 = vld [vmem:[%s55 + $0xc0] sm:$0xff]
  %v68 = vld [vmem:[%s55 + $0xd0] sm:$0xff]
  %v69 = vld [vmem:[%s55 + $0xe0] sm:$0xff]
  %v70 = vld [vmem:[%s55 + $0xf0] sm:$0xff]
  %v71 = vld [vmem:[%s55 + $0x100] sm:$0xff]
  %v72 = vpack.c.bf16 %v57, %v56
  %v73 = vpack.c.bf16 %v59, %v58
  %v74 = vpack.c.bf16 %v61, %v60
  %v75 = vpack.c.bf16 %v63, %v62
  %v76 = vpack.c.bf16 %v65, %v64
  %v77 = vpack.c.bf16 %v67, %v66
  %v78 = vpack.c.bf16 %v69, %v68
  %v79 = vpack.c.bf16 %v71, %v70
  %s80 = scalar_lea.vmem %s1, 2
  %v81 = vld [vmem:[%s80] sm:$0x3]
  %vm82 = vcmask 31744
  %v84 = vsel %vm82, %v72, 0
  %v87 = vsel %vm82, %v73, 0
  %v90 = vsel %vm82, %v74, 0
  %v93 = vsel %vm82, %v75, 0
  %v96 = vsel %vm82, %v76, 0
  %v99 = vsel %vm82, %v77, 0
  %v102 = vsel %vm82, %v78, 0
  %v105 = vsel %vm82, %v79, 0
  %vm107 = vcmask 1041408
  %v109 = vsel %vm107, %v81, 0
  %111 = vmatprep.subr.bf16.mxu0 0
  %112 = vmatpush1.bf16.msra.mxu0 %v109
  %113 = vmatprep.subr.bf16.mxu0 0
  %114 = vmatpush1.bf16.msra.mxu0 0
  %115 = vmatprep.subr.bf16.mxu0 0
  %116 = vmatpush1.bf16.msra.mxu0 0
  %117 = vmatprep.subr.bf16.mxu0 0
  %118 = vmatpush1.bf16.msra.mxu0 0
  %119 = vmatprep.subr.bf16.mxu0 0
  %120 = vmatpush1.bf16.msra.mxu0 0
  %121 = vmatprep.subr.bf16.mxu0 0
  %122 = vmatpush1.bf16.msra.mxu0 0
  %123 = vmatprep.subr.bf16.mxu0 0
  %124 = vmatpush1.bf16.msra.mxu0 0
  %125 = vmatprep.subr.bf16.mxu0 0
  %126 = vmatpush1.bf16.msra.mxu0 0
  %127 = vmatprep.subr.bf16.mxu0 0
  %128 = vmatpush1.bf16.msra.mxu0 0
  %129 = vmatprep.subr.bf16.mxu0 0
  %130 = vmatpush1.bf16.msra.mxu0 0
  %131 = vmatprep.subr.bf16.mxu0 0
  %132 = vmatpush1.bf16.msra.mxu0 0
  %133 = vmatprep.subr.bf16.mxu0 0
  %134 = vmatpush1.bf16.msra.mxu0 0
  %135 = vmatprep.subr.bf16.mxu0 0
  %136 = vmatpush1.bf16.msra.mxu0 0
  %137 = vmatprep.subr.bf16.mxu0 0
  %138 = vmatpush1.bf16.msra.mxu0 0
  %139 = vmatprep.subr.bf16.mxu0 0
  %140 = vmatpush1.bf16.msra.mxu0 0
  %141 = vmatprep.subr.bf16.mxu0 0
  %142 = vmatpush1.bf16.msra.mxu0 0
  %143 = vmatprep.mubr.bf16.mxu0 0
  %144 = vmatmul.mubr.bf16.gmra.mrb[0].mxu0 %v84
  %v145 = vpop.f32.mrb[0].mxu0
  %v146 = vadd.f32 0.0, %v145
  %v147 = vpop.f32.mrb[0].mxu0
  %v148 = vpop.f32.mrb[0].mxu0
  %v149 = vadd.f32 0.0, %v148
  %v150 = vpop.f32.mrb[0].mxu0
  %151 = vmatprep.mubr.bf16.mxu0 0
  %152 = vmatmul.mubr.bf16.gmra.mrb[0].mxu0 %v87
  %v153 = vpop.f32.mrb[0].mxu0
  %v154 = vadd.f32 0.0, %v153
  %v155 = vpop.f32.mrb[0].mxu0
  %v156 = vpop.f32.mrb[0].mxu0
  %v157 = vadd.f32 0.0, %v156
  %v158 = vpop.f32.mrb[0].mxu0
  %159 = vmatprep.mubr.bf16.mxu0 0
  %160 = vmatmul.mubr.bf16.gmra.mrb[0].mxu0 %v90
  %v161 = vpop.f32.mrb[0].mxu0
  %v162 = vadd.f32 0.0, %v161
  %v163 = vpop.f32.mrb[0].mxu0
  %v164 = vpop.f32.mrb[0].mxu0
  %v165 = vadd.f32 0.0, %v164
  %v166 = vpop.f32.mrb[0].mxu0
  %167 = vmatprep.mubr.bf16.mxu0 0
  %168 = vmatmul.mubr.bf16.gmra.mrb[0].mxu0 %v93
  %v169 = vpop.f32.mrb[0].mxu0
  %v170 = vadd.f32 0.0, %v169
  %v171 = vpop.f32.mrb[0].mxu0
  %v172 = vpop.f32.mrb[0].mxu0
  %v173 = vadd.f32 0.0, %v172
  %v174 = vpop.f32.mrb[0].mxu0
  %175 = vmatprep.mubr.bf16.mxu0 0
  %176 = vmatmul.mubr.bf16.gmra.mrb[0].mxu0 %v96
  %v177 = vpop.f32.mrb[0].mxu0
  %v178 = vadd.f32 0.0, %v177
  %v179 = vpop.f32.mrb[0].mxu0
  %v180 = vpop.f32.mrb[0].mxu0
  %v181 = vadd.f32 0.0, %v180
  %v182 = vpop.f32.mrb[0].mxu0
  %183 = vmatprep.mubr.bf16.mxu0 0
  %184 = vmatmul.mubr.bf16.gmra.mrb[0].mxu0 %v99
  %v185 = vpop.f32.mrb[0].mxu0
  %v186 = vadd.f32 0.0, %v185
  %v187 = vpop.f32.mrb[0].mxu0
  %v188 = vpop.f32.mrb[0].mxu0
  %v189 = vadd.f32 0.0, %v188
  %v190 = vpop.f32.mrb[0].mxu0
  %191 = vmatprep.mubr.bf16.mxu0 0
  %192 = vmatmul.mubr.bf16.gmra.mrb[0].mxu0 %v102
  %v193 = vpop.f32.mrb[0].mxu0
  %v194 = vadd.f32 0.0, %v193
  %v195 = vpop.f32.mrb[0].mxu0
  %v196 = vpop.f32.mrb[0].mxu0
  %v197 = vadd.f32 0.0, %v196
  %v198 = vpop.f32.mrb[0].mxu0
  %199 = vmatprep.mubr.bf16.mxu0 0
  %200 = vmatmul.mubr.bf16.gmra.mrb[0].mxu0 %v105
  %v201 = vpop.f32.mrb[0].mxu0
  %v202 = vadd.f32 0.0, %v201
  %v203 = vpop.f32.mrb[0].mxu0
  %v204 = vpop.f32.mrb[0].mxu0
  %v205 = vadd.f32 0.0, %v204
  %v206 = vpop.f32.mrb[0].mxu0
  %207 = vdwg.mxu0
  %v209 = vsel %vm82, %v46, 0
  %v212 = vsel %vm82, %v47, 0
  %v215 = vsel %vm82, %v48, 0
  %v218 = vsel %vm82, %v49, 0
  %v221 = vsel %vm82, %v50, 0
  %v224 = vsel %vm82, %v51, 0
  %v227 = vsel %vm82, %v52, 0
  %v230 = vsel %vm82, %v53, 0
  %v233 = vsel %vm107, %v54, 0
  %235 = vmatprep.subr.bf16.mxu0 0
  %236 = vmatpush1.bf16.msra.mxu0 %v233
  %237 = vmatprep.subr.bf16.mxu0 0
  %238 = vmatpush1.bf16.msra.mxu0 0
  %239 = vmatprep.subr.bf16.mxu0 0
  %240 = vmatpush1.bf16.msra.mxu0 0
  %241 = vmatprep.subr.bf16.mxu0 0
  %242 = vmatpush1.bf16.msra.mxu0 0
  %243 = vmatprep.subr.bf16.mxu0 0
  %244 = vmatpush1.bf16.msra.mxu0 0
  %245 = vmatprep.subr.bf16.mxu0 0
  %246 = vmatpush1.bf16.msra.mxu0 0
  %247 = vmatprep.subr.bf16.mxu0 0
  %248 = vmatpush1.bf16.msra.mxu0 0
  %249 = vmatprep.subr.bf16.mxu0 0
  %250 = vmatpush1.bf16.msra.mxu0 0
  %251 = vmatprep.subr.bf16.mxu0 0
  %252 = vmatpush1.bf16.msra.mxu0 0
  %253 = vmatprep.subr.bf16.mxu0 0
  %254 = vmatpush1.bf16.msra.mxu0 0
  %255 = vmatprep.subr.bf16.mxu0 0
  %256 = vmatpush1.bf16.msra.mxu0 0
  %257 = vmatprep.subr.bf16.mxu0 0
  %258 = vmatpush1.bf16.msra.mxu0 0
  %259 = vmatprep.subr.bf16.mxu0 0
  %260 = vmatpush1.bf16.msra.mxu0 0
  %261 = vmatprep.subr.bf16.mxu0 0
  %262 = vmatpush1.bf16.msra.mxu0 0
  %263 = vmatprep.subr.bf16.mxu0 0
  %264 = vmatpush1.bf16.msra.mxu0 0
  %265 = vmatprep.subr.bf16.mxu0 0
  %266 = vmatpush1.bf16.msra.mxu0 0
  %267 = vmatprep.mubr.bf16.mxu0 0
  %268 = vmatmul.mubr.bf16.gmra.mrb[0].mxu0 %v209
  %v269 = vpop.f32.mrb[0].mxu0
  %v270 = vadd.f32 %v146, %v269
  %v271 = vpop.f32.mrb[0].mxu0
  %v272 = vpop.f32.mrb[0].mxu0
  %v273 = vadd.f32 %v149, %v272
  %v274 = vpop.f32.mrb[0].mxu0
  %275 = vmatprep.mubr.bf16.mxu0 0
  %276 = vmatmul.mubr.bf16.gmra.mrb[0].mxu0 %v212
  %v277 = vpop.f32.mrb[0].mxu0
  %v278 = vadd.f32 %v154, %v277
  %v279 = vpop.f32.mrb[0].mxu0
  %v280 = vpop.f32.mrb[0].mxu0
  %v281 = vadd.f32 %v157, %v280
  %v282 = vpop.f32.mrb[0].mxu0
  %283 = vmatprep.mubr.bf16.mxu0 0
  %284 = vmatmul.mubr.bf16.gmra.mrb[0].mxu0 %v215
  %v285 = vpop.f32.mrb[0].mxu0
  %v286 = vadd.f32 %v162, %v285
  %v287 = vpop.f32.mrb[0].mxu0
  %v288 = vpop.f32.mrb[0].mxu0
  %v289 = vadd.f32 %v165, %v288
  %v290 = vpop.f32.mrb[0].mxu0
  %291 = vmatprep.mubr.bf16.mxu0 0
  %292 = vmatmul.mubr.bf16.gmra.mrb[0].mxu0 %v218
  %v293 = vpop.f32.mrb[0].mxu0
  %v294 = vadd.f32 %v170, %v293
  %v295 = vpop.f32.mrb[0].mxu0
  %v296 = vpop.f32.mrb[0].mxu0
  %v297 = vadd.f32 %v173, %v296
  %v298 = vpop.f32.mrb[0].mxu0
  %299 = vmatprep.mubr.bf16.mxu0 0
  %300 = vmatmul.mubr.bf16.gmra.mrb[0].mxu0 %v221
  %v301 = vpop.f32.mrb[0].mxu0
  %v302 = vadd.f32 %v178, %v301
  %v303 = vpop.f32.mrb[0].mxu0
  %v304 = vpop.f32.mrb[0].mxu0
  %v305 = vadd.f32 %v181, %v304
  %v306 = vpop.f32.mrb[0].mxu0
  %307 = vmatprep.mubr.bf16.mxu0 0
  %308 = vmatmul.mubr.bf16.gmra.mrb[0].mxu0 %v224
  %v309 = vpop.f32.mrb[0].mxu0
  %v310 = vadd.f32 %v186, %v309
  %v311 = vpop.f32.mrb[0].mxu0
  %v312 = vpop.f32.mrb[0].mxu0
  %v313 = vadd.f32 %v189, %v312
  %v314 = vpop.f32.mrb[0].mxu0
  %315 = vmatprep.mubr.bf16.mxu0 0
  %316 = vmatmul.mubr.bf16.gmra.mrb[0].mxu0 %v227
  %v317 = vpop.f32.mrb[0].mxu0
  %v318 = vadd.f32 %v194, %v317
  %v319 = vpop.f32.mrb[0].mxu0
  %v320 = vpop.f32.mrb[0].mxu0
  %v321 = vadd.f32 %v197, %v320
  %v322 = vpop.f32.mrb[0].mxu0
  %323 = vmatprep.mubr.bf16.mxu0 0
  %324 = vmatmul.mubr.bf16.gmra.mrb[0].mxu0 %v230
  %v325 = vpop.f32.mrb[0].mxu0
  %v326 = vadd.f32 %v202, %v325
  %v327 = vpop.f32.mrb[0].mxu0
  %v328 = vpop.f32.mrb[0].mxu0
  %v329 = vadd.f32 %v205, %v328
  %v330 = vpop.f32.mrb[0].mxu0
  %331 = vdwg.mxu0
  %v332 = vld [vmem:[%s0 + $0x1] sm:$0xff]
  %v333 = vld [vmem:[%s0 + $0x11] sm:$0xff]
  %v334 = vld [vmem:[%s0 + $0x21] sm:$0xff]
  %v335 = vld [vmem:[%s0 + $0x31] sm:$0xff]
  %v336 = vld [vmem:[%s0 + $0x41] sm:$0xff]
  %v337 = vld [vmem:[%s0 + $0x51] sm:$0xff]
  %v338 = vld [vmem:[%s0 + $0x61] sm:$0xff]
  %v339 = vld [vmem:[%s0 + $0x71] sm:$0xff]
  %v340 = vld [vmem:[%s0 + $0x91] sm:$0xff]
  %v341 = vld [vmem:[%s0 + $0xa1] sm:$0xff]
  %v342 = vld [vmem:[%s0 + $0xb1] sm:$0xff]
  %v343 = vld [vmem:[%s0 + $0xc1] sm:$0xff]
  %v344 = vld [vmem:[%s0 + $0xd1] sm:$0xff]
  %v345 = vld [vmem:[%s0 + $0xe1] sm:$0xff]
  %v346 = vld [vmem:[%s0 + $0xf1] sm:$0xff]
  %v347 = vld [vmem:[%s0 + $0x101] sm:$0xff]
  %v348 = vpack.c.bf16 %v333, %v332
  %v349 = vpack.c.bf16 %v335, %v334
  %v350 = vpack.c.bf16 %v337, %v336
  %v351 = vpack.c.bf16 %v339, %v338
  %v352 = vpack.c.bf16 %v341, %v340
  %v353 = vpack.c.bf16 %v343, %v342
  %v354 = vpack.c.bf16 %v345, %v344
  %v355 = vpack.c.bf16 %v347, %v346
  %s356 = scalar_lea.vmem %s1, 4
  %v357 = vld [vmem:[%s356] sm:$0x3]
  %v359 = vsel %vm82, %v348, 0
  %v362 = vsel %vm82, %v349, 0
  %v365 = vsel %vm82, %v350, 0
  %v368 = vsel %vm82, %v351, 0
  %v371 = vsel %vm82, %v352, 0
  %v374 = vsel %vm82, %v353, 0
  %v377 = vsel %vm82, %v354, 0
  %v380 = vsel %vm82, %v355, 0
  %v383 = vsel %vm107, %v357, 0
  %385 = vmatprep.subr.bf16.mxu0 0
  %386 = vmatpush1.bf16.msra.mxu0 %v383
  %387 = vmatprep.subr.bf16.mxu0 0
  %388 = vmatpush1.bf16.msra.mxu0 0
  %389 = vmatprep.subr.bf16.mxu0 0
  %390 = vmatpush1.bf16.msra.mxu0 0
  %391 = vmatprep.subr.bf16.mxu0 0
  %392 = vmatpush1.bf16.msra.mxu0 0
  %393 = vmatprep.subr.bf16.mxu0 0
  %394 = vmatpush1.bf16.msra.mxu0 0
  %395 = vmatprep.subr.bf16.mxu0 0
  %396 = vmatpush1.bf16.msra.mxu0 0
  %397 = vmatprep.subr.bf16.mxu0 0
  %398 = vmatpush1.bf16.msra.mxu0 0
  %399 = vmatprep.subr.bf16.mxu0 0
  %400 = vmatpush1.bf16.msra.mxu0 0
  %401 = vmatprep.subr.bf16.mxu0 0
  %402 = vmatpush1.bf16.msra.mxu0 0
  %403 = vmatprep.subr.bf16.mxu0 0
  %404 = vmatpush1.bf16.msra.mxu0 0
  %405 = vmatprep.subr.bf16.mxu0 0
  %406 = vmatpush1.bf16.msra.mxu0 0
  %407 = vmatprep.subr.bf16.mxu0 0
  %408 = vmatpush1.bf16.msra.mxu0 0
  %409 = vmatprep.subr.bf16.mxu0 0
  %410 = vmatpush1.bf16.msra.mxu0 0
  %411 = vmatprep.subr.bf16.mxu0 0
  %412 = vmatpush1.bf16.msra.mxu0 0
  %413 = vmatprep.subr.bf16.mxu0 0
  %414 = vmatpush1.bf16.msra.mxu0 0
  %415 = vmatprep.subr.bf16.mxu0 0
  %416 = vmatpush1.bf16.msra.mxu0 0
  %417 = vmatprep.mubr.bf16.mxu0 0
  %418 = vmatmul.mubr.bf16.gmra.mrb[0].mxu0 %v359
  %v419 = vpop.f32.mrb[0].mxu0
  %v420 = vadd.f32 0.0, %v419
  %v421 = vpop.f32.mrb[0].mxu0
  %v422 = vpop.f32.mrb[0].mxu0
  %v423 = vadd.f32 0.0, %v422
  %v424 = vpop.f32.mrb[0].mxu0
  %425 = vmatprep.mubr.bf16.mxu0 0
  %426 = vmatmul.mubr.bf16.gmra.mrb[0].mxu0 %v362
  %v427 = vpop.f32.mrb[0].mxu0
  %v428 = vadd.f32 0.0, %v427
  %v429 = vpop.f32.mrb[0].mxu0
  %v430 = vpop.f32.mrb[0].mxu0
  %v431 = vadd.f32 0.0, %v430
  %v432 = vpop.f32.mrb[0].mxu0
  %433 = vmatprep.mubr.bf16.mxu0 0
  %434 = vmatmul.mubr.bf16.gmra.mrb[0].mxu0 %v365
  %v435 = vpop.f32.mrb[0].mxu0
  %v436 = vadd.f32 0.0, %v435
  %v437 = vpop.f32.mrb[0].mxu0
  %v438 = vpop.f32.mrb[0].mxu0
  %v439 = vadd.f32 0.0, %v438
  %v440 = vpop.f32.mrb[0].mxu0
  %441 = vmatprep.mubr.bf16.mxu0 0
  %442 = vmatmul.mubr.bf16.gmra.mrb[0].mxu0 %v368
  %v443 = vpop.f32.mrb[0].mxu0
  %v444 = vadd.f32 0.0, %v443
  %v445 = vpop.f32.mrb[0].mxu0
  %v446 = vpop.f32.mrb[0].mxu0
  %v447 = vadd.f32 0.0, %v446
  %v448 = vpop.f32.mrb[0].mxu0
  %449 = vmatprep.mubr.bf16.mxu0 0
  %450 = vmatmul.mubr.bf16.gmra.mrb[0].mxu0 %v371
  %v451 = vpop.f32.mrb[0].mxu0
  %v452 = vadd.f32 0.0, %v451
  %v453 = vpop.f32.mrb[0].mxu0
  %v454 = vpop.f32.mrb[0].mxu0
  %v455 = vadd.f32 0.0, %v454
  %v456 = vpop.f32.mrb[0].mxu0
  %457 = vmatprep.mubr.bf16.mxu0 0
  %458 = vmatmul.mubr.bf16.gmra.mrb[0].mxu0 %v374
  %v459 = vpop.f32.mrb[0].mxu0
  %v460 = vadd.f32 0.0, %v459
  %v461 = vpop.f32.mrb[0].mxu0
  %v462 = vpop.f32.mrb[0].mxu0
  %v463 = vadd.f32 0.0, %v462
  %v464 = vpop.f32.mrb[0].mxu0
  %465 = vmatprep.mubr.bf16.mxu0 0
  %466 = vmatmul.mubr.bf16.gmra.mrb[0].mxu0 %v377
  %v467 = vpop.f32.mrb[0].mxu0
  %v468 = vadd.f32 0.0, %v467
  %v469 = vpop.f32.mrb[0].mxu0
  %v470 = vpop.f32.mrb[0].mxu0
  %v471 = vadd.f32 0.0, %v470
  %v472 = vpop.f32.mrb[0].mxu0
  %473 = vmatprep.mubr.bf16.mxu0 0
  %474 = vmatmul.mubr.bf16.gmra.mrb[0].mxu0 %v380
  %v475 = vpop.f32.mrb[0].mxu0
  %v476 = vadd.f32 0.0, %v475
  %v477 = vpop.f32.mrb[0].mxu0
  %v478 = vpop.f32.mrb[0].mxu0
  %v479 = vadd.f32 0.0, %v478
  %v480 = vpop.f32.mrb[0].mxu0
  %481 = vdwg.mxu0
  %v482 = vadd.f32 %v270, %v420
  %v483 = vadd.f32 %v273, %v423
  %v484 = vadd.f32 %v278, %v428
  %v485 = vadd.f32 %v281, %v431
  %v486 = vadd.f32 %v286, %v436
  %v487 = vadd.f32 %v289, %v439
  %v488 = vadd.f32 %v294, %v444
  %v489 = vadd.f32 %v297, %v447
  %v490 = vadd.f32 %v302, %v452
  %v491 = vadd.f32 %v305, %v455
  %v492 = vadd.f32 %v310, %v460
  %v493 = vadd.f32 %v313, %v463
  %v494 = vadd.f32 %v318, %v468
  %v495 = vadd.f32 %v321, %v471
  %v496 = vadd.f32 %v326, %v476
  %v497 = vadd.f32 %v329, %v479
  %s498 = scalar_lea.vmem %s0, 576
  %v499 = vld [vmem:[%s498] sm:$0xff]
  %v500 = vld [vmem:[%s498 + $0x10] sm:$0xff]
  %v501 = vld [vmem:[%s498 + $0x20] sm:$0xff]
  %v502 = vld [vmem:[%s498 + $0x30] sm:$0xff]
  %v503 = vld [vmem:[%s498 + $0x40] sm:$0xff]
  %v504 = vld [vmem:[%s498 + $0x50] sm:$0xff]
  %v505 = vld [vmem:[%s498 + $0x60] sm:$0xff]
  %v506 = vld [vmem:[%s498 + $0x70] sm:$0xff]
  %v507 = vld [vmem:[%s498 + $0x90] sm:$0xff]
  %v508 = vld [vmem:[%s498 + $0xa0] sm:$0xff]
  %v509 = vld [vmem:[%s498 + $0xb0] sm:$0xff]
  %v510 = vld [vmem:[%s498 + $0xc0] sm:$0xff]
  %v511 = vld [vmem:[%s498 + $0xd0] sm:$0xff]
  %v512 = vld [vmem:[%s498 + $0xe0] sm:$0xff]
  %v513 = vld [vmem:[%s498 + $0xf0] sm:$0xff]
  %v514 = vld [vmem:[%s498 + $0x100] sm:$0xff]
  %v515 = vpack.c.bf16 %v500, %v499
  %v516 = vpack.c.bf16 %v502, %v501
  %v517 = vpack.c.bf16 %v504, %v503
  %v518 = vpack.c.bf16 %v506, %v505
  %v519 = vpack.c.bf16 %v508, %v507
  %v520 = vpack.c.bf16 %v510, %v509
  %v521 = vpack.c.bf16 %v512, %v511
  %v522 = vpack.c.bf16 %v514, %v513
  %s523 = scalar_lea.vmem %s1, 6
  %v524 = vld [vmem:[%s523] sm:$0x3]
  %v526 = vsel %vm82, %v515, 0
  %v529 = vsel %vm82, %v516, 0
  %v532 = vsel %vm82, %v517, 0
  %v535 = vsel %vm82, %v518, 0
  %v538 = vsel %vm82, %v519, 0
  %v541 = vsel %vm82, %v520, 0
  %v544 = vsel %vm82, %v521, 0
  %v547 = vsel %vm82, %v522, 0
  %v550 = vsel %vm107, %v524, 0
  %552 = vmatprep.subr.bf16.mxu0 0
  %553 = vmatpush1.bf16.msra.mxu0 %v550
  %554 = vmatprep.subr.bf16.mxu0 0
  %555 = vmatpush1.bf16.msra.mxu0 0
  %556 = vmatprep.subr.bf16.mxu0 0
  %557 = vmatpush1.bf16.msra.mxu0 0
  %558 = vmatprep.subr.bf16.mxu0 0
  %559 = vmatpush1.bf16.msra.mxu0 0
  %560 = vmatprep.subr.bf16.mxu0 0
  %561 = vmatpush1.bf16.msra.mxu0 0
  %562 = vmatprep.subr.bf16.mxu0 0
  %563 = vmatpush1.bf16.msra.mxu0 0
  %564 = vmatprep.subr.bf16.mxu0 0
  %565 = vmatpush1.bf16.msra.mxu0 0
  %566 = vmatprep.subr.bf16.mxu0 0
  %567 = vmatpush1.bf16.msra.mxu0 0
  %568 = vmatprep.subr.bf16.mxu0 0
  %569 = vmatpush1.bf16.msra.mxu0 0
  %570 = vmatprep.subr.bf16.mxu0 0
  %571 = vmatpush1.bf16.msra.mxu0 0
  %572 = vmatprep.subr.bf16.mxu0 0
  %573 = vmatpush1.bf16.msra.mxu0 0
  %574 = vmatprep.subr.bf16.mxu0 0
  %575 = vmatpush1.bf16.msra.mxu0 0
  %576 = vmatprep.subr.bf16.mxu0 0
  %577 = vmatpush1.bf16.msra.mxu0 0
  %578 = vmatprep.subr.bf16.mxu0 0
  %579 = vmatpush1.bf16.msra.mxu0 0
  %580 = vmatprep.subr.bf16.mxu0 0
  %581 = vmatpush1.bf16.msra.mxu0 0
  %582 = vmatprep.subr.bf16.mxu0 0
  %583 = vmatpush1.bf16.msra.mxu0 0
  %584 = vmatprep.mubr.bf16.mxu0 0
  %585 = vmatmul.mubr.bf16.gmra.mrb[0].mxu0 %v526
  %v586 = vpop.f32.mrb[0].mxu0
  %v587 = vadd.f32 0.0, %v586
  %v588 = vpop.f32.mrb[0].mxu0
  %v589 = vpop.f32.mrb[0].mxu0
  %v590 = vadd.f32 0.0, %v589
  %v591 = vpop.f32.mrb[0].mxu0
  %592 = vmatprep.mubr.bf16.mxu0 0
  %593 = vmatmul.mubr.bf16.gmra.mrb[0].mxu0 %v529
  %v594 = vpop.f32.mrb[0].mxu0
  %v595 = vadd.f32 0.0, %v594
  %v596 = vpop.f32.mrb[0].mxu0
  %v597 = vpop.f32.mrb[0].mxu0
  %v598 = vadd.f32 0.0, %v597
  %v599 = vpop.f32.mrb[0].mxu0
  %600 = vmatprep.mubr.bf16.mxu0 0
  %601 = vmatmul.mubr.bf16.gmra.mrb[0].mxu0 %v532
  %v602 = vpop.f32.mrb[0].mxu0
  %v603 = vadd.f32 0.0, %v602
  %v604 = vpop.f32.mrb[0].mxu0
  %v605 = vpop.f32.mrb[0].mxu0
  %v606 = vadd.f32 0.0, %v605
  %v607 = vpop.f32.mrb[0].mxu0
  %608 = vmatprep.mubr.bf16.mxu0 0
  %609 = vmatmul.mubr.bf16.gmra.mrb[0].mxu0 %v535
  %v610 = vpop.f32.mrb[0].mxu0
  %v611 = vadd.f32 0.0, %v610
  %v612 = vpop.f32.mrb[0].mxu0
  %v613 = vpop.f32.mrb[0].mxu0
  %v614 = vadd.f32 0.0, %v613
  %v615 = vpop.f32.mrb[0].mxu0
  %616 = vmatprep.mubr.bf16.mxu0 0
  %617 = vmatmul.mubr.bf16.gmra.mrb[0].mxu0 %v538
  %v618 = vpop.f32.mrb[0].mxu0
  %v619 = vadd.f32 0.0, %v618
  %v620 = vpop.f32.mrb[0].mxu0
  %v621 = vpop.f32.mrb[0].mxu0
  %v622 = vadd.f32 0.0, %v621
  %v623 = vpop.f32.mrb[0].mxu0
  %624 = vmatprep.mubr.bf16.mxu0 0
  %625 = vmatmul.mubr.bf16.gmra.mrb[0].mxu0 %v541
  %v626 = vpop.f32.mrb[0].mxu0
  %v627 = vadd.f32 0.0, %v626
  %v628 = vpop.f32.mrb[0].mxu0
  %v629 = vpop.f32.mrb[0].mxu0
  %v630 = vadd.f32 0.0, %v629
  %v631 = vpop.f32.mrb[0].mxu0
  %632 = vmatprep.mubr.bf16.mxu0 0
  %633 = vmatmul.mubr.bf16.gmra.mrb[0].mxu0 %v544
  %v634 = vpop.f32.mrb[0].mxu0
  %v635 = vadd.f32 0.0, %v634
  %v636 = vpop.f32.mrb[0].mxu0
  %v637 = vpop.f32.mrb[0].mxu0
  %v638 = vadd.f32 0.0, %v637
  %v639 = vpop.f32.mrb[0].mxu0
  %640 = vmatprep.mubr.bf16.mxu0 0
  %641 = vmatmul.mubr.bf16.gmra.mrb[0].mxu0 %v547
  %v642 = vpop.f32.mrb[0].mxu0
  %v643 = vadd.f32 0.0, %v642
  %v644 = vpop.f32.mrb[0].mxu0
  %v645 = vpop.f32.mrb[0].mxu0
  %v646 = vadd.f32 0.0, %v645
  %v647 = vpop.f32.mrb[0].mxu0
  %648 = vdwg.mxu0
  %v649 = vadd.f32 %v482, %v587
  %v650 = vadd.f32 %v483, %v590
  %v651 = vadd.f32 %v484, %v595
  %v652 = vadd.f32 %v485, %v598
  %v653 = vadd.f32 %v486, %v603
  %v654 = vadd.f32 %v487, %v606
  %v655 = vadd.f32 %v488, %v611
  %v656 = vadd.f32 %v489, %v614
  %v657 = vadd.f32 %v490, %v619
  %v658 = vadd.f32 %v491, %v622
  %v659 = vadd.f32 %v492, %v627
  %v660 = vadd.f32 %v493, %v630
  %v661 = vadd.f32 %v494, %v635
  %v662 = vadd.f32 %v495, %v638
  %v663 = vadd.f32 %v496, %v643
  %v664 = vadd.f32 %v497, %v646
  %s665 = scalar_lea.vmem %s0, 864
  %v666 = vld [vmem:[%s665] sm:$0xff]
  %v667 = vld [vmem:[%s665 + $0x10] sm:$0xff]
  %v668 = vld [vmem:[%s665 + $0x20] sm:$0xff]
  %v669 = vld [vmem:[%s665 + $0x30] sm:$0xff]
  %v670 = vld [vmem:[%s665 + $0x40] sm:$0xff]
  %v671 = vld [vmem:[%s665 + $0x50] sm:$0xff]
  %v672 = vld [vmem:[%s665 + $0x60] sm:$0xff]
  %v673 = vld [vmem:[%s665 + $0x70] sm:$0xff]
  %v674 = vld [vmem:[%s665 + $0x90] sm:$0xff]
  %v675 = vld [vmem:[%s665 + $0xa0] sm:$0xff]
  %v676 = vld [vmem:[%s665 + $0xb0] sm:$0xff]
  %v677 = vld [vmem:[%s665 + $0xc0] sm:$0xff]
  %v678 = vld [vmem:[%s665 + $0xd0] sm:$0xff]
  %v679 = vld [vmem:[%s665 + $0xe0] sm:$0xff]
  %v680 = vld [vmem:[%s665 + $0xf0] sm:$0xff]
  %v681 = vld [vmem:[%s665 + $0x100] sm:$0xff]
  %v682 = vpack.c.bf16 %v667, %v666
  %v683 = vpack.c.bf16 %v669, %v668
  %v684 = vpack.c.bf16 %v671, %v670
  %v685 = vpack.c.bf16 %v673, %v672
  %v686 = vpack.c.bf16 %v675, %v674
  %v687 = vpack.c.bf16 %v677, %v676
  %v688 = vpack.c.bf16 %v679, %v678
  %v689 = vpack.c.bf16 %v681, %v680
  %s690 = scalar_lea.vmem %s1, 8
  %v691 = vld [vmem:[%s690] sm:$0x3]
  %v693 = vsel %vm82, %v682, 0
  %v696 = vsel %vm82, %v683, 0
  %v699 = vsel %vm82, %v684, 0
  %v702 = vsel %vm82, %v685, 0
  %v705 = vsel %vm82, %v686, 0
  %v708 = vsel %vm82, %v687, 0
  %v711 = vsel %vm82, %v688, 0
  %v714 = vsel %vm82, %v689, 0
  %v717 = vsel %vm107, %v691, 0
  %719 = vmatprep.subr.bf16.mxu0 0
  %720 = vmatpush1.bf16.msra.mxu0 %v717
  %721 = vmatprep.subr.bf16.mxu0 0
  %722 = vmatpush1.bf16.msra.mxu0 0
  %723 = vmatprep.subr.bf16.mxu0 0
  %724 = vmatpush1.bf16.msra.mxu0 0
  %725 = vmatprep.subr.bf16.mxu0 0
  %726 = vmatpush1.bf16.msra.mxu0 0
  %727 = vmatprep.subr.bf16.mxu0 0
  %728 = vmatpush1.bf16.msra.mxu0 0
  %729 = vmatprep.subr.bf16.mxu0 0
  %730 = vmatpush1.bf16.msra.mxu0 0
  %731 = vmatprep.subr.bf16.mxu0 0
  %732 = vmatpush1.bf16.msra.mxu0 0
  %733 = vmatprep.subr.bf16.mxu0 0
  %734 = vmatpush1.bf16.msra.mxu0 0
  %735 = vmatprep.subr.bf16.mxu0 0
  %736 = vmatpush1.bf16.msra.mxu0 0
  %737 = vmatprep.subr.bf16.mxu0 0
  %738 = vmatpush1.bf16.msra.mxu0 0
  %739 = vmatprep.subr.bf16.mxu0 0
  %740 = vmatpush1.bf16.msra.mxu0 0
  %741 = vmatprep.subr.bf16.mxu0 0
  %742 = vmatpush1.bf16.msra.mxu0 0
  %743 = vmatprep.subr.bf16.mxu0 0
  %744 = vmatpush1.bf16.msra.mxu0 0
  %745 = vmatprep.subr.bf16.mxu0 0
  %746 = vmatpush1.bf16.msra.mxu0 0
  %747 = vmatprep.subr.bf16.mxu0 0
  %748 = vmatpush1.bf16.msra.mxu0 0
  %749 = vmatprep.subr.bf16.mxu0 0
  %750 = vmatpush1.bf16.msra.mxu0 0
  %751 = vmatprep.mubr.bf16.mxu0 0
  %752 = vmatmul.mubr.bf16.gmra.mrb[0].mxu0 %v693
  %v753 = vpop.f32.mrb[0].mxu0
  %v754 = vadd.f32 0.0, %v753
  %v755 = vpop.f32.mrb[0].mxu0
  %v756 = vpop.f32.mrb[0].mxu0
  %v757 = vadd.f32 0.0, %v756
  %v758 = vpop.f32.mrb[0].mxu0
  %759 = vmatprep.mubr.bf16.mxu0 0
  %760 = vmatmul.mubr.bf16.gmra.mrb[0].mxu0 %v696
  %v761 = vpop.f32.mrb[0].mxu0
  %v762 = vadd.f32 0.0, %v761
  %v763 = vpop.f32.mrb[0].mxu0
  %v764 = vpop.f32.mrb[0].mxu0
  %v765 = vadd.f32 0.0, %v764
  %v766 = vpop.f32.mrb[0].mxu0
  %767 = vmatprep.mubr.bf16.mxu0 0
  %768 = vmatmul.mubr.bf16.gmra.mrb[0].mxu0 %v699
  %v769 = vpop.f32.mrb[0].mxu0
  %v770 = vadd.f32 0.0, %v769
  %v771 = vpop.f32.mrb[0].mxu0
  %v772 = vpop.f32.mrb[0].mxu0
  %v773 = vadd.f32 0.0, %v772
  %v774 = vpop.f32.mrb[0].mxu0
  %775 = vmatprep.mubr.bf16.mxu0 0
  %776 = vmatmul.mubr.bf16.gmra.mrb[0].mxu0 %v702
  %v777 = vpop.f32.mrb[0].mxu0
  %v778 = vadd.f32 0.0, %v777
  %v779 = vpop.f32.mrb[0].mxu0
  %v780 = vpop.f32.mrb[0].mxu0
  %v781 = vadd.f32 0.0, %v780
  %v782 = vpop.f32.mrb[0].mxu0
  %783 = vmatprep.mubr.bf16.mxu0 0
  %784 = vmatmul.mubr.bf16.gmra.mrb[0].mxu0 %v705
  %v785 = vpop.f32.mrb[0].mxu0
  %v786 = vadd.f32 0.0, %v785
  %v787 = vpop.f32.mrb[0].mxu0
  %v788 = vpop.f32.mrb[0].mxu0
  %v789 = vadd.f32 0.0, %v788
  %v790 = vpop.f32.mrb[0].mxu0
  %791 = vmatprep.mubr.bf16.mxu0 0
  %792 = vmatmul.mubr.bf16.gmra.mrb[0].mxu0 %v708
  %v793 = vpop.f32.mrb[0].mxu0
  %v794 = vadd.f32 0.0, %v793
  %v795 = vpop.f32.mrb[0].mxu0
  %v796 = vpop.f32.mrb[0].mxu0
  %v797 = vadd.f32 0.0, %v796
  %v798 = vpop.f32.mrb[0].mxu0
  %799 = vmatprep.mubr.bf16.mxu0 0
  %800 = vmatmul.mubr.bf16.gmra.mrb[0].mxu0 %v711
  %v801 = vpop.f32.mrb[0].mxu0
  %v802 = vadd.f32 0.0, %v801
  %v803 = vpop.f32.mrb[0].mxu0
  %v804 = vpop.f32.mrb[0].mxu0
  %v805 = vadd.f32 0.0, %v804
  %v806 = vpop.f32.mrb[0].mxu0
  %807 = vmatprep.mubr.bf16.mxu0 0
  %808 = vmatmul.mubr.bf16.gmra.mrb[0].mxu0 %v714
  %v809 = vpop.f32.mrb[0].mxu0
  %v810 = vadd.f32 0.0, %v809
  %v811 = vpop.f32.mrb[0].mxu0
  %v812 = vpop.f32.mrb[0].mxu0
  %v813 = vadd.f32 0.0, %v812
  %v814 = vpop.f32.mrb[0].mxu0
  %815 = vdwg.mxu0
  %v816 = vadd.f32 %v649, %v754
  %v817 = vadd.f32 %v650, %v757
  %v818 = vadd.f32 %v651, %v762
  %v819 = vadd.f32 %v652, %v765
  %v820 = vadd.f32 %v653, %v770
  %v821 = vadd.f32 %v654, %v773
  %v822 = vadd.f32 %v655, %v778
  %v823 = vadd.f32 %v656, %v781
  %v824 = vadd.f32 %v657, %v786
  %v825 = vadd.f32 %v658, %v789
  %v826 = vadd.f32 %v659, %v794
  %v827 = vadd.f32 %v660, %v797
  %v828 = vadd.f32 %v661, %v802
  %v829 = vadd.f32 %v662, %v805
  %v830 = vadd.f32 %v663, %v810
  %v831 = vadd.f32 %v664, %v813
  %v832 = vld [vmem:[%s498 + $0x1] sm:$0xff]
  %v833 = vld [vmem:[%s498 + $0x11] sm:$0xff]
  %v834 = vld [vmem:[%s498 + $0x21] sm:$0xff]
  %v835 = vld [vmem:[%s498 + $0x31] sm:$0xff]
  %v836 = vld [vmem:[%s498 + $0x41] sm:$0xff]
  %v837 = vld [vmem:[%s498 + $0x51] sm:$0xff]
  %v838 = vld [vmem:[%s498 + $0x61] sm:$0xff]
  %v839 = vld [vmem:[%s498 + $0x71] sm:$0xff]
  %v840 = vld [vmem:[%s498 + $0x91] sm:$0xff]
  %v841 = vld [vmem:[%s498 + $0xa1] sm:$0xff]
  %v842 = vld [vmem:[%s498 + $0xb1] sm:$0xff]
  %v843 = vld [vmem:[%s498 + $0xc1] sm:$0xff]
  %v844 = vld [vmem:[%s498 + $0xd1] sm:$0xff]
  %v845 = vld [vmem:[%s498 + $0xe1] sm:$0xff]
  %v846 = vld [vmem:[%s498 + $0xf1] sm:$0xff]
  %v847 = vld [vmem:[%s498 + $0x101] sm:$0xff]
  %v848 = vpack.c.bf16 %v833, %v832
  %v849 = vpack.c.bf16 %v835, %v834
  %v850 = vpack.c.bf16 %v837, %v836
  %v851 = vpack.c.bf16 %v839, %v838
  %v852 = vpack.c.bf16 %v841, %v840
  %v853 = vpack.c.bf16 %v843, %v842
  %v854 = vpack.c.bf16 %v845, %v844
  %v855 = vpack.c.bf16 %v847, %v846
  %s856 = scalar_lea.vmem %s1, 10
  %v857 = vld [vmem:[%s856] sm:$0x3]
  %v859 = vsel %vm82, %v848, 0
  %v862 = vsel %vm82, %v849, 0
  %v865 = vsel %vm82, %v850, 0
  %v868 = vsel %vm82, %v851, 0
  %v871 = vsel %vm82, %v852, 0
  %v874 = vsel %vm82, %v853, 0
  %v877 = vsel %vm82, %v854, 0
  %v880 = vsel %vm82, %v855, 0
  %v883 = vsel %vm107, %v857, 0
  %885 = vmatprep.subr.bf16.mxu0 0
  %886 = vmatpush1.bf16.msra.mxu0 %v883
  %887 = vmatprep.subr.bf16.mxu0 0
  %888 = vmatpush1.bf16.msra.mxu0 0
  %889 = vmatprep.subr.bf16.mxu0 0
  %890 = vmatpush1.bf16.msra.mxu0 0
  %891 = vmatprep.subr.bf16.mxu0 0
  %892 = vmatpush1.bf16.msra.mxu0 0
  %893 = vmatprep.subr.bf16.mxu0 0
  %894 = vmatpush1.bf16.msra.mxu0 0
  %895 = vmatprep.subr.bf16.mxu0 0
  %896 = vmatpush1.bf16.msra.mxu0 0
  %897 = vmatprep.subr.bf16.mxu0 0
  %898 = vmatpush1.bf16.msra.mxu0 0
  %899 = vmatprep.subr.bf16.mxu0 0
  %900 = vmatpush1.bf16.msra.mxu0 0
  %901 = vmatprep.subr.bf16.mxu0 0
  %902 = vmatpush1.bf16.msra.mxu0 0
  %903 = vmatprep.subr.bf16.mxu0 0
  %904 = vmatpush1.bf16.msra.mxu0 0
  %905 = vmatprep.subr.bf16.mxu0 0
  %906 = vmatpush1.bf16.msra.mxu0 0
  %907 = vmatprep.subr.bf16.mxu0 0
  %908 = vmatpush1.bf16.msra.mxu0 0
  %909 = vmatprep.subr.bf16.mxu0 0
  %910 = vmatpush1.bf16.msra.mxu0 0
  %911 = vmatprep.subr.bf16.mxu0 0
  %912 = vmatpush1.bf16.msra.mxu0 0
  %913 = vmatprep.subr.bf16.mxu0 0
  %914 = vmatpush1.bf16.msra.mxu0 0
  %915 = vmatprep.subr.bf16.mxu0 0
  %916 = vmatpush1.bf16.msra.mxu0 0
  %917 = vmatprep.mubr.bf16.mxu0 0
  %918 = vmatmul.mubr.bf16.gmra.mrb[0].mxu0 %v859
  %v919 = vpop.f32.mrb[0].mxu0
  %v920 = vadd.f32 0.0, %v919
  %v921 = vpop.f32.mrb[0].mxu0
  %v922 = vpop.f32.mrb[0].mxu0
  %v923 = vadd.f32 0.0, %v922
  %v924 = vpop.f32.mrb[0].mxu0
  %925 = vmatprep.mubr.bf16.mxu0 0
  %926 = vmatmul.mubr.bf16.gmra.mrb[0].mxu0 %v862
  %v927 = vpop.f32.mrb[0].mxu0
  %v928 = vadd.f32 0.0, %v927
  %v929 = vpop.f32.mrb[0].mxu0
  %v930 = vpop.f32.mrb[0].mxu0
  %v931 = vadd.f32 0.0, %v930
  %v932 = vpop.f32.mrb[0].mxu0
  %933 = vmatprep.mubr.bf16.mxu0 0
  %934 = vmatmul.mubr.bf16.gmra.mrb[0].mxu0 %v865
  %v935 = vpop.f32.mrb[0].mxu0
  %v936 = vadd.f32 0.0, %v935
  %v937 = vpop.f32.mrb[0].mxu0
  %v938 = vpop.f32.mrb[0].mxu0
  %v939 = vadd.f32 0.0, %v938
  %v940 = vpop.f32.mrb[0].mxu0
  %941 = vmatprep.mubr.bf16.mxu0 0
  %942 = vmatmul.mubr.bf16.gmra.mrb[0].mxu0 %v868
  %v943 = vpop.f32.mrb[0].mxu0
  %v944 = vadd.f32 0.0, %v943
  %v945 = vpop.f32.mrb[0].mxu0
  %v946 = vpop.f32.mrb[0].mxu0
  %v947 = vadd.f32 0.0, %v946
  %v948 = vpop.f32.mrb[0].mxu0
  %949 = vmatprep.mubr.bf16.mxu0 0
  %950 = vmatmul.mubr.bf16.gmra.mrb[0].mxu0 %v871
  %v951 = vpop.f32.mrb[0].mxu0
  %v952 = vadd.f32 0.0, %v951
  %v953 = vpop.f32.mrb[0].mxu0
  %v954 = vpop.f32.mrb[0].mxu0
  %v955 = vadd.f32 0.0, %v954
  %v956 = vpop.f32.mrb[0].mxu0
  %957 = vmatprep.mubr.bf16.mxu0 0
  %958 = vmatmul.mubr.bf16.gmra.mrb[0].mxu0 %v874
  %v959 = vpop.f32.mrb[0].mxu0
  %v960 = vadd.f32 0.0, %v959
  %v961 = vpop.f32.mrb[0].mxu0
  %v962 = vpop.f32.mrb[0].mxu0
  %v963 = vadd.f32 0.0, %v962
  %v964 = vpop.f32.mrb[0].mxu0
  %965 = vmatprep.mubr.bf16.mxu0 0
  %966 = vmatmul.mubr.bf16.gmra.mrb[0].mxu0 %v877
  %v967 = vpop.f32.mrb[0].mxu0
  %v968 = vadd.f32 0.0, %v967
  %v969 = vpop.f32.mrb[0].mxu0
  %v970 = vpop.f32.mrb[0].mxu0
  %v971 = vadd.f32 0.0, %v970
  %v972 = vpop.f32.mrb[0].mxu0
  %973 = vmatprep.mubr.bf16.mxu0 0
  %974 = vmatmul.mubr.bf16.gmra.mrb[0].mxu0 %v880
  %v975 = vpop.f32.mrb[0].mxu0
  %v976 = vadd.f32 0.0, %v975
  %v977 = vpop.f32.mrb[0].mxu0
  %v978 = vpop.f32.mrb[0].mxu0
  %v979 = vadd.f32 0.0, %v978
  %v980 = vpop.f32.mrb[0].mxu0
  %981 = vdwg.mxu0
  %v982 = vadd.f32 %v816, %v920
  %v983 = vadd.f32 %v817, %v923
  %v984 = vadd.f32 %v818, %v928
  %v985 = vadd.f32 %v819, %v931
  %v986 = vadd.f32 %v820, %v936
  %v987 = vadd.f32 %v821, %v939
  %v988 = vadd.f32 %v822, %v944
  %v989 = vadd.f32 %v823, %v947
  %v990 = vadd.f32 %v824, %v952
  %v991 = vadd.f32 %v825, %v955
  %v992 = vadd.f32 %v826, %v960
  %v993 = vadd.f32 %v827, %v963
  %v994 = vadd.f32 %v828, %v968
  %v995 = vadd.f32 %v829, %v971
  %v996 = vadd.f32 %v830, %v976
  %v997 = vadd.f32 %v831, %v979
  %s998 = scalar_lea.vmem %s0, 16
  %v999 = vld [vmem:[%s998] sm:$0xff]
  %v1000 = vld [vmem:[%s998 + $0x10] sm:$0xff]
  %v1001 = vld [vmem:[%s998 + $0x20] sm:$0xff]
  %v1002 = vld [vmem:[%s998 + $0x30] sm:$0xff]
  %v1003 = vld [vmem:[%s998 + $0x40] sm:$0xff]
  %v1004 = vld [vmem:[%s998 + $0x50] sm:$0xff]
  %v1005 = vld [vmem:[%s998 + $0x60] sm:$0xff]
  %v1006 = vld [vmem:[%s998 + $0x70] sm:$0xff]
  %v1007 = vld [vmem:[%s998 + $0x90] sm:$0xff]
  %v1008 = vld [vmem:[%s998 + $0xa0] sm:$0xff]
  %v1009 = vld [vmem:[%s998 + $0xb0] sm:$0xff]
  %v1010 = vld [vmem:[%s998 + $0xc0] sm:$0xff]
  %v1011 = vld [vmem:[%s998 + $0xd0] sm:$0xff]
  %v1012 = vld [vmem:[%s998 + $0xe0] sm:$0xff]
  %v1013 = vld [vmem:[%s998 + $0xf0] sm:$0xff]
  %v1014 = vld [vmem:[%s998 + $0x100] sm:$0xff]
  %v1015 = vpack.c.bf16 %v1000, %v999
  %v1016 = vpack.c.bf16 %v1002, %v1001
  %v1017 = vpack.c.bf16 %v1004, %v1003
  %v1018 = vpack.c.bf16 %v1006, %v1005
  %v1019 = vpack.c.bf16 %v1008, %v1007
  %v1020 = vpack.c.bf16 %v1010, %v1009
  %v1021 = vpack.c.bf16 %v1012, %v1011
  %v1022 = vpack.c.bf16 %v1014, %v1013
  %s1023 = scalar_lea.vmem %s1, 12
  %v1024 = vld [vmem:[%s1023] sm:$0x3]
  %v1026 = vsel %vm82, %v1015, 0
  %v1029 = vsel %vm82, %v1016, 0
  %v1032 = vsel %vm82, %v1017, 0
  %v1035 = vsel %vm82, %v1018, 0
  %v1038 = vsel %vm82, %v1019, 0
  %v1041 = vsel %vm82, %v1020, 0
  %v1044 = vsel %vm82, %v1021, 0
  %v1047 = vsel %vm82, %v1022, 0
  %v1050 = vsel %vm107, %v1024, 0
  %1052 = vmatprep.subr.bf16.mxu0 0
  %1053 = vmatpush1.bf16.msra.mxu0 %v1050
  %1054 = vmatprep.subr.bf16.mxu0 0
  %1055 = vmatpush1.bf16.msra.mxu0 0
  %1056 = vmatprep.subr.bf16.mxu0 0
  %1057 = vmatpush1.bf16.msra.mxu0 0
  %1058 = vmatprep.subr.bf16.mxu0 0
  %1059 = vmatpush1.bf16.msra.mxu0 0
  %1060 = vmatprep.subr.bf16.mxu0 0
  %1061 = vmatpush1.bf16.msra.mxu0 0
  %1062 = vmatprep.subr.bf16.mxu0 0
  %1063 = vmatpush1.bf16.msra.mxu0 0
  %1064 = vmatprep.subr.bf16.mxu0 0
  %1065 = vmatpush1.bf16.msra.mxu0 0
  %1066 = vmatprep.subr.bf16.mxu0 0
  %1067 = vmatpush1.bf16.msra.mxu0 0
  %1068 = vmatprep.subr.bf16.mxu0 0
  %1069 = vmatpush1.bf16.msra.mxu0 0
  %1070 = vmatprep.subr.bf16.mxu0 0
  %1071 = vmatpush1.bf16.msra.mxu0 0
  %1072 = vmatprep.subr.bf16.mxu0 0
  %1073 = vmatpush1.bf16.msra.mxu0 0
  %1074 = vmatprep.subr.bf16.mxu0 0
  %1075 = vmatpush1.bf16.msra.mxu0 0
  %1076 = vmatprep.subr.bf16.mxu0 0
  %1077 = vmatpush1.bf16.msra.mxu0 0
  %1078 = vmatprep.subr.bf16.mxu0 0
  %1079 = vmatpush1.bf16.msra.mxu0 0
  %1080 = vmatprep.subr.bf16.mxu0 0
  %1081 = vmatpush1.bf16.msra.mxu0 0
  %1082 = vmatprep.subr.bf16.mxu0 0
  %1083 = vmatpush1.bf16.msra.mxu0 0
  %1084 = vmatprep.mubr.bf16.mxu0 0
  %1085 = vmatmul.mubr.bf16.gmra.mrb[0].mxu0 %v1026
  %v1086 = vpop.f32.mrb[0].mxu0
  %v1087 = vadd.f32 0.0, %v1086
  %v1088 = vpop.f32.mrb[0].mxu0
  %v1089 = vpop.f32.mrb[0].mxu0
  %v1090 = vadd.f32 0.0, %v1089
  %v1091 = vpop.f32.mrb[0].mxu0
  %1092 = vmatprep.mubr.bf16.mxu0 0
  %1093 = vmatmul.mubr.bf16.gmra.mrb[0].mxu0 %v1029
  %v1094 = vpop.f32.mrb[0].mxu0
  %v1095 = vadd.f32 0.0, %v1094
  %v1096 = vpop.f32.mrb[0].mxu0
  %v1097 = vpop.f32.mrb[0].mxu0
  %v1098 = vadd.f32 0.0, %v1097
  %v1099 = vpop.f32.mrb[0].mxu0
  %1100 = vmatprep.mubr.bf16.mxu0 0
  %1101 = vmatmul.mubr.bf16.gmra.mrb[0].mxu0 %v1032
  %v1102 = vpop.f32.mrb[0].mxu0
  %v1103 = vadd.f32 0.0, %v1102
  %v1104 = vpop.f32.mrb[0].mxu0
  %v1105 = vpop.f32.mrb[0].mxu0
  %v1106 = vadd.f32 0.0, %v1105
  %v1107 = vpop.f32.mrb[0].mxu0
  %1108 = vmatprep.mubr.bf16.mxu0 0
  %1109 = vmatmul.mubr.bf16.gmra.mrb[0].mxu0 %v1035
  %v1110 = vpop.f32.mrb[0].mxu0
  %v1111 = vadd.f32 0.0, %v1110
  %v1112 = vpop.f32.mrb[0].mxu0
  %v1113 = vpop.f32.mrb[0].mxu0
  %v1114 = vadd.f32 0.0, %v1113
  %v1115 = vpop.f32.mrb[0].mxu0
  %1116 = vmatprep.mubr.bf16.mxu0 0
  %1117 = vmatmul.mubr.bf16.gmra.mrb[0].mxu0 %v1038
  %v1118 = vpop.f32.mrb[0].mxu0
  %v1119 = vadd.f32 0.0, %v1118
  %v1120 = vpop.f32.mrb[0].mxu0
  %v1121 = vpop.f32.mrb[0].mxu0
  %v1122 = vadd.f32 0.0, %v1121
  %v1123 = vpop.f32.mrb[0].mxu0
  %1124 = vmatprep.mubr.bf16.mxu0 0
  %1125 = vmatmul.mubr.bf16.gmra.mrb[0].mxu0 %v1041
  %v1126 = vpop.f32.mrb[0].mxu0
  %v1127 = vadd.f32 0.0, %v1126
  %v1128 = vpop.f32.mrb[0].mxu0
  %v1129 = vpop.f32.mrb[0].mxu0
  %v1130 = vadd.f32 0.0, %v1129
  %v1131 = vpop.f32.mrb[0].mxu0
  %1132 = vmatprep.mubr.bf16.mxu0 0
  %1133 = vmatmul.mubr.bf16.gmra.mrb[0].mxu0 %v1044
  %v1134 = vpop.f32.mrb[0].mxu0
  %v1135 = vadd.f32 0.0, %v1134
  %v1136 = vpop.f32.mrb[0].mxu0
  %v1137 = vpop.f32.mrb[0].mxu0
  %v1138 = vadd.f32 0.0, %v1137
  %v1139 = vpop.f32.mrb[0].mxu0
  %1140 = vmatprep.mubr.bf16.mxu0 0
  %1141 = vmatmul.mubr.bf16.gmra.mrb[0].mxu0 %v1047
  %v1142 = vpop.f32.mrb[0].mxu0
  %v1143 = vadd.f32 0.0, %v1142
  %v1144 = vpop.f32.mrb[0].mxu0
  %v1145 = vpop.f32.mrb[0].mxu0
  %v1146 = vadd.f32 0.0, %v1145
  %v1147 = vpop.f32.mrb[0].mxu0
  %1148 = vdwg.mxu0
  %v1149 = vadd.f32 %v982, %v1087
  %v1150 = vadd.f32 %v983, %v1090
  %v1151 = vadd.f32 %v984, %v1095
  %v1152 = vadd.f32 %v985, %v1098
  %v1153 = vadd.f32 %v986, %v1103
  %v1154 = vadd.f32 %v987, %v1106
  %v1155 = vadd.f32 %v988, %v1111
  %v1156 = vadd.f32 %v989, %v1114
  %v1157 = vadd.f32 %v990, %v1119
  %v1158 = vadd.f32 %v991, %v1122
  %v1159 = vadd.f32 %v992, %v1127
  %v1160 = vadd.f32 %v993, %v1130
  %v1161 = vadd.f32 %v994, %v1135
  %v1162 = vadd.f32 %v995, %v1138
  %v1163 = vadd.f32 %v996, %v1143
  %v1164 = vadd.f32 %v997, %v1146
  %s1165 = scalar_lea.vmem %s0, 304
  %v1166 = vld [vmem:[%s1165] sm:$0xff]
  %v1167 = vld [vmem:[%s1165 + $0x10] sm:$0xff]
  %v1168 = vld [vmem:[%s1165 + $0x20] sm:$0xff]
  %v1169 = vld [vmem:[%s1165 + $0x30] sm:$0xff]
  %v1170 = vld [vmem:[%s1165 + $0x40] sm:$0xff]
  %v1171 = vld [vmem:[%s1165 + $0x50] sm:$0xff]
  %v1172 = vld [vmem:[%s1165 + $0x60] sm:$0xff]
  %v1173 = vld [vmem:[%s1165 + $0x70] sm:$0xff]
  %v1174 = vld [vmem:[%s1165 + $0x90] sm:$0xff]
  %v1175 = vld [vmem:[%s1165 + $0xa0] sm:$0xff]
  %v1176 = vld [vmem:[%s1165 + $0xb0] sm:$0xff]
  %v1177 = vld [vmem:[%s1165 + $0xc0] sm:$0xff]
  %v1178 = vld [vmem:[%s1165 + $0xd0] sm:$0xff]
  %v1179 = vld [vmem:[%s1165 + $0xe0] sm:$0xff]
  %v1180 = vld [vmem:[%s1165 + $0xf0] sm:$0xff]
  %v1181 = vld [vmem:[%s1165 + $0x100] sm:$0xff]
  %v1182 = vpack.c.bf16 %v1167, %v1166
  %v1183 = vpack.c.bf16 %v1169, %v1168
  %v1184 = vpack.c.bf16 %v1171, %v1170
  %v1185 = vpack.c.bf16 %v1173, %v1172
  %v1186 = vpack.c.bf16 %v1175, %v1174
  %v1187 = vpack.c.bf16 %v1177, %v1176
  %v1188 = vpack.c.bf16 %v1179, %v1178
  %v1189 = vpack.c.bf16 %v1181, %v1180
  %s1190 = scalar_lea.vmem %s1, 14
  %v1191 = vld [vmem:[%s1190] sm:$0x3]
  %v1193 = vsel %vm82, %v1182, 0
  %v1196 = vsel %vm82, %v1183, 0
  %v1199 = vsel %vm82, %v1184, 0
  %v1202 = vsel %vm82, %v1185, 0
  %v1205 = vsel %vm82, %v1186, 0
  %v1208 = vsel %vm82, %v1187, 0
  %v1211 = vsel %vm82, %v1188, 0
  %v1214 = vsel %vm82, %v1189, 0
  %v1217 = vsel %vm107, %v1191, 0
  %1219 = vmatprep.subr.bf16.mxu0 0
  %1220 = vmatpush1.bf16.msra.mxu0 %v1217
  %1221 = vmatprep.subr.bf16.mxu0 0
  %1222 = vmatpush1.bf16.msra.mxu0 0
  %1223 = vmatprep.subr.bf16.mxu0 0
  %1224 = vmatpush1.bf16.msra.mxu0 0
  %1225 = vmatprep.subr.bf16.mxu0 0
  %1226 = vmatpush1.bf16.msra.mxu0 0
  %1227 = vmatprep.subr.bf16.mxu0 0
  %1228 = vmatpush1.bf16.msra.mxu0 0
  %1229 = vmatprep.subr.bf16.mxu0 0
  %1230 = vmatpush1.bf16.msra.mxu0 0
  %1231 = vmatprep.subr.bf16.mxu0 0
  %1232 = vmatpush1.bf16.msra.mxu0 0
  %1233 = vmatprep.subr.bf16.mxu0 0
  %1234 = vmatpush1.bf16.msra.mxu0 0
  %1235 = vmatprep.subr.bf16.mxu0 0
  %1236 = vmatpush1.bf16.msra.mxu0 0
  %1237 = vmatprep.subr.bf16.mxu0 0
  %1238 = vmatpush1.bf16.msra.mxu0 0
  %1239 = vmatprep.subr.bf16.mxu0 0
  %1240 = vmatpush1.bf16.msra.mxu0 0
  %1241 = vmatprep.subr.bf16.mxu0 0
  %1242 = vmatpush1.bf16.msra.mxu0 0
  %1243 = vmatprep.subr.bf16.mxu0 0
  %1244 = vmatpush1.bf16.msra.mxu0 0
  %1245 = vmatprep.subr.bf16.mxu0 0
  %1246 = vmatpush1.bf16.msra.mxu0 0
  %1247 = vmatprep.subr.bf16.mxu0 0
  %1248 = vmatpush1.bf16.msra.mxu0 0
  %1249 = vmatprep.subr.bf16.mxu0 0
  %1250 = vmatpush1.bf16.msra.mxu0 0
  %1251 = vmatprep.mubr.bf16.mxu0 0
  %1252 = vmatmul.mubr.bf16.gmra.mrb[0].mxu0 %v1193
  %v1253 = vpop.f32.mrb[0].mxu0
  %v1254 = vadd.f32 0.0, %v1253
  %v1255 = vpop.f32.mrb[0].mxu0
  %v1256 = vpop.f32.mrb[0].mxu0
  %v1257 = vadd.f32 0.0, %v1256
  %v1258 = vpop.f32.mrb[0].mxu0
  %1259 = vmatprep.mubr.bf16.mxu0 0
  %1260 = vmatmul.mubr.bf16.gmra.mrb[0].mxu0 %v1196
  %v1261 = vpop.f32.mrb[0].mxu0
  %v1262 = vadd.f32 0.0, %v1261
  %v1263 = vpop.f32.mrb[0].mxu0
  %v1264 = vpop.f32.mrb[0].mxu0
  %v1265 = vadd.f32 0.0, %v1264
  %v1266 = vpop.f32.mrb[0].mxu0
  %1267 = vmatprep.mubr.bf16.mxu0 0
  %1268 = vmatmul.mubr.bf16.gmra.mrb[0].mxu0 %v1199
  %v1269 = vpop.f32.mrb[0].mxu0
  %v1270 = vadd.f32 0.0, %v1269
  %v1271 = vpop.f32.mrb[0].mxu0
  %v1272 = vpop.f32.mrb[0].mxu0
  %v1273 = vadd.f32 0.0, %v1272
  %v1274 = vpop.f32.mrb[0].mxu0
  %1275 = vmatprep.mubr.bf16.mxu0 0
  %1276 = vmatmul.mubr.bf16.gmra.mrb[0].mxu0 %v1202
  %v1277 = vpop.f32.mrb[0].mxu0
  %v1278 = vadd.f32 0.0, %v1277
  %v1279 = vpop.f32.mrb[0].mxu0
  %v1280 = vpop.f32.mrb[0].mxu0
  %v1281 = vadd.f32 0.0, %v1280
  %v1282 = vpop.f32.mrb[0].mxu0
  %1283 = vmatprep.mubr.bf16.mxu0 0
  %1284 = vmatmul.mubr.bf16.gmra.mrb[0].mxu0 %v1205
  %v1285 = vpop.f32.mrb[0].mxu0
  %v1286 = vadd.f32 0.0, %v1285
  %v1287 = vpop.f32.mrb[0].mxu0
  %v1288 = vpop.f32.mrb[0].mxu0
  %v1289 = vadd.f32 0.0, %v1288
  %v1290 = vpop.f32.mrb[0].mxu0
  %1291 = vmatprep.mubr.bf16.mxu0 0
  %1292 = vmatmul.mubr.bf16.gmra.mrb[0].mxu0 %v1208
  %v1293 = vpop.f32.mrb[0].mxu0
  %v1294 = vadd.f32 0.0, %v1293
  %v1295 = vpop.f32.mrb[0].mxu0
  %v1296 = vpop.f32.mrb[0].mxu0
  %v1297 = vadd.f32 0.0, %v1296
  %v1298 = vpop.f32.mrb[0].mxu0
  %1299 = vmatprep.mubr.bf16.mxu0 0
  %1300 = vmatmul.mubr.bf16.gmra.mrb[0].mxu0 %v1211
  %v1301 = vpop.f32.mrb[0].mxu0
  %v1302 = vadd.f32 0.0, %v1301
  %v1303 = vpop.f32.mrb[0].mxu0
  %v1304 = vpop.f32.mrb[0].mxu0
  %v1305 = vadd.f32 0.0, %v1304
  %v1306 = vpop.f32.mrb[0].mxu0
  %1307 = vmatprep.mubr.bf16.mxu0 0
  %1308 = vmatmul.mubr.bf16.gmra.mrb[0].mxu0 %v1214
  %v1309 = vpop.f32.mrb[0].mxu0
  %v1310 = vadd.f32 0.0, %v1309
  %v1311 = vpop.f32.mrb[0].mxu0
  %v1312 = vpop.f32.mrb[0].mxu0
  %v1313 = vadd.f32 0.0, %v1312
  %v1314 = vpop.f32.mrb[0].mxu0
  %1315 = vdwg.mxu0
  %v1316 = vadd.f32 %v1149, %v1254
  %v1317 = vadd.f32 %v1150, %v1257
  %v1318 = vadd.f32 %v1151, %v1262
  %v1319 = vadd.f32 %v1152, %v1265
  %v1320 = vadd.f32 %v1153, %v1270
  %v1321 = vadd.f32 %v1154, %v1273
  %v1322 = vadd.f32 %v1155, %v1278
  %v1323 = vadd.f32 %v1156, %v1281
  %v1324 = vadd.f32 %v1157, %v1286
  %v1325 = vadd.f32 %v1158, %v1289
  %v1326 = vadd.f32 %v1159, %v1294
  %v1327 = vadd.f32 %v1160, %v1297
  %v1328 = vadd.f32 %v1161, %v1302
  %v1329 = vadd.f32 %v1162, %v1305
  %v1330 = vadd.f32 %v1163, %v1310
  %v1331 = vadd.f32 %v1164, %v1313
  %v1332 = vld [vmem:[%s998 + $0x1] sm:$0xff]
  %v1333 = vld [vmem:[%s998 + $0x11] sm:$0xff]
  %v1334 = vld [vmem:[%s998 + $0x21] sm:$0xff]
  %v1335 = vld [vmem:[%s998 + $0x31] sm:$0xff]
  %v1336 = vld [vmem:[%s998 + $0x41] sm:$0xff]
  %v1337 = vld [vmem:[%s998 + $0x51] sm:$0xff]
  %v1338 = vld [vmem:[%s998 + $0x61] sm:$0xff]
  %v1339 = vld [vmem:[%s998 + $0x71] sm:$0xff]
  %v1340 = vld [vmem:[%s998 + $0x91] sm:$0xff]
  %v1341 = vld [vmem:[%s998 + $0xa1] sm:$0xff]
  %v1342 = vld [vmem:[%s998 + $0xb1] sm:$0xff]
  %v1343 = vld [vmem:[%s998 + $0xc1] sm:$0xff]
  %v1344 = vld [vmem:[%s998 + $0xd1] sm:$0xff]
  %v1345 = vld [vmem:[%s998 + $0xe1] sm:$0xff]
  %v1346 = vld [vmem:[%s998 + $0xf1] sm:$0xff]
  %v1347 = vld [vmem:[%s998 + $0x101] sm:$0xff]
  %v1348 = vpack.c.bf16 %v1333, %v1332
  %v1349 = vpack.c.bf16 %v1335, %v1334
  %v1350 = vpack.c.bf16 %v1337, %v1336
  %v1351 = vpack.c.bf16 %v1339, %v1338
  %v1352 = vpack.c.bf16 %v1341, %v1340
  %v1353 = vpack.c.bf16 %v1343, %v1342
  %v1354 = vpack.c.bf16 %v1345, %v1344
  %v1355 = vpack.c.bf16 %v1347, %v1346
  %s1356 = scalar_lea.vmem %s1, 16
  %v1357 = vld [vmem:[%s1356] sm:$0x3]
  %v1359 = vsel %vm82, %v1348, 0
  %v1362 = vsel %vm82, %v1349, 0
  %v1365 = vsel %vm82, %v1350, 0
  %v1368 = vsel %vm82, %v1351, 0
  %v1371 = vsel %vm82, %v1352, 0
  %v1374 = vsel %vm82, %v1353, 0
  %v1377 = vsel %vm82, %v1354, 0
  %v1380 = vsel %vm82, %v1355, 0
  %v1383 = vsel %vm107, %v1357, 0
  %1385 = vmatprep.subr.bf16.mxu0 0
  %1386 = vmatpush1.bf16.msra.mxu0 %v1383
  %1387 = vmatprep.subr.bf16.mxu0 0
  %1388 = vmatpush1.bf16.msra.mxu0 0
  %1389 = vmatprep.subr.bf16.mxu0 0
  %1390 = vmatpush1.bf16.msra.mxu0 0
  %1391 = vmatprep.subr.bf16.mxu0 0
  %1392 = vmatpush1.bf16.msra.mxu0 0
  %1393 = vmatprep.subr.bf16.mxu0 0
  %1394 = vmatpush1.bf16.msra.mxu0 0
  %1395 = vmatprep.subr.bf16.mxu0 0
  %1396 = vmatpush1.bf16.msra.mxu0 0
  %1397 = vmatprep.subr.bf16.mxu0 0
  %1398 = vmatpush1.bf16.msra.mxu0 0
  %1399 = vmatprep.subr.bf16.mxu0 0
  %1400 = vmatpush1.bf16.msra.mxu0 0
  %1401 = vmatprep.subr.bf16.mxu0 0
  %1402 = vmatpush1.bf16.msra.mxu0 0
  %1403 = vmatprep.subr.bf16.mxu0 0
  %1404 = vmatpush1.bf16.msra.mxu0 0
  %1405 = vmatprep.subr.bf16.mxu0 0
  %1406 = vmatpush1.bf16.msra.mxu0 0
  %1407 = vmatprep.subr.bf16.mxu0 0
  %1408 = vmatpush1.bf16.msra.mxu0 0
  %1409 = vmatprep.subr.bf16.mxu0 0
  %1410 = vmatpush1.bf16.msra.mxu0 0
  %1411 = vmatprep.subr.bf16.mxu0 0
  %1412 = vmatpush1.bf16.msra.mxu0 0
  %1413 = vmatprep.subr.bf16.mxu0 0
  %1414 = vmatpush1.bf16.msra.mxu0 0
  %1415 = vmatprep.subr.bf16.mxu0 0
  %1416 = vmatpush1.bf16.msra.mxu0 0
  %1417 = vmatprep.mubr.bf16.mxu0 0
  %1418 = vmatmul.mubr.bf16.gmra.mrb[0].mxu0 %v1359
  %v1419 = vpop.f32.mrb[0].mxu0
  %v1420 = vadd.f32 0.0, %v1419
  %v1421 = vpop.f32.mrb[0].mxu0
  %v1422 = vpop.f32.mrb[0].mxu0
  %v1423 = vadd.f32 0.0, %v1422
  %v1424 = vpop.f32.mrb[0].mxu0
  %1425 = vmatprep.mubr.bf16.mxu0 0
  %1426 = vmatmul.mubr.bf16.gmra.mrb[0].mxu0 %v1362
  %v1427 = vpop.f32.mrb[0].mxu0
  %v1428 = vadd.f32 0.0, %v1427
  %v1429 = vpop.f32.mrb[0].mxu0
  %v1430 = vpop.f32.mrb[0].mxu0
  %v1431 = vadd.f32 0.0, %v1430
  %v1432 = vpop.f32.mrb[0].mxu0
  %1433 = vmatprep.mubr.bf16.mxu0 0
  %1434 = vmatmul.mubr.bf16.gmra.mrb[0].mxu0 %v1365
  %v1435 = vpop.f32.mrb[0].mxu0
  %v1436 = vadd.f32 0.0, %v1435
  %v1437 = vpop.f32.mrb[0].mxu0
  %v1438 = vpop.f32.mrb[0].mxu0
  %v1439 = vadd.f32 0.0, %v1438
  %v1440 = vpop.f32.mrb[0].mxu0
  %1441 = vmatprep.mubr.bf16.mxu0 0
  %1442 = vmatmul.mubr.bf16.gmra.mrb[0].mxu0 %v1368
  %v1443 = vpop.f32.mrb[0].mxu0
  %v1444 = vadd.f32 0.0, %v1443
  %v1445 = vpop.f32.mrb[0].mxu0
  %v1446 = vpop.f32.mrb[0].mxu0
  %v1447 = vadd.f32 0.0, %v1446
  %v1448 = vpop.f32.mrb[0].mxu0
  %1449 = vmatprep.mubr.bf16.mxu0 0
  %1450 = vmatmul.mubr.bf16.gmra.mrb[0].mxu0 %v1371
  %v1451 = vpop.f32.mrb[0].mxu0
  %v1452 = vadd.f32 0.0, %v1451
  %v1453 = vpop.f32.mrb[0].mxu0
  %v1454 = vpop.f32.mrb[0].mxu0
  %v1455 = vadd.f32 0.0, %v1454
  %v1456 = vpop.f32.mrb[0].mxu0
  %1457 = vmatprep.mubr.bf16.mxu0 0
  %1458 = vmatmul.mubr.bf16.gmra.mrb[0].mxu0 %v1374
  %v1459 = vpop.f32.mrb[0].mxu0
  %v1460 = vadd.f32 0.0, %v1459
  %v1461 = vpop.f32.mrb[0].mxu0
  %v1462 = vpop.f32.mrb[0].mxu0
  %v1463 = vadd.f32 0.0, %v1462
  %v1464 = vpop.f32.mrb[0].mxu0
  %1465 = vmatprep.mubr.bf16.mxu0 0
  %1466 = vmatmul.mubr.bf16.gmra.mrb[0].mxu0 %v1377
  %v1467 = vpop.f32.mrb[0].mxu0
  %v1468 = vadd.f32 0.0, %v1467
  %v1469 = vpop.f32.mrb[0].mxu0
  %v1470 = vpop.f32.mrb[0].mxu0
  %v1471 = vadd.f32 0.0, %v1470
  %v1472 = vpop.f32.mrb[0].mxu0
  %1473 = vmatprep.mubr.bf16.mxu0 0
  %1474 = vmatmul.mubr.bf16.gmra.mrb[0].mxu0 %v1380
  %v1475 = vpop.f32.mrb[0].mxu0
  %v1476 = vadd.f32 0.0, %v1475
  %v1477 = vpop.f32.mrb[0].mxu0
  %v1478 = vpop.f32.mrb[0].mxu0
  %v1479 = vadd.f32 0.0, %v1478
  %v1480 = vpop.f32.mrb[0].mxu0
  %1481 = vdwg.mxu0
  %v1482 = vadd.f32 %v1316, %v1420
  %v1483 = vadd.f32 %v1317, %v1423
  %v1484 = vadd.f32 %v1318, %v1428
  %v1485 = vadd.f32 %v1319, %v1431
  %v1486 = vadd.f32 %v1320, %v1436
  %v1487 = vadd.f32 %v1321, %v1439
  %v1488 = vadd.f32 %v1322, %v1444
  %v1489 = vadd.f32 %v1323, %v1447
  %v1490 = vadd.f32 %v1324, %v1452
  %v1491 = vadd.f32 %v1325, %v1455
  %v1492 = vadd.f32 %v1326, %v1460
  %v1493 = vadd.f32 %v1327, %v1463
  %v1494 = vadd.f32 %v1328, %v1468
  %v1495 = vadd.f32 %v1329, %v1471
  %v1496 = vadd.f32 %v1330, %v1476
  %v1497 = vadd.f32 %v1331, %v1479
  %v1498 = vld [vmem:[%s4] sm:$0x1]
  %v1499 = vld [vmem:[%s5] sm:$0x1]
  %vm1500 = vcmask 64512
  %v1501 = vsel %vm1500, %v1482, 0.0
  %v1502 = vsel %vm1500, %v1483, 0.0
  %v1503 = vadd.f32 %v1501, %v1502
  %v1504 = vsel %vm1500, %v1484, 0.0
  %v1505 = vadd.f32 %v1503, %v1504
  %v1506 = vsel %vm1500, %v1485, 0.0
  %v1507 = vadd.f32 %v1505, %v1506
  %v1508 = vsel %vm1500, %v1486, 0.0
  %v1509 = vadd.f32 %v1507, %v1508
  %v1510 = vsel %vm1500, %v1487, 0.0
  %v1511 = vadd.f32 %v1509, %v1510
  %v1512 = vsel %vm1500, %v1488, 0.0
  %v1513 = vadd.f32 %v1511, %v1512
  %v1514 = vsel %vm1500, %v1489, 0.0
  %v1515 = vadd.f32 %v1513, %v1514
  %v1516 = vsel %vm1500, %v1490, 0.0
  %v1517 = vadd.f32 %v1515, %v1516
  %v1518 = vsel %vm1500, %v1491, 0.0
  %v1519 = vadd.f32 %v1517, %v1518
  %v1520 = vsel %vm1500, %v1492, 0.0
  %v1521 = vadd.f32 %v1519, %v1520
  %v1522 = vsel %vm1500, %v1493, 0.0
  %v1523 = vadd.f32 %v1521, %v1522
  %v1524 = vsel %vm1500, %v1494, 0.0
  %v1525 = vadd.f32 %v1523, %v1524
  %v1526 = vsel %vm1500, %v1495, 0.0
  %v1527 = vadd.f32 %v1525, %v1526
  %v1528 = vsel %vm1500, %v1496, 0.0
  %v1529 = vadd.f32 %v1527, %v1528
  %v1530 = vsel %vm1500, %v1497, 0.0
  %v1531 = vadd.f32 %v1529, %v1530
  %v1532 = vrot.slane %v1531, 4
  %v1533 = vadd.f32 %v1531, %v1532
  %v1534 = vrot.slane %v1533, 2
  %v1535 = vadd.f32 %v1533, %v1534
  %v1536 = vrot.slane %v1535, 1
  %v1537 = vadd.f32 %v1535, %v1536
  %v1538 = vmul.f32 %v1537, 0.0078125
  %v1539 = vmul.f32 %v1482, %v1482
  %v1540 = vmul.f32 %v1483, %v1483
  %v1541 = vmul.f32 %v1484, %v1484
  %v1542 = vmul.f32 %v1485, %v1485
  %v1543 = vmul.f32 %v1486, %v1486
  %v1544 = vmul.f32 %v1487, %v1487
  %v1545 = vmul.f32 %v1488, %v1488
  %v1546 = vmul.f32 %v1489, %v1489
  %v1547 = vmul.f32 %v1490, %v1490
  %v1548 = vmul.f32 %v1491, %v1491
  %v1549 = vmul.f32 %v1492, %v1492
  %v1550 = vmul.f32 %v1493, %v1493
  %v1551 = vmul.f32 %v1494, %v1494
  %v1552 = vmul.f32 %v1495, %v1495
  %v1553 = vmul.f32 %v1496, %v1496
  %v1554 = vmul.f32 %v1497, %v1497
  %v1555 = vsel %vm1500, %v1539, 0.0
  %v1556 = vsel %vm1500, %v1540, 0.0
  %v1557 = vadd.f32 %v1555, %v1556
  %v1558 = vsel %vm1500, %v1541, 0.0
  %v1559 = vadd.f32 %v1557, %v1558
  %v1560 = vsel %vm1500, %v1542, 0.0
  %v1561 = vadd.f32 %v1559, %v1560
  %v1562 = vsel %vm1500, %v1543, 0.0
  %v1563 = vadd.f32 %v1561, %v1562
  %v1564 = vsel %vm1500, %v1544, 0.0
  %v1565 = vadd.f32 %v1563, %v1564
  %v1566 = vsel %vm1500, %v1545, 0.0
  %v1567 = vadd.f32 %v1565, %v1566
  %v1568 = vsel %vm1500, %v1546, 0.0
  %v1569 = vadd.f32 %v1567, %v1568
  %v1570 = vsel %vm1500, %v1547, 0.0
  %v1571 = vadd.f32 %v1569, %v1570
  %v1572 = vsel %vm1500, %v1548, 0.0
  %v1573 = vadd.f32 %v1571, %v1572
  %v1574 = vsel %vm1500, %v1549, 0.0
  %v1575 = vadd.f32 %v1573, %v1574
  %v1576 = vsel %vm1500, %v1550, 0.0
  %v1577 = vadd.f32 %v1575, %v1576
  %v1578 = vsel %vm1500, %v1551, 0.0
  %v1579 = vadd.f32 %v1577, %v1578
  %v1580 = vsel %vm1500, %v1552, 0.0
  %v1581 = vadd.f32 %v1579, %v1580
  %v1582 = vsel %vm1500, %v1553, 0.0
  %v1583 = vadd.f32 %v1581, %v1582
  %v1584 = vsel %vm1500, %v1554, 0.0
  %v1585 = vadd.f32 %v1583, %v1584
  %v1586 = vrot.slane %v1585, 4
  %v1587 = vadd.f32 %v1585, %v1586
  %v1588 = vrot.slane %v1587, 2
  %v1589 = vadd.f32 %v1587, %v1588
  %v1590 = vrot.slane %v1589, 1
  %v1591 = vadd.f32 %v1589, %v1590
  %v1592 = vmul.f32 %v1591, 0.0078125
  %v1593 = vmul.f32 %v1538, %v1538
  %v1594 = vsub.f32 %v1592, %v1593
  %v1595 = vsub.f32 %v1482, %v1538
  %v1596 = vsub.f32 %v1483, %v1538
  %v1597 = vsub.f32 %v1484, %v1538
  %v1598 = vsub.f32 %v1485, %v1538
  %v1599 = vsub.f32 %v1486, %v1538
  %v1600 = vsub.f32 %v1487, %v1538
  %v1601 = vsub.f32 %v1488, %v1538
  %v1602 = vsub.f32 %v1489, %v1538
  %v1603 = vsub.f32 %v1490, %v1538
  %v1604 = vsub.f32 %v1491, %v1538
  %v1605 = vsub.f32 %v1492, %v1538
  %v1606 = vsub.f32 %v1493, %v1538
  %v1607 = vsub.f32 %v1494, %v1538
  %v1608 = vsub.f32 %v1495, %v1538
  %v1609 = vsub.f32 %v1496, %v1538
  %v1610 = vsub.f32 %v1497, %v1538
  %v1611 = vadd.f32 %v1594, 1e-05
  %v1612 = vrsqrt.pop %v1611
  %v1613 = vmul.f32 %v1595, %v1612
  %v1614 = vmul.f32 %v1596, %v1612
  %v1615 = vmul.f32 %v1597, %v1612
  %v1616 = vmul.f32 %v1598, %v1612
  %v1617 = vmul.f32 %v1599, %v1612
  %v1618 = vmul.f32 %v1600, %v1612
  %v1619 = vmul.f32 %v1601, %v1612
  %v1620 = vmul.f32 %v1602, %v1612
  %v1621 = vmul.f32 %v1603, %v1612
  %v1622 = vmul.f32 %v1604, %v1612
  %v1623 = vmul.f32 %v1605, %v1612
  %v1624 = vmul.f32 %v1606, %v1612
  %v1625 = vmul.f32 %v1607, %v1612
  %v1626 = vmul.f32 %v1608, %v1612
  %v1627 = vmul.f32 %v1609, %v1612
  %v1628 = vmul.f32 %v1610, %v1612
  %v1630 = vlaneseq
  %v1631 = vshrl.u32 %v1630, 7
  %v1632 = vsub.s32 0, %v1631
  %v1633 = vrot.slane %v1498, %v1632
  %v1635 = vmul.f32 %v1613, %v1633
  %v1636 = vmul.f32 %v1614, %v1633
  %v1637 = vmul.f32 %v1615, %v1633
  %v1638 = vmul.f32 %v1616, %v1633
  %v1639 = vmul.f32 %v1617, %v1633
  %v1640 = vmul.f32 %v1618, %v1633
  %v1641 = vmul.f32 %v1619, %v1633
  %v1642 = vmul.f32 %v1620, %v1633
  %v1643 = vmul.f32 %v1621, %v1633
  %v1644 = vmul.f32 %v1622, %v1633
  %v1645 = vmul.f32 %v1623, %v1633
  %v1646 = vmul.f32 %v1624, %v1633
  %v1647 = vmul.f32 %v1625, %v1633
  %v1648 = vmul.f32 %v1626, %v1633
  %v1649 = vmul.f32 %v1627, %v1633
  %v1650 = vmul.f32 %v1628, %v1633
  %v1652 = vlaneseq
  %v1653 = vshrl.u32 %v1652, 7
  %v1654 = vsub.s32 0, %v1653
  %v1655 = vrot.slane %v1499, %v1654
  %v1657 = vadd.f32 %v1635, %v1655
  %v1658 = vadd.f32 %v1636, %v1655
  %v1659 = vadd.f32 %v1637, %v1655
  %v1660 = vadd.f32 %v1638, %v1655
  %v1661 = vadd.f32 %v1639, %v1655
  %v1662 = vadd.f32 %v1640, %v1655
  %v1663 = vadd.f32 %v1641, %v1655
  %v1664 = vadd.f32 %v1642, %v1655
  %v1665 = vadd.f32 %v1643, %v1655
  %v1666 = vadd.f32 %v1644, %v1655
  %v1667 = vadd.f32 %v1645, %v1655
  %v1668 = vadd.f32 %v1646, %v1655
  %v1669 = vadd.f32 %v1647, %v1655
  %v1670 = vadd.f32 %v1648, %v1655
  %v1671 = vadd.f32 %v1649, %v1655
  %v1672 = vadd.f32 %v1650, %v1655
  %v1673 = vmax.f32 %v1657, 0.0
  %v1674 = vmax.f32 %v1658, 0.0
  %v1675 = vmax.f32 %v1659, 0.0
  %v1676 = vmax.f32 %v1660, 0.0
  %v1677 = vmax.f32 %v1661, 0.0
  %v1678 = vmax.f32 %v1662, 0.0
  %v1679 = vmax.f32 %v1663, 0.0
  %v1680 = vmax.f32 %v1664, 0.0
  %v1681 = vmax.f32 %v1665, 0.0
  %v1682 = vmax.f32 %v1666, 0.0
  %v1683 = vmax.f32 %v1667, 0.0
  %v1684 = vmax.f32 %v1668, 0.0
  %v1685 = vmax.f32 %v1669, 0.0
  %v1686 = vmax.f32 %v1670, 0.0
  %v1687 = vmax.f32 %v1671, 0.0
  %v1688 = vmax.f32 %v1672, 0.0
  %1689 = vst.msk [vmem:[#allocation2] sm:$0xff] %vm1500, 0.0
  %vm1690 = vcmask 58368
  %1691 = vst.msk [vmem:[#allocation2 + $0x8] sm:$0x3] %vm1690, 0.0
  %1692 = vst.msk [vmem:[#allocation2 + $0x10] sm:$0xff] %vm1500, 0.0
  %1693 = vst.msk [vmem:[#allocation2 + $0x18] sm:$0x3] %vm1690, 0.0
  %1694 = vst.msk [vmem:[#allocation2 + $0x20] sm:$0xff] %vm1500, 0.0
  %1695 = vst.msk [vmem:[#allocation2 + $0x28] sm:$0x3] %vm1690, 0.0
  %1696 = vst.msk [vmem:[#allocation2 + $0x30] sm:$0xff] %vm1500, 0.0
  %1697 = vst.msk [vmem:[#allocation2 + $0x38] sm:$0x3] %vm1690, 0.0
  %1698 = vst.msk [vmem:[#allocation2 + $0x40] sm:$0xff] %vm1500, 0.0
  %1699 = vst.msk [vmem:[#allocation2 + $0x48] sm:$0x3] %vm1690, 0.0
  %1700 = vst.msk [vmem:[#allocation2 + $0x50] sm:$0xff] %vm1500, 0.0
  %1701 = vst.msk [vmem:[#allocation2 + $0x58] sm:$0x3] %vm1690, 0.0
  %1702 = vst.msk [vmem:[#allocation2 + $0x60] sm:$0xff] %vm1500, 0.0
  %1703 = vst.msk [vmem:[#allocation2 + $0x68] sm:$0x3] %vm1690, 0.0
  %1704 = vst.msk [vmem:[#allocation2 + $0x70] sm:$0xff] %vm1500, 0.0
  %1705 = vst.msk [vmem:[#allocation2 + $0x78] sm:$0x3] %vm1690, 0.0
  %1706 = vst.msk [vmem:[#allocation2 + $0x80] sm:$0xff] %vm1500, 0.0
  %1707 = vst.msk [vmem:[#allocation2 + $0x88] sm:$0x3] %vm1690, 0.0
  %1708 = vst.msk [vmem:[#allocation2 + $0x90] sm:$0xff] %vm1500, 0.0
  %1709 = vst.msk [vmem:[#allocation2 + $0x98] sm:$0x3] %vm1690, 0.0
  %1710 = vst.msk [vmem:[#allocation2 + $0xa0] sm:$0xff] %vm1500, 0.0
  %1711 = vst.msk [vmem:[#allocation2 + $0xa8] sm:$0x3] %vm1690, 0.0
  %1712 = vst.msk [vmem:[#allocation2 + $0xb0] sm:$0xff] %vm1500, 0.0
  %1713 = vst.msk [vmem:[#allocation2 + $0xb8] sm:$0x3] %vm1690, 0.0
  %1714 = vst.msk [vmem:[#allocation2 + $0xc0] sm:$0xff] %vm1500, 0.0
  %1715 = vst.msk [vmem:[#allocation2 + $0xc8] sm:$0x3] %vm1690, 0.0
  %1716 = vst.msk [vmem:[#allocation2 + $0xd0] sm:$0xff] %vm1500, 0.0
  %1717 = vst.msk [vmem:[#allocation2 + $0xd8] sm:$0x3] %vm1690, 0.0
  %1718 = vst.msk [vmem:[#allocation2 + $0xe0] sm:$0xff] %vm1500, 0.0
  %1719 = vst.msk [vmem:[#allocation2 + $0xe8] sm:$0x3] %vm1690, 0.0
  %1720 = vst.msk [vmem:[#allocation2 + $0xf0] sm:$0xff] %vm1500, 0.0
  %1721 = vst.msk [vmem:[#allocation2 + $0xf8] sm:$0x3] %vm1690, 0.0
  %1722 = vst.msk [vmem:[#allocation2 + $0x100] sm:$0xff] %vm1500, 0.0
  %1723 = vst.msk [vmem:[#allocation2 + $0x108] sm:$0x3] %vm1690, 0.0
  %1724 = vst.msk [vmem:[#allocation2 + $0x110] sm:$0xff] %vm1500, 0.0
  %1725 = vst.msk [vmem:[#allocation2 + $0x118] sm:$0x3] %vm1690, 0.0
  %1726 = vst.msk [vmem:[#allocation2 + $0x120] sm:$0xff] %vm1500, 0.0
  %1727 = vst.msk [vmem:[#allocation2 + $0x128] sm:$0x3] %vm1690, 0.0
  %1728 = vst.msk [vmem:[#allocation2 + $0x130] sm:$0xff] %vm1500, 0.0
  %1729 = vst.msk [vmem:[#allocation2 + $0x138] sm:$0x3] %vm1690, 0.0
  %s1730 = scalar_lea.vmem [#allocation2], 16
  %1731 = vst.msk [vmem:[%s1730 + $0x1] sm:$0xff] %vm1500, %v1673
  %1732 = vst.msk [vmem:[%s1730 + $0x11] sm:$0xff] %vm1500, %v1674
  %1733 = vst.msk [vmem:[%s1730 + $0x21] sm:$0xff] %vm1500, %v1675
  %1734 = vst.msk [vmem:[%s1730 + $0x31] sm:$0xff] %vm1500, %v1676
  %1735 = vst.msk [vmem:[%s1730 + $0x41] sm:$0xff] %vm1500, %v1677
  %1736 = vst.msk [vmem:[%s1730 + $0x51] sm:$0xff] %vm1500, %v1678
  %1737 = vst.msk [vmem:[%s1730 + $0x61] sm:$0xff] %vm1500, %v1679
  %1738 = vst.msk [vmem:[%s1730 + $0x71] sm:$0xff] %vm1500, %v1680
  %1739 = vst.msk [vmem:[%s1730 + $0xa1] sm:$0xff] %vm1500, %v1681
  %1740 = vst.msk [vmem:[%s1730 + $0xb1] sm:$0xff] %vm1500, %v1682
  %1741 = vst.msk [vmem:[%s1730 + $0xc1] sm:$0xff] %vm1500, %v1683
  %1742 = vst.msk [vmem:[%s1730 + $0xd1] sm:$0xff] %vm1500, %v1684
  %1743 = vst.msk [vmem:[%s1730 + $0xe1] sm:$0xff] %vm1500, %v1685
  %1744 = vst.msk [vmem:[%s1730 + $0xf1] sm:$0xff] %vm1500, %v1686
  %1745 = vst.msk [vmem:[%s1730 + $0x101] sm:$0xff] %vm1500, %v1687
  %1746 = vst.msk [vmem:[%s1730 + $0x111] sm:$0xff] %vm1500, %v1688
  %v1747 = vld [vmem:[#allocation2] sm:$0xff]
  %v1748 = vld [vmem:[#allocation2 + $0x10] sm:$0xff]
  %v1749 = vld [vmem:[#allocation2 + $0x20] sm:$0xff]
  %v1750 = vld [vmem:[#allocation2 + $0x30] sm:$0xff]
  %v1751 = vld [vmem:[#allocation2 + $0x40] sm:$0xff]
  %v1752 = vld [vmem:[#allocation2 + $0x50] sm:$0xff]
  %v1753 = vld [vmem:[#allocation2 + $0x60] sm:$0xff]
  %v1754 = vld [vmem:[#allocation2 + $0x70] sm:$0xff]
  %v1755 = vld [vmem:[#allocation2 + $0xa0] sm:$0xff]
  %v1756 = vld [vmem:[#allocation2 + $0xb0] sm:$0xff]
  %v1757 = vld [vmem:[#allocation2 + $0xc0] sm:$0xff]
  %v1758 = vld [vmem:[#allocation2 + $0xd0] sm:$0xff]
  %v1759 = vld [vmem:[#allocation2 + $0xe0] sm:$0xff]
  %v1760 = vld [vmem:[#allocation2 + $0xf0] sm:$0xff]
  %v1761 = vld [vmem:[#allocation2 + $0x100] sm:$0xff]
  %v1762 = vld [vmem:[#allocation2 + $0x110] sm:$0xff]
  %v1763 = vpack.c.bf16 %v1748, %v1747
  %v1764 = vpack.c.bf16 %v1750, %v1749
  %v1765 = vpack.c.bf16 %v1752, %v1751
  %v1766 = vpack.c.bf16 %v1754, %v1753
  %v1767 = vpack.c.bf16 %v1756, %v1755
  %v1768 = vpack.c.bf16 %v1758, %v1757
  %v1769 = vpack.c.bf16 %v1760, %v1759
  %v1770 = vpack.c.bf16 %v1762, %v1761
  %v1771 = vld [vmem:[%s2] sm:$0xf]
  %v1772 = vld [vmem:[#allocation2 + $0x1] sm:$0xff]
  %v1773 = vld [vmem:[#allocation2 + $0x11] sm:$0xff]
  %v1774 = vld [vmem:[#allocation2 + $0x21] sm:$0xff]
  %v1775 = vld [vmem:[#allocation2 + $0x31] sm:$0xff]
  %v1776 = vld [vmem:[#allocation2 + $0x41] sm:$0xff]
  %v1777 = vld [vmem:[#allocation2 + $0x51] sm:$0xff]
  %v1778 = vld [vmem:[#allocation2 + $0x61] sm:$0xff]
  %v1779 = vld [vmem:[#allocation2 + $0x71] sm:$0xff]
  %v1780 = vld [vmem:[#allocation2 + $0xa1] sm:$0xff]
  %v1781 = vld [vmem:[#allocation2 + $0xb1] sm:$0xff]
  %v1782 = vld [vmem:[#allocation2 + $0xc1] sm:$0xff]
  %v1783 = vld [vmem:[#allocation2 + $0xd1] sm:$0xff]
  %v1784 = vld [vmem:[#allocation2 + $0xe1] sm:$0xff]
  %v1785 = vld [vmem:[#allocation2 + $0xf1] sm:$0xff]
  %v1786 = vld [vmem:[#allocation2 + $0x101] sm:$0xff]
  %v1787 = vld [vmem:[#allocation2 + $0x111] sm:$0xff]
  %v1788 = vpack.c.bf16 %v1773, %v1772
  %v1789 = vpack.c.bf16 %v1775, %v1774
  %v1790 = vpack.c.bf16 %v1777, %v1776
  %v1791 = vpack.c.bf16 %v1779, %v1778
  %v1792 = vpack.c.bf16 %v1781, %v1780
  %v1793 = vpack.c.bf16 %v1783, %v1782
  %v1794 = vpack.c.bf16 %v1785, %v1784
  %v1795 = vpack.c.bf16 %v1787, %v1786
  %s1796 = scalar_lea.vmem %s2, 4
  %v1797 = vld [vmem:[%s1796] sm:$0xf]
  %v1799 = vsel %vm1500, %v1788, 0
  %v1802 = vsel %vm1500, %v1789, 0
  %v1805 = vsel %vm1500, %v1790, 0
  %v1808 = vsel %vm1500, %v1791, 0
  %v1811 = vsel %vm1500, %v1792, 0
  %v1814 = vsel %vm1500, %v1793, 0
  %v1817 = vsel %vm1500, %v1794, 0
  %v1820 = vsel %vm1500, %v1795, 0
  %vm1822 = vcmask 1043456
  %v1824 = vsel %vm1822, %v1797, 0
  %1826 = vmatprep.subr.bf16.mxu0 0
  %1827 = vmatpush1.bf16.msra.mxu0 %v1824
  %1828 = vmatprep.subr.bf16.mxu0 0
  %1829 = vmatpush1.bf16.msra.mxu0 0
  %1830 = vmatprep.subr.bf16.mxu0 0
  %1831 = vmatpush1.bf16.msra.mxu0 0
  %1832 = vmatprep.subr.bf16.mxu0 0
  %1833 = vmatpush1.bf16.msra.mxu0 0
  %1834 = vmatprep.subr.bf16.mxu0 0
  %1835 = vmatpush1.bf16.msra.mxu0 0
  %1836 = vmatprep.subr.bf16.mxu0 0
  %1837 = vmatpush1.bf16.msra.mxu0 0
  %1838 = vmatprep.subr.bf16.mxu0 0
  %1839 = vmatpush1.bf16.msra.mxu0 0
  %1840 = vmatprep.subr.bf16.mxu0 0
  %1841 = vmatpush1.bf16.msra.mxu0 0
  %1842 = vmatprep.subr.bf16.mxu0 0
  %1843 = vmatpush1.bf16.msra.mxu0 0
  %1844 = vmatprep.subr.bf16.mxu0 0
  %1845 = vmatpush1.bf16.msra.mxu0 0
  %1846 = vmatprep.subr.bf16.mxu0 0
  %1847 = vmatpush1.bf16.msra.mxu0 0
  %1848 = vmatprep.subr.bf16.mxu0 0
  %1849 = vmatpush1.bf16.msra.mxu0 0
  %1850 = vmatprep.subr.bf16.mxu0 0
  %1851 = vmatpush1.bf16.msra.mxu0 0
  %1852 = vmatprep.subr.bf16.mxu0 0
  %1853 = vmatpush1.bf16.msra.mxu0 0
  %1854 = vmatprep.subr.bf16.mxu0 0
  %1855 = vmatpush1.bf16.msra.mxu0 0
  %1856 = vmatprep.subr.bf16.mxu0 0
  %1857 = vmatpush1.bf16.msra.mxu0 0
  %1858 = vmatprep.mubr.bf16.mxu0 0
  %1859 = vmatmul.mubr.bf16.gmra.mrb[0].mxu0 %v1799
  %v1860 = vpop.f32.mrb[0].mxu0
  %v1861 = vadd.f32 0.0, %v1860
  %v1862 = vpop.f32.mrb[0].mxu0
  %v1863 = vpop.f32.mrb[0].mxu0
  %v1864 = vadd.f32 0.0, %v1863
  %v1865 = vpop.f32.mrb[0].mxu0
  %1866 = vmatprep.mubr.bf16.mxu0 0
  %1867 = vmatmul.mubr.bf16.gmra.mrb[0].mxu0 %v1802
  %v1868 = vpop.f32.mrb[0].mxu0
  %v1869 = vadd.f32 0.0, %v1868
  %v1870 = vpop.f32.mrb[0].mxu0
  %v1871 = vpop.f32.mrb[0].mxu0
  %v1872 = vadd.f32 0.0, %v1871
  %v1873 = vpop.f32.mrb[0].mxu0
  %1874 = vmatprep.mubr.bf16.mxu0 0
  %1875 = vmatmul.mubr.bf16.gmra.mrb[0].mxu0 %v1805
  %v1876 = vpop.f32.mrb[0].mxu0
  %v1877 = vadd.f32 0.0, %v1876
  %v1878 = vpop.f32.mrb[0].mxu0
  %v1879 = vpop.f32.mrb[0].mxu0
  %v1880 = vadd.f32 0.0, %v1879
  %v1881 = vpop.f32.mrb[0].mxu0
  %1882 = vmatprep.mubr.bf16.mxu0 0
  %1883 = vmatmul.mubr.bf16.gmra.mrb[0].mxu0 %v1808
  %v1884 = vpop.f32.mrb[0].mxu0
  %v1885 = vadd.f32 0.0, %v1884
  %v1886 = vpop.f32.mrb[0].mxu0
  %v1887 = vpop.f32.mrb[0].mxu0
  %v1888 = vadd.f32 0.0, %v1887
  %v1889 = vpop.f32.mrb[0].mxu0
  %1890 = vmatprep.mubr.bf16.mxu0 0
  %1891 = vmatmul.mubr.bf16.gmra.mrb[0].mxu0 %v1811
  %v1892 = vpop.f32.mrb[0].mxu0
  %v1893 = vadd.f32 0.0, %v1892
  %v1894 = vpop.f32.mrb[0].mxu0
  %v1895 = vpop.f32.mrb[0].mxu0
  %v1896 = vadd.f32 0.0, %v1895
  %v1897 = vpop.f32.mrb[0].mxu0
  %1898 = vmatprep.mubr.bf16.mxu0 0
  %1899 = vmatmul.mubr.bf16.gmra.mrb[0].mxu0 %v1814
  %v1900 = vpop.f32.mrb[0].mxu0
  %v1901 = vadd.f32 0.0, %v1900
  %v1902 = vpop.f32.mrb[0].mxu0
  %v1903 = vpop.f32.mrb[0].mxu0
  %v1904 = vadd.f32 0.0, %v1903
  %v1905 = vpop.f32.mrb[0].mxu0
  %1906 = vmatprep.mubr.bf16.mxu0 0
  %1907 = vmatmul.mubr.bf16.gmra.mrb[0].mxu0 %v1817
  %v1908 = vpop.f32.mrb[0].mxu0
  %v1909 = vadd.f32 0.0, %v1908
  %v1910 = vpop.f32.mrb[0].mxu0
  %v1911 = vpop.f32.mrb[0].mxu0
  %v1912 = vadd.f32 0.0, %v1911
  %v1913 = vpop.f32.mrb[0].mxu0
  %1914 = vmatprep.mubr.bf16.mxu0 0
  %1915 = vmatmul.mubr.bf16.gmra.mrb[0].mxu0 %v1820
  %v1916 = vpop.f32.mrb[0].mxu0
  %v1917 = vadd.f32 0.0, %v1916
  %v1918 = vpop.f32.mrb[0].mxu0
  %v1919 = vpop.f32.mrb[0].mxu0
  %v1920 = vadd.f32 0.0, %v1919
  %v1921 = vpop.f32.mrb[0].mxu0
  %1922 = vdwg.mxu0
  %v1924 = vsel %vm1500, %v1763, 0
  %v1927 = vsel %vm1500, %v1764, 0
  %v1930 = vsel %vm1500, %v1765, 0
  %v1933 = vsel %vm1500, %v1766, 0
  %v1936 = vsel %vm1500, %v1767, 0
  %v1939 = vsel %vm1500, %v1768, 0
  %v1942 = vsel %vm1500, %v1769, 0
  %v1945 = vsel %vm1500, %v1770, 0
  %v1948 = vsel %vm1822, %v1771, 0
  %1950 = vmatprep.subr.bf16.mxu0 0
  %1951 = vmatpush1.bf16.msra.mxu0 %v1948
  %1952 = vmatprep.subr.bf16.mxu0 0
  %1953 = vmatpush1.bf16.msra.mxu0 0
  %1954 = vmatprep.subr.bf16.mxu0 0
  %1955 = vmatpush1.bf16.msra.mxu0 0
  %1956 = vmatprep.subr.bf16.mxu0 0
  %1957 = vmatpush1.bf16.msra.mxu0 0
  %1958 = vmatprep.subr.bf16.mxu0 0
  %1959 = vmatpush1.bf16.msra.mxu0 0
  %1960 = vmatprep.subr.bf16.mxu0 0
  %1961 = vmatpush1.bf16.msra.mxu0 0
  %1962 = vmatprep.subr.bf16.mxu0 0
  %1963 = vmatpush1.bf16.msra.mxu0 0
  %1964 = vmatprep.subr.bf16.mxu0 0
  %1965 = vmatpush1.bf16.msra.mxu0 0
  %1966 = vmatprep.subr.bf16.mxu0 0
  %1967 = vmatpush1.bf16.msra.mxu0 0
  %1968 = vmatprep.subr.bf16.mxu0 0
  %1969 = vmatpush1.bf16.msra.mxu0 0
  %1970 = vmatprep.subr.bf16.mxu0 0
  %1971 = vmatpush1.bf16.msra.mxu0 0
  %1972 = vmatprep.subr.bf16.mxu0 0
  %1973 = vmatpush1.bf16.msra.mxu0 0
  %1974 = vmatprep.subr.bf16.mxu0 0
  %1975 = vmatpush1.bf16.msra.mxu0 0
  %1976 = vmatprep.subr.bf16.mxu0 0
  %1977 = vmatpush1.bf16.msra.mxu0 0
  %1978 = vmatprep.subr.bf16.mxu0 0
  %1979 = vmatpush1.bf16.msra.mxu0 0
  %1980 = vmatprep.subr.bf16.mxu0 0
  %1981 = vmatpush1.bf16.msra.mxu0 0
  %1982 = vmatprep.mubr.bf16.mxu0 0
  %1983 = vmatmul.mubr.bf16.gmra.mrb[0].mxu0 %v1924
  %v1984 = vpop.f32.mrb[0].mxu0
  %v1985 = vadd.f32 %v1861, %v1984
  %v1986 = vpop.f32.mrb[0].mxu0
  %v1987 = vpop.f32.mrb[0].mxu0
  %v1988 = vadd.f32 %v1864, %v1987
  %v1989 = vpop.f32.mrb[0].mxu0
  %1990 = vmatprep.mubr.bf16.mxu0 0
  %1991 = vmatmul.mubr.bf16.gmra.mrb[0].mxu0 %v1927
  %v1992 = vpop.f32.mrb[0].mxu0
  %v1993 = vadd.f32 %v1869, %v1992
  %v1994 = vpop.f32.mrb[0].mxu0
  %v1995 = vpop.f32.mrb[0].mxu0
  %v1996 = vadd.f32 %v1872, %v1995
  %v1997 = vpop.f32.mrb[0].mxu0
  %1998 = vmatprep.mubr.bf16.mxu0 0
  %1999 = vmatmul.mubr.bf16.gmra.mrb[0].mxu0 %v1930
  %v2000 = vpop.f32.mrb[0].mxu0
  %v2001 = vadd.f32 %v1877, %v2000
  %v2002 = vpop.f32.mrb[0].mxu0
  %v2003 = vpop.f32.mrb[0].mxu0
  %v2004 = vadd.f32 %v1880, %v2003
  %v2005 = vpop.f32.mrb[0].mxu0
  %2006 = vmatprep.mubr.bf16.mxu0 0
  %2007 = vmatmul.mubr.bf16.gmra.mrb[0].mxu0 %v1933
  %v2008 = vpop.f32.mrb[0].mxu0
  %v2009 = vadd.f32 %v1885, %v2008
  %v2010 = vpop.f32.mrb[0].mxu0
  %v2011 = vpop.f32.mrb[0].mxu0
  %v2012 = vadd.f32 %v1888, %v2011
  %v2013 = vpop.f32.mrb[0].mxu0
  %2014 = vmatprep.mubr.bf16.mxu0 0
  %2015 = vmatmul.mubr.bf16.gmra.mrb[0].mxu0 %v1936
  %v2016 = vpop.f32.mrb[0].mxu0
  %v2017 = vadd.f32 %v1893, %v2016
  %v2018 = vpop.f32.mrb[0].mxu0
  %v2019 = vpop.f32.mrb[0].mxu0
  %v2020 = vadd.f32 %v1896, %v2019
  %v2021 = vpop.f32.mrb[0].mxu0
  %2022 = vmatprep.mubr.bf16.mxu0 0
  %2023 = vmatmul.mubr.bf16.gmra.mrb[0].mxu0 %v1939
  %v2024 = vpop.f32.mrb[0].mxu0
  %v2025 = vadd.f32 %v1901, %v2024
  %v2026 = vpop.f32.mrb[0].mxu0
  %v2027 = vpop.f32.mrb[0].mxu0
  %v2028 = vadd.f32 %v1904, %v2027
  %v2029 = vpop.f32.mrb[0].mxu0
  %2030 = vmatprep.mubr.bf16.mxu0 0
  %2031 = vmatmul.mubr.bf16.gmra.mrb[0].mxu0 %v1942
  %v2032 = vpop.f32.mrb[0].mxu0
  %v2033 = vadd.f32 %v1909, %v2032
  %v2034 = vpop.f32.mrb[0].mxu0
  %v2035 = vpop.f32.mrb[0].mxu0
  %v2036 = vadd.f32 %v1912, %v2035
  %v2037 = vpop.f32.mrb[0].mxu0
  %2038 = vmatprep.mubr.bf16.mxu0 0
  %2039 = vmatmul.mubr.bf16.gmra.mrb[0].mxu0 %v1945
  %v2040 = vpop.f32.mrb[0].mxu0
  %v2041 = vadd.f32 %v1917, %v2040
  %v2042 = vpop.f32.mrb[0].mxu0
  %v2043 = vpop.f32.mrb[0].mxu0
  %v2044 = vadd.f32 %v1920, %v2043
  %v2045 = vpop.f32.mrb[0].mxu0
  %2046 = vdwg.mxu0
  %v2047 = vld [vmem:[#allocation2 + $0x2] sm:$0xff]
  %v2048 = vld [vmem:[#allocation2 + $0x12] sm:$0xff]
  %v2049 = vld [vmem:[#allocation2 + $0x22] sm:$0xff]
  %v2050 = vld [vmem:[#allocation2 + $0x32] sm:$0xff]
  %v2051 = vld [vmem:[#allocation2 + $0x42] sm:$0xff]
  %v2052 = vld [vmem:[#allocation2 + $0x52] sm:$0xff]
  %v2053 = vld [vmem:[#allocation2 + $0x62] sm:$0xff]
  %v2054 = vld [vmem:[#allocation2 + $0x72] sm:$0xff]
  %v2055 = vld [vmem:[#allocation2 + $0xa2] sm:$0xff]
  %v2056 = vld [vmem:[#allocation2 + $0xb2] sm:$0xff]
  %v2057 = vld [vmem:[#allocation2 + $0xc2] sm:$0xff]
  %v2058 = vld [vmem:[#allocation2 + $0xd2] sm:$0xff]
  %v2059 = vld [vmem:[#allocation2 + $0xe2] sm:$0xff]
  %v2060 = vld [vmem:[#allocation2 + $0xf2] sm:$0xff]
  %v2061 = vld [vmem:[#allocation2 + $0x102] sm:$0xff]
  %v2062 = vld [vmem:[#allocation2 + $0x112] sm:$0xff]
  %v2063 = vpack.c.bf16 %v2048, %v2047
  %v2064 = vpack.c.bf16 %v2050, %v2049
  %v2065 = vpack.c.bf16 %v2052, %v2051
  %v2066 = vpack.c.bf16 %v2054, %v2053
  %v2067 = vpack.c.bf16 %v2056, %v2055
  %v2068 = vpack.c.bf16 %v2058, %v2057
  %v2069 = vpack.c.bf16 %v2060, %v2059
  %v2070 = vpack.c.bf16 %v2062, %v2061
  %s2071 = scalar_lea.vmem %s2, 8
  %v2072 = vld [vmem:[%s2071] sm:$0xf]
  %v2074 = vsel %vm1500, %v2063, 0
  %v2077 = vsel %vm1500, %v2064, 0
  %v2080 = vsel %vm1500, %v2065, 0
  %v2083 = vsel %vm1500, %v2066, 0
  %v2086 = vsel %vm1500, %v2067, 0
  %v2089 = vsel %vm1500, %v2068, 0
  %v2092 = vsel %vm1500, %v2069, 0
  %v2095 = vsel %vm1500, %v2070, 0
  %v2098 = vsel %vm1822, %v2072, 0
  %2100 = vmatprep.subr.bf16.mxu0 0
  %2101 = vmatpush1.bf16.msra.mxu0 %v2098
  %2102 = vmatprep.subr.bf16.mxu0 0
  %2103 = vmatpush1.bf16.msra.mxu0 0
  %2104 = vmatprep.subr.bf16.mxu0 0
  %2105 = vmatpush1.bf16.msra.mxu0 0
  %2106 = vmatprep.subr.bf16.mxu0 0
  %2107 = vmatpush1.bf16.msra.mxu0 0
  %2108 = vmatprep.subr.bf16.mxu0 0
  %2109 = vmatpush1.bf16.msra.mxu0 0
  %2110 = vmatprep.subr.bf16.mxu0 0
  %2111 = vmatpush1.bf16.msra.mxu0 0
  %2112 = vmatprep.subr.bf16.mxu0 0
  %2113 = vmatpush1.bf16.msra.mxu0 0
  %2114 = vmatprep.subr.bf16.mxu0 0
  %2115 = vmatpush1.bf16.msra.mxu0 0
  %2116 = vmatprep.subr.bf16.mxu0 0
  %2117 = vmatpush1.bf16.msra.mxu0 0
  %2118 = vmatprep.subr.bf16.mxu0 0
  %2119 = vmatpush1.bf16.msra.mxu0 0
  %2120 = vmatprep.subr.bf16.mxu0 0
  %2121 = vmatpush1.bf16.msra.mxu0 0
  %2122 = vmatprep.subr.bf16.mxu0 0
  %2123 = vmatpush1.bf16.msra.mxu0 0
  %2124 = vmatprep.subr.bf16.mxu0 0
  %2125 = vmatpush1.bf16.msra.mxu0 0
  %2126 = vmatprep.subr.bf16.mxu0 0
  %2127 = vmatpush1.bf16.msra.mxu0 0
  %2128 = vmatprep.subr.bf16.mxu0 0
  %2129 = vmatpush1.bf16.msra.mxu0 0
  %2130 = vmatprep.subr.bf16.mxu0 0
  %2131 = vmatpush1.bf16.msra.mxu0 0
  %2132 = vmatprep.mubr.bf16.mxu0 0
  %2133 = vmatmul.mubr.bf16.gmra.mrb[0].mxu0 %v2074
  %v2134 = vpop.f32.mrb[0].mxu0
  %v2135 = vadd.f32 0.0, %v2134
  %v2136 = vpop.f32.mrb[0].mxu0
  %v2137 = vpop.f32.mrb[0].mxu0
  %v2138 = vadd.f32 0.0, %v2137
  %v2139 = vpop.f32.mrb[0].mxu0
  %2140 = vmatprep.mubr.bf16.mxu0 0
  %2141 = vmatmul.mubr.bf16.gmra.mrb[0].mxu0 %v2077
  %v2142 = vpop.f32.mrb[0].mxu0
  %v2143 = vadd.f32 0.0, %v2142
  %v2144 = vpop.f32.mrb[0].mxu0
  %v2145 = vpop.f32.mrb[0].mxu0
  %v2146 = vadd.f32 0.0, %v2145
  %v2147 = vpop.f32.mrb[0].mxu0
  %2148 = vmatprep.mubr.bf16.mxu0 0
  %2149 = vmatmul.mubr.bf16.gmra.mrb[0].mxu0 %v2080
  %v2150 = vpop.f32.mrb[0].mxu0
  %v2151 = vadd.f32 0.0, %v2150
  %v2152 = vpop.f32.mrb[0].mxu0
  %v2153 = vpop.f32.mrb[0].mxu0
  %v2154 = vadd.f32 0.0, %v2153
  %v2155 = vpop.f32.mrb[0].mxu0
  %2156 = vmatprep.mubr.bf16.mxu0 0
  %2157 = vmatmul.mubr.bf16.gmra.mrb[0].mxu0 %v2083
  %v2158 = vpop.f32.mrb[0].mxu0
  %v2159 = vadd.f32 0.0, %v2158
  %v2160 = vpop.f32.mrb[0].mxu0
  %v2161 = vpop.f32.mrb[0].mxu0
  %v2162 = vadd.f32 0.0, %v2161
  %v2163 = vpop.f32.mrb[0].mxu0
  %2164 = vmatprep.mubr.bf16.mxu0 0
  %2165 = vmatmul.mubr.bf16.gmra.mrb[0].mxu0 %v2086
  %v2166 = vpop.f32.mrb[0].mxu0
  %v2167 = vadd.f32 0.0, %v2166
  %v2168 = vpop.f32.mrb[0].mxu0
  %v2169 = vpop.f32.mrb[0].mxu0
  %v2170 = vadd.f32 0.0, %v2169
  %v2171 = vpop.f32.mrb[0].mxu0
  %2172 = vmatprep.mubr.bf16.mxu0 0
  %2173 = vmatmul.mubr.bf16.gmra.mrb[0].mxu0 %v2089
  %v2174 = vpop.f32.mrb[0].mxu0
  %v2175 = vadd.f32 0.0, %v2174
  %v2176 = vpop.f32.mrb[0].mxu0
  %v2177 = vpop.f32.mrb[0].mxu0
  %v2178 = vadd.f32 0.0, %v2177
  %v2179 = vpop.f32.mrb[0].mxu0
  %2180 = vmatprep.mubr.bf16.mxu0 0
  %2181 = vmatmul.mubr.bf16.gmra.mrb[0].mxu0 %v2092
  %v2182 = vpop.f32.mrb[0].mxu0
  %v2183 = vadd.f32 0.0, %v2182
  %v2184 = vpop.f32.mrb[0].mxu0
  %v2185 = vpop.f32.mrb[0].mxu0
  %v2186 = vadd.f32 0.0, %v2185
  %v2187 = vpop.f32.mrb[0].mxu0
  %2188 = vmatprep.mubr.bf16.mxu0 0
  %2189 = vmatmul.mubr.bf16.gmra.mrb[0].mxu0 %v2095
  %v2190 = vpop.f32.mrb[0].mxu0
  %v2191 = vadd.f32 0.0, %v2190
  %v2192 = vpop.f32.mrb[0].mxu0
  %v2193 = vpop.f32.mrb[0].mxu0
  %v2194 = vadd.f32 0.0, %v2193
  %v2195 = vpop.f32.mrb[0].mxu0
  %2196 = vdwg.mxu0
  %v2197 = vadd.f32 %v1985, %v2135
  %v2198 = vadd.f32 %v1988, %v2138
  %v2199 = vadd.f32 %v1993, %v2143
  %v2200 = vadd.f32 %v1996, %v2146
  %v2201 = vadd.f32 %v2001, %v2151
  %v2202 = vadd.f32 %v2004, %v2154
  %v2203 = vadd.f32 %v2009, %v2159
  %v2204 = vadd.f32 %v2012, %v2162
  %v2205 = vadd.f32 %v2017, %v2167
  %v2206 = vadd.f32 %v2020, %v2170
  %v2207 = vadd.f32 %v2025, %v2175
  %v2208 = vadd.f32 %v2028, %v2178
  %v2209 = vadd.f32 %v2033, %v2183
  %v2210 = vadd.f32 %v2036, %v2186
  %v2211 = vadd.f32 %v2041, %v2191
  %v2212 = vadd.f32 %v2044, %v2194
  %v2213 = vld [vmem:[%s1730] sm:$0xff]
  %v2214 = vld [vmem:[%s1730 + $0x10] sm:$0xff]
  %v2215 = vld [vmem:[%s1730 + $0x20] sm:$0xff]
  %v2216 = vld [vmem:[%s1730 + $0x30] sm:$0xff]
  %v2217 = vld [vmem:[%s1730 + $0x40] sm:$0xff]
  %v2218 = vld [vmem:[%s1730 + $0x50] sm:$0xff]
  %v2219 = vld [vmem:[%s1730 + $0x60] sm:$0xff]
  %v2220 = vld [vmem:[%s1730 + $0x70] sm:$0xff]
  %v2221 = vld [vmem:[%s1730 + $0xa0] sm:$0xff]
  %v2222 = vld [vmem:[%s1730 + $0xb0] sm:$0xff]
  %v2223 = vld [vmem:[%s1730 + $0xc0] sm:$0xff]
  %v2224 = vld [vmem:[%s1730 + $0xd0] sm:$0xff]
  %v2225 = vld [vmem:[%s1730 + $0xe0] sm:$0xff]
  %v2226 = vld [vmem:[%s1730 + $0xf0] sm:$0xff]
  %v2227 = vld [vmem:[%s1730 + $0x100] sm:$0xff]
  %v2228 = vld [vmem:[%s1730 + $0x110] sm:$0xff]
  %v2229 = vpack.c.bf16 %v2214, %v2213
  %v2230 = vpack.c.bf16 %v2216, %v2215
  %v2231 = vpack.c.bf16 %v2218, %v2217
  %v2232 = vpack.c.bf16 %v2220, %v2219
  %v2233 = vpack.c.bf16 %v2222, %v2221
  %v2234 = vpack.c.bf16 %v2224, %v2223
  %v2235 = vpack.c.bf16 %v2226, %v2225
  %v2236 = vpack.c.bf16 %v2228, %v2227
  %s2237 = scalar_lea.vmem %s2, 12
  %v2238 = vld [vmem:[%s2237] sm:$0xf]
  %v2240 = vsel %vm1500, %v2229, 0
  %v2243 = vsel %vm1500, %v2230, 0
  %v2246 = vsel %vm1500, %v2231, 0
  %v2249 = vsel %vm1500, %v2232, 0
  %v2252 = vsel %vm1500, %v2233, 0
  %v2255 = vsel %vm1500, %v2234, 0
  %v2258 = vsel %vm1500, %v2235, 0
  %v2261 = vsel %vm1500, %v2236, 0
  %v2264 = vsel %vm1822, %v2238, 0
  %2266 = vmatprep.subr.bf16.mxu0 0
  %2267 = vmatpush1.bf16.msra.mxu0 %v2264
  %2268 = vmatprep.subr.bf16.mxu0 0
  %2269 = vmatpush1.bf16.msra.mxu0 0
  %2270 = vmatprep.subr.bf16.mxu0 0
  %2271 = vmatpush1.bf16.msra.mxu0 0
  %2272 = vmatprep.subr.bf16.mxu0 0
  %2273 = vmatpush1.bf16.msra.mxu0 0
  %2274 = vmatprep.subr.bf16.mxu0 0
  %2275 = vmatpush1.bf16.msra.mxu0 0
  %2276 = vmatprep.subr.bf16.mxu0 0
  %2277 = vmatpush1.bf16.msra.mxu0 0
  %2278 = vmatprep.subr.bf16.mxu0 0
  %2279 = vmatpush1.bf16.msra.mxu0 0
  %2280 = vmatprep.subr.bf16.mxu0 0
  %2281 = vmatpush1.bf16.msra.mxu0 0
  %2282 = vmatprep.subr.bf16.mxu0 0
  %2283 = vmatpush1.bf16.msra.mxu0 0
  %2284 = vmatprep.subr.bf16.mxu0 0
  %2285 = vmatpush1.bf16.msra.mxu0 0
  %2286 = vmatprep.subr.bf16.mxu0 0
  %2287 = vmatpush1.bf16.msra.mxu0 0
  %2288 = vmatprep.subr.bf16.mxu0 0
  %2289 = vmatpush1.bf16.msra.mxu0 0
  %2290 = vmatprep.subr.bf16.mxu0 0
  %2291 = vmatpush1.bf16.msra.mxu0 0
  %2292 = vmatprep.subr.bf16.mxu0 0
  %2293 = vmatpush1.bf16.msra.mxu0 0
  %2294 = vmatprep.subr.bf16.mxu0 0
  %2295 = vmatpush1.bf16.msra.mxu0 0
  %2296 = vmatprep.subr.bf16.mxu0 0
  %2297 = vmatpush1.bf16.msra.mxu0 0
  %2298 = vmatprep.mubr.bf16.mxu0 0
  %2299 = vmatmul.mubr.bf16.gmra.mrb[0].mxu0 %v2240
  %v2300 = vpop.f32.mrb[0].mxu0
  %v2301 = vadd.f32 0.0, %v2300
  %v2302 = vpop.f32.mrb[0].mxu0
  %v2303 = vpop.f32.mrb[0].mxu0
  %v2304 = vadd.f32 0.0, %v2303
  %v2305 = vpop.f32.mrb[0].mxu0
  %2306 = vmatprep.mubr.bf16.mxu0 0
  %2307 = vmatmul.mubr.bf16.gmra.mrb[0].mxu0 %v2243
  %v2308 = vpop.f32.mrb[0].mxu0
  %v2309 = vadd.f32 0.0, %v2308
  %v2310 = vpop.f32.mrb[0].mxu0
  %v2311 = vpop.f32.mrb[0].mxu0
  %v2312 = vadd.f32 0.0, %v2311
  %v2313 = vpop.f32.mrb[0].mxu0
  %2314 = vmatprep.mubr.bf16.mxu0 0
  %2315 = vmatmul.mubr.bf16.gmra.mrb[0].mxu0 %v2246
  %v2316 = vpop.f32.mrb[0].mxu0
  %v2317 = vadd.f32 0.0, %v2316
  %v2318 = vpop.f32.mrb[0].mxu0
  %v2319 = vpop.f32.mrb[0].mxu0
  %v2320 = vadd.f32 0.0, %v2319
  %v2321 = vpop.f32.mrb[0].mxu0
  %2322 = vmatprep.mubr.bf16.mxu0 0
  %2323 = vmatmul.mubr.bf16.gmra.mrb[0].mxu0 %v2249
  %v2324 = vpop.f32.mrb[0].mxu0
  %v2325 = vadd.f32 0.0, %v2324
  %v2326 = vpop.f32.mrb[0].mxu0
  %v2327 = vpop.f32.mrb[0].mxu0
  %v2328 = vadd.f32 0.0, %v2327
  %v2329 = vpop.f32.mrb[0].mxu0
  %2330 = vmatprep.mubr.bf16.mxu0 0
  %2331 = vmatmul.mubr.bf16.gmra.mrb[0].mxu0 %v2252
  %v2332 = vpop.f32.mrb[0].mxu0
  %v2333 = vadd.f32 0.0, %v2332
  %v2334 = vpop.f32.mrb[0].mxu0
  %v2335 = vpop.f32.mrb[0].mxu0
  %v2336 = vadd.f32 0.0, %v2335
  %v2337 = vpop.f32.mrb[0].mxu0
  %2338 = vmatprep.mubr.bf16.mxu0 0
  %2339 = vmatmul.mubr.bf16.gmra.mrb[0].mxu0 %v2255
  %v2340 = vpop.f32.mrb[0].mxu0
  %v2341 = vadd.f32 0.0, %v2340
  %v2342 = vpop.f32.mrb[0].mxu0
  %v2343 = vpop.f32.mrb[0].mxu0
  %v2344 = vadd.f32 0.0, %v2343
  %v2345 = vpop.f32.mrb[0].mxu0
  %2346 = vmatprep.mubr.bf16.mxu0 0
  %2347 = vmatmul.mubr.bf16.gmra.mrb[0].mxu0 %v2258
  %v2348 = vpop.f32.mrb[0].mxu0
  %v2349 = vadd.f32 0.0, %v2348
  %v2350 = vpop.f32.mrb[0].mxu0
  %v2351 = vpop.f32.mrb[0].mxu0
  %v2352 = vadd.f32 0.0, %v2351
  %v2353 = vpop.f32.mrb[0].mxu0
  %2354 = vmatprep.mubr.bf16.mxu0 0
  %2355 = vmatmul.mubr.bf16.gmra.mrb[0].mxu0 %v2261
  %v2356 = vpop.f32.mrb[0].mxu0
  %v2357 = vadd.f32 0.0, %v2356
  %v2358 = vpop.f32.mrb[0].mxu0
  %v2359 = vpop.f32.mrb[0].mxu0
  %v2360 = vadd.f32 0.0, %v2359
  %v2361 = vpop.f32.mrb[0].mxu0
  %2362 = vdwg.mxu0
  %v2363 = vadd.f32 %v2197, %v2301
  %v2364 = vadd.f32 %v2198, %v2304
  %v2365 = vadd.f32 %v2199, %v2309
  %v2366 = vadd.f32 %v2200, %v2312
  %v2367 = vadd.f32 %v2201, %v2317
  %v2368 = vadd.f32 %v2202, %v2320
  %v2369 = vadd.f32 %v2203, %v2325
  %v2370 = vadd.f32 %v2204, %v2328
  %v2371 = vadd.f32 %v2205, %v2333
  %v2372 = vadd.f32 %v2206, %v2336
  %v2373 = vadd.f32 %v2207, %v2341
  %v2374 = vadd.f32 %v2208, %v2344
  %v2375 = vadd.f32 %v2209, %v2349
  %v2376 = vadd.f32 %v2210, %v2352
  %v2377 = vadd.f32 %v2211, %v2357
  %v2378 = vadd.f32 %v2212, %v2360
  %v2379 = vld [vmem:[%s1730 + $0x1] sm:$0xff]
  %v2380 = vld [vmem:[%s1730 + $0x11] sm:$0xff]
  %v2381 = vld [vmem:[%s1730 + $0x21] sm:$0xff]
  %v2382 = vld [vmem:[%s1730 + $0x31] sm:$0xff]
  %v2383 = vld [vmem:[%s1730 + $0x41] sm:$0xff]
  %v2384 = vld [vmem:[%s1730 + $0x51] sm:$0xff]
  %v2385 = vld [vmem:[%s1730 + $0x61] sm:$0xff]
  %v2386 = vld [vmem:[%s1730 + $0x71] sm:$0xff]
  %v2387 = vld [vmem:[%s1730 + $0xa1] sm:$0xff]
  %v2388 = vld [vmem:[%s1730 + $0xb1] sm:$0xff]
  %v2389 = vld [vmem:[%s1730 + $0xc1] sm:$0xff]
  %v2390 = vld [vmem:[%s1730 + $0xd1] sm:$0xff]
  %v2391 = vld [vmem:[%s1730 + $0xe1] sm:$0xff]
  %v2392 = vld [vmem:[%s1730 + $0xf1] sm:$0xff]
  %v2393 = vld [vmem:[%s1730 + $0x101] sm:$0xff]
  %v2394 = vld [vmem:[%s1730 + $0x111] sm:$0xff]
  %v2395 = vpack.c.bf16 %v2380, %v2379
  %v2396 = vpack.c.bf16 %v2382, %v2381
  %v2397 = vpack.c.bf16 %v2384, %v2383
  %v2398 = vpack.c.bf16 %v2386, %v2385
  %v2399 = vpack.c.bf16 %v2388, %v2387
  %v2400 = vpack.c.bf16 %v2390, %v2389
  %v2401 = vpack.c.bf16 %v2392, %v2391
  %v2402 = vpack.c.bf16 %v2394, %v2393
  %s2403 = scalar_lea.vmem %s2, 16
  %v2404 = vld [vmem:[%s2403] sm:$0xf]
  %v2406 = vsel %vm1500, %v2395, 0
  %v2409 = vsel %vm1500, %v2396, 0
  %v2412 = vsel %vm1500, %v2397, 0
  %v2415 = vsel %vm1500, %v2398, 0
  %v2418 = vsel %vm1500, %v2399, 0
  %v2421 = vsel %vm1500, %v2400, 0
  %v2424 = vsel %vm1500, %v2401, 0
  %v2427 = vsel %vm1500, %v2402, 0
  %v2430 = vsel %vm1822, %v2404, 0
  %2432 = vmatprep.subr.bf16.mxu0 0
  %2433 = vmatpush1.bf16.msra.mxu0 %v2430
  %2434 = vmatprep.subr.bf16.mxu0 0
  %2435 = vmatpush1.bf16.msra.mxu0 0
  %2436 = vmatprep.subr.bf16.mxu0 0
  %2437 = vmatpush1.bf16.msra.mxu0 0
  %2438 = vmatprep.subr.bf16.mxu0 0
  %2439 = vmatpush1.bf16.msra.mxu0 0
  %2440 = vmatprep.subr.bf16.mxu0 0
  %2441 = vmatpush1.bf16.msra.mxu0 0
  %2442 = vmatprep.subr.bf16.mxu0 0
  %2443 = vmatpush1.bf16.msra.mxu0 0
  %2444 = vmatprep.subr.bf16.mxu0 0
  %2445 = vmatpush1.bf16.msra.mxu0 0
  %2446 = vmatprep.subr.bf16.mxu0 0
  %2447 = vmatpush1.bf16.msra.mxu0 0
  %2448 = vmatprep.subr.bf16.mxu0 0
  %2449 = vmatpush1.bf16.msra.mxu0 0
  %2450 = vmatprep.subr.bf16.mxu0 0
  %2451 = vmatpush1.bf16.msra.mxu0 0
  %2452 = vmatprep.subr.bf16.mxu0 0
  %2453 = vmatpush1.bf16.msra.mxu0 0
  %2454 = vmatprep.subr.bf16.mxu0 0
  %2455 = vmatpush1.bf16.msra.mxu0 0
  %2456 = vmatprep.subr.bf16.mxu0 0
  %2457 = vmatpush1.bf16.msra.mxu0 0
  %2458 = vmatprep.subr.bf16.mxu0 0
  %2459 = vmatpush1.bf16.msra.mxu0 0
  %2460 = vmatprep.subr.bf16.mxu0 0
  %2461 = vmatpush1.bf16.msra.mxu0 0
  %2462 = vmatprep.subr.bf16.mxu0 0
  %2463 = vmatpush1.bf16.msra.mxu0 0
  %2464 = vmatprep.mubr.bf16.mxu0 0
  %2465 = vmatmul.mubr.bf16.gmra.mrb[0].mxu0 %v2406
  %v2466 = vpop.f32.mrb[0].mxu0
  %v2467 = vadd.f32 0.0, %v2466
  %v2468 = vpop.f32.mrb[0].mxu0
  %v2469 = vpop.f32.mrb[0].mxu0
  %v2470 = vadd.f32 0.0, %v2469
  %v2471 = vpop.f32.mrb[0].mxu0
  %2472 = vmatprep.mubr.bf16.mxu0 0
  %2473 = vmatmul.mubr.bf16.gmra.mrb[0].mxu0 %v2409
  %v2474 = vpop.f32.mrb[0].mxu0
  %v2475 = vadd.f32 0.0, %v2474
  %v2476 = vpop.f32.mrb[0].mxu0
  %v2477 = vpop.f32.mrb[0].mxu0
  %v2478 = vadd.f32 0.0, %v2477
  %v2479 = vpop.f32.mrb[0].mxu0
  %2480 = vmatprep.mubr.bf16.mxu0 0
  %2481 = vmatmul.mubr.bf16.gmra.mrb[0].mxu0 %v2412
  %v2482 = vpop.f32.mrb[0].mxu0
  %v2483 = vadd.f32 0.0, %v2482
  %v2484 = vpop.f32.mrb[0].mxu0
  %v2485 = vpop.f32.mrb[0].mxu0
  %v2486 = vadd.f32 0.0, %v2485
  %v2487 = vpop.f32.mrb[0].mxu0
  %2488 = vmatprep.mubr.bf16.mxu0 0
  %2489 = vmatmul.mubr.bf16.gmra.mrb[0].mxu0 %v2415
  %v2490 = vpop.f32.mrb[0].mxu0
  %v2491 = vadd.f32 0.0, %v2490
  %v2492 = vpop.f32.mrb[0].mxu0
  %v2493 = vpop.f32.mrb[0].mxu0
  %v2494 = vadd.f32 0.0, %v2493
  %v2495 = vpop.f32.mrb[0].mxu0
  %2496 = vmatprep.mubr.bf16.mxu0 0
  %2497 = vmatmul.mubr.bf16.gmra.mrb[0].mxu0 %v2418
  %v2498 = vpop.f32.mrb[0].mxu0
  %v2499 = vadd.f32 0.0, %v2498
  %v2500 = vpop.f32.mrb[0].mxu0
  %v2501 = vpop.f32.mrb[0].mxu0
  %v2502 = vadd.f32 0.0, %v2501
  %v2503 = vpop.f32.mrb[0].mxu0
  %2504 = vmatprep.mubr.bf16.mxu0 0
  %2505 = vmatmul.mubr.bf16.gmra.mrb[0].mxu0 %v2421
  %v2506 = vpop.f32.mrb[0].mxu0
  %v2507 = vadd.f32 0.0, %v2506
  %v2508 = vpop.f32.mrb[0].mxu0
  %v2509 = vpop.f32.mrb[0].mxu0
  %v2510 = vadd.f32 0.0, %v2509
  %v2511 = vpop.f32.mrb[0].mxu0
  %2512 = vmatprep.mubr.bf16.mxu0 0
  %2513 = vmatmul.mubr.bf16.gmra.mrb[0].mxu0 %v2424
  %v2514 = vpop.f32.mrb[0].mxu0
  %v2515 = vadd.f32 0.0, %v2514
  %v2516 = vpop.f32.mrb[0].mxu0
  %v2517 = vpop.f32.mrb[0].mxu0
  %v2518 = vadd.f32 0.0, %v2517
  %v2519 = vpop.f32.mrb[0].mxu0
  %2520 = vmatprep.mubr.bf16.mxu0 0
  %2521 = vmatmul.mubr.bf16.gmra.mrb[0].mxu0 %v2427
  %v2522 = vpop.f32.mrb[0].mxu0
  %v2523 = vadd.f32 0.0, %v2522
  %v2524 = vpop.f32.mrb[0].mxu0
  %v2525 = vpop.f32.mrb[0].mxu0
  %v2526 = vadd.f32 0.0, %v2525
  %v2527 = vpop.f32.mrb[0].mxu0
  %2528 = vdwg.mxu0
  %v2529 = vadd.f32 %v2363, %v2467
  %v2530 = vadd.f32 %v2364, %v2470
  %v2531 = vadd.f32 %v2365, %v2475
  %v2532 = vadd.f32 %v2366, %v2478
  %v2533 = vadd.f32 %v2367, %v2483
  %v2534 = vadd.f32 %v2368, %v2486
  %v2535 = vadd.f32 %v2369, %v2491
  %v2536 = vadd.f32 %v2370, %v2494
  %v2537 = vadd.f32 %v2371, %v2499
  %v2538 = vadd.f32 %v2372, %v2502
  %v2539 = vadd.f32 %v2373, %v2507
  %v2540 = vadd.f32 %v2374, %v2510
  %v2541 = vadd.f32 %v2375, %v2515
  %v2542 = vadd.f32 %v2376, %v2518
  %v2543 = vadd.f32 %v2377, %v2523
  %v2544 = vadd.f32 %v2378, %v2526
  %v2545 = vld [vmem:[%s1730 + $0x2] sm:$0xff]
  %v2546 = vld [vmem:[%s1730 + $0x12] sm:$0xff]
  %v2547 = vld [vmem:[%s1730 + $0x22] sm:$0xff]
  %v2548 = vld [vmem:[%s1730 + $0x32] sm:$0xff]
  %v2549 = vld [vmem:[%s1730 + $0x42] sm:$0xff]
  %v2550 = vld [vmem:[%s1730 + $0x52] sm:$0xff]
  %v2551 = vld [vmem:[%s1730 + $0x62] sm:$0xff]
  %v2552 = vld [vmem:[%s1730 + $0x72] sm:$0xff]
  %v2553 = vld [vmem:[%s1730 + $0xa2] sm:$0xff]
  %v2554 = vld [vmem:[%s1730 + $0xb2] sm:$0xff]
  %v2555 = vld [vmem:[%s1730 + $0xc2] sm:$0xff]
  %v2556 = vld [vmem:[%s1730 + $0xd2] sm:$0xff]
  %v2557 = vld [vmem:[%s1730 + $0xe2] sm:$0xff]
  %v2558 = vld [vmem:[%s1730 + $0xf2] sm:$0xff]
  %v2559 = vld [vmem:[%s1730 + $0x102] sm:$0xff]
  %v2560 = vld [vmem:[%s1730 + $0x112] sm:$0xff]
  %v2561 = vpack.c.bf16 %v2546, %v2545
  %v2562 = vpack.c.bf16 %v2548, %v2547
  %v2563 = vpack.c.bf16 %v2550, %v2549
  %v2564 = vpack.c.bf16 %v2552, %v2551
  %v2565 = vpack.c.bf16 %v2554, %v2553
  %v2566 = vpack.c.bf16 %v2556, %v2555
  %v2567 = vpack.c.bf16 %v2558, %v2557
  %v2568 = vpack.c.bf16 %v2560, %v2559
  %s2569 = scalar_lea.vmem %s2, 20
  %v2570 = vld [vmem:[%s2569] sm:$0xf]
  %v2572 = vsel %vm1500, %v2561, 0
  %v2575 = vsel %vm1500, %v2562, 0
  %v2578 = vsel %vm1500, %v2563, 0
  %v2581 = vsel %vm1500, %v2564, 0
  %v2584 = vsel %vm1500, %v2565, 0
  %v2587 = vsel %vm1500, %v2566, 0
  %v2590 = vsel %vm1500, %v2567, 0
  %v2593 = vsel %vm1500, %v2568, 0
  %v2596 = vsel %vm1822, %v2570, 0
  %2598 = vmatprep.subr.bf16.mxu0 0
  %2599 = vmatpush1.bf16.msra.mxu0 %v2596
  %2600 = vmatprep.subr.bf16.mxu0 0
  %2601 = vmatpush1.bf16.msra.mxu0 0
  %2602 = vmatprep.subr.bf16.mxu0 0
  %2603 = vmatpush1.bf16.msra.mxu0 0
  %2604 = vmatprep.subr.bf16.mxu0 0
  %2605 = vmatpush1.bf16.msra.mxu0 0
  %2606 = vmatprep.subr.bf16.mxu0 0
  %2607 = vmatpush1.bf16.msra.mxu0 0
  %2608 = vmatprep.subr.bf16.mxu0 0
  %2609 = vmatpush1.bf16.msra.mxu0 0
  %2610 = vmatprep.subr.bf16.mxu0 0
  %2611 = vmatpush1.bf16.msra.mxu0 0
  %2612 = vmatprep.subr.bf16.mxu0 0
  %2613 = vmatpush1.bf16.msra.mxu0 0
  %2614 = vmatprep.subr.bf16.mxu0 0
  %2615 = vmatpush1.bf16.msra.mxu0 0
  %2616 = vmatprep.subr.bf16.mxu0 0
  %2617 = vmatpush1.bf16.msra.mxu0 0
  %2618 = vmatprep.subr.bf16.mxu0 0
  %2619 = vmatpush1.bf16.msra.mxu0 0
  %2620 = vmatprep.subr.bf16.mxu0 0
  %2621 = vmatpush1.bf16.msra.mxu0 0
  %2622 = vmatprep.subr.bf16.mxu0 0
  %2623 = vmatpush1.bf16.msra.mxu0 0
  %2624 = vmatprep.subr.bf16.mxu0 0
  %2625 = vmatpush1.bf16.msra.mxu0 0
  %2626 = vmatprep.subr.bf16.mxu0 0
  %2627 = vmatpush1.bf16.msra.mxu0 0
  %2628 = vmatprep.subr.bf16.mxu0 0
  %2629 = vmatpush1.bf16.msra.mxu0 0
  %2630 = vmatprep.mubr.bf16.mxu0 0
  %2631 = vmatmul.mubr.bf16.gmra.mrb[0].mxu0 %v2572
  %v2632 = vpop.f32.mrb[0].mxu0
  %v2633 = vadd.f32 0.0, %v2632
  %v2634 = vpop.f32.mrb[0].mxu0
  %v2635 = vpop.f32.mrb[0].mxu0
  %v2636 = vadd.f32 0.0, %v2635
  %v2637 = vpop.f32.mrb[0].mxu0
  %2638 = vmatprep.mubr.bf16.mxu0 0
  %2639 = vmatmul.mubr.bf16.gmra.mrb[0].mxu0 %v2575
  %v2640 = vpop.f32.mrb[0].mxu0
  %v2641 = vadd.f32 0.0, %v2640
  %v2642 = vpop.f32.mrb[0].mxu0
  %v2643 = vpop.f32.mrb[0].mxu0
  %v2644 = vadd.f32 0.0, %v2643
  %v2645 = vpop.f32.mrb[0].mxu0
  %2646 = vmatprep.mubr.bf16.mxu0 0
  %2647 = vmatmul.mubr.bf16.gmra.mrb[0].mxu0 %v2578
  %v2648 = vpop.f32.mrb[0].mxu0
  %v2649 = vadd.f32 0.0, %v2648
  %v2650 = vpop.f32.mrb[0].mxu0
  %v2651 = vpop.f32.mrb[0].mxu0
  %v2652 = vadd.f32 0.0, %v2651
  %v2653 = vpop.f32.mrb[0].mxu0
  %2654 = vmatprep.mubr.bf16.mxu0 0
  %2655 = vmatmul.mubr.bf16.gmra.mrb[0].mxu0 %v2581
  %v2656 = vpop.f32.mrb[0].mxu0
  %v2657 = vadd.f32 0.0, %v2656
  %v2658 = vpop.f32.mrb[0].mxu0
  %v2659 = vpop.f32.mrb[0].mxu0
  %v2660 = vadd.f32 0.0, %v2659
  %v2661 = vpop.f32.mrb[0].mxu0
  %2662 = vmatprep.mubr.bf16.mxu0 0
  %2663 = vmatmul.mubr.bf16.gmra.mrb[0].mxu0 %v2584
  %v2664 = vpop.f32.mrb[0].mxu0
  %v2665 = vadd.f32 0.0, %v2664
  %v2666 = vpop.f32.mrb[0].mxu0
  %v2667 = vpop.f32.mrb[0].mxu0
  %v2668 = vadd.f32 0.0, %v2667
  %v2669 = vpop.f32.mrb[0].mxu0
  %2670 = vmatprep.mubr.bf16.mxu0 0
  %2671 = vmatmul.mubr.bf16.gmra.mrb[0].mxu0 %v2587
  %v2672 = vpop.f32.mrb[0].mxu0
  %v2673 = vadd.f32 0.0, %v2672
  %v2674 = vpop.f32.mrb[0].mxu0
  %v2675 = vpop.f32.mrb[0].mxu0
  %v2676 = vadd.f32 0.0, %v2675
  %v2677 = vpop.f32.mrb[0].mxu0
  %2678 = vmatprep.mubr.bf16.mxu0 0
  %2679 = vmatmul.mubr.bf16.gmra.mrb[0].mxu0 %v2590
  %v2680 = vpop.f32.mrb[0].mxu0
  %v2681 = vadd.f32 0.0, %v2680
  %v2682 = vpop.f32.mrb[0].mxu0
  %v2683 = vpop.f32.mrb[0].mxu0
  %v2684 = vadd.f32 0.0, %v2683
  %v2685 = vpop.f32.mrb[0].mxu0
  %2686 = vmatprep.mubr.bf16.mxu0 0
  %2687 = vmatmul.mubr.bf16.gmra.mrb[0].mxu0 %v2593
  %v2688 = vpop.f32.mrb[0].mxu0
  %v2689 = vadd.f32 0.0, %v2688
  %v2690 = vpop.f32.mrb[0].mxu0
  %v2691 = vpop.f32.mrb[0].mxu0
  %v2692 = vadd.f32 0.0, %v2691
  %v2693 = vpop.f32.mrb[0].mxu0
  %2694 = vdwg.mxu0
  %v2695 = vadd.f32 %v2529, %v2633
  %v2696 = vadd.f32 %v2530, %v2636
  %v2697 = vadd.f32 %v2531, %v2641
  %v2698 = vadd.f32 %v2532, %v2644
  %v2699 = vadd.f32 %v2533, %v2649
  %v2700 = vadd.f32 %v2534, %v2652
  %v2701 = vadd.f32 %v2535, %v2657
  %v2702 = vadd.f32 %v2536, %v2660
  %v2703 = vadd.f32 %v2537, %v2665
  %v2704 = vadd.f32 %v2538, %v2668
  %v2705 = vadd.f32 %v2539, %v2673
  %v2706 = vadd.f32 %v2540, %v2676
  %v2707 = vadd.f32 %v2541, %v2681
  %v2708 = vadd.f32 %v2542, %v2684
  %v2709 = vadd.f32 %v2543, %v2689
  %v2710 = vadd.f32 %v2544, %v2692
  %s2711 = scalar_lea.vmem [#allocation2], 32
  %v2712 = vld [vmem:[%s2711] sm:$0xff]
  %v2713 = vld [vmem:[%s2711 + $0x10] sm:$0xff]
  %v2714 = vld [vmem:[%s2711 + $0x20] sm:$0xff]
  %v2715 = vld [vmem:[%s2711 + $0x30] sm:$0xff]
  %v2716 = vld [vmem:[%s2711 + $0x40] sm:$0xff]
  %v2717 = vld [vmem:[%s2711 + $0x50] sm:$0xff]
  %v2718 = vld [vmem:[%s2711 + $0x60] sm:$0xff]
  %v2719 = vld [vmem:[%s2711 + $0x70] sm:$0xff]
  %v2720 = vld [vmem:[%s2711 + $0xa0] sm:$0xff]
  %v2721 = vld [vmem:[%s2711 + $0xb0] sm:$0xff]
  %v2722 = vld [vmem:[%s2711 + $0xc0] sm:$0xff]
  %v2723 = vld [vmem:[%s2711 + $0xd0] sm:$0xff]
  %v2724 = vld [vmem:[%s2711 + $0xe0] sm:$0xff]
  %v2725 = vld [vmem:[%s2711 + $0xf0] sm:$0xff]
  %v2726 = vld [vmem:[%s2711 + $0x100] sm:$0xff]
  %v2727 = vld [vmem:[%s2711 + $0x110] sm:$0xff]
  %v2728 = vpack.c.bf16 %v2713, %v2712
  %v2729 = vpack.c.bf16 %v2715, %v2714
  %v2730 = vpack.c.bf16 %v2717, %v2716
  %v2731 = vpack.c.bf16 %v2719, %v2718
  %v2732 = vpack.c.bf16 %v2721, %v2720
  %v2733 = vpack.c.bf16 %v2723, %v2722
  %v2734 = vpack.c.bf16 %v2725, %v2724
  %v2735 = vpack.c.bf16 %v2727, %v2726
  %s2736 = scalar_lea.vmem %s2, 24
  %v2737 = vld [vmem:[%s2736] sm:$0xf]
  %v2739 = vsel %vm1500, %v2728, 0
  %v2742 = vsel %vm1500, %v2729, 0
  %v2745 = vsel %vm1500, %v2730, 0
  %v2748 = vsel %vm1500, %v2731, 0
  %v2751 = vsel %vm1500, %v2732, 0
  %v2754 = vsel %vm1500, %v2733, 0
  %v2757 = vsel %vm1500, %v2734, 0
  %v2760 = vsel %vm1500, %v2735, 0
  %v2763 = vsel %vm1822, %v2737, 0
  %2765 = vmatprep.subr.bf16.mxu0 0
  %2766 = vmatpush1.bf16.msra.mxu0 %v2763
  %2767 = vmatprep.subr.bf16.mxu0 0
  %2768 = vmatpush1.bf16.msra.mxu0 0
  %2769 = vmatprep.subr.bf16.mxu0 0
  %2770 = vmatpush1.bf16.msra.mxu0 0
  %2771 = vmatprep.subr.bf16.mxu0 0
  %2772 = vmatpush1.bf16.msra.mxu0 0
  %2773 = vmatprep.subr.bf16.mxu0 0
  %2774 = vmatpush1.bf16.msra.mxu0 0
  %2775 = vmatprep.subr.bf16.mxu0 0
  %2776 = vmatpush1.bf16.msra.mxu0 0
  %2777 = vmatprep.subr.bf16.mxu0 0
  %2778 = vmatpush1.bf16.msra.mxu0 0
  %2779 = vmatprep.subr.bf16.mxu0 0
  %2780 = vmatpush1.bf16.msra.mxu0 0
  %2781 = vmatprep.subr.bf16.mxu0 0
  %2782 = vmatpush1.bf16.msra.mxu0 0
  %2783 = vmatprep.subr.bf16.mxu0 0
  %2784 = vmatpush1.bf16.msra.mxu0 0
  %2785 = vmatprep.subr.bf16.mxu0 0
  %2786 = vmatpush1.bf16.msra.mxu0 0
  %2787 = vmatprep.subr.bf16.mxu0 0
  %2788 = vmatpush1.bf16.msra.mxu0 0
  %2789 = vmatprep.subr.bf16.mxu0 0
  %2790 = vmatpush1.bf16.msra.mxu0 0
  %2791 = vmatprep.subr.bf16.mxu0 0
  %2792 = vmatpush1.bf16.msra.mxu0 0
  %2793 = vmatprep.subr.bf16.mxu0 0
  %2794 = vmatpush1.bf16.msra.mxu0 0
  %2795 = vmatprep.subr.bf16.mxu0 0
  %2796 = vmatpush1.bf16.msra.mxu0 0
  %2797 = vmatprep.mubr.bf16.mxu0 0
  %2798 = vmatmul.mubr.bf16.gmra.mrb[0].mxu0 %v2739
  %v2799 = vpop.f32.mrb[0].mxu0
  %v2800 = vadd.f32 0.0, %v2799
  %v2801 = vpop.f32.mrb[0].mxu0
  %v2802 = vpop.f32.mrb[0].mxu0
  %v2803 = vadd.f32 0.0, %v2802
  %v2804 = vpop.f32.mrb[0].mxu0
  %2805 = vmatprep.mubr.bf16.mxu0 0
  %2806 = vmatmul.mubr.bf16.gmra.mrb[0].mxu0 %v2742
  %v2807 = vpop.f32.mrb[0].mxu0
  %v2808 = vadd.f32 0.0, %v2807
  %v2809 = vpop.f32.mrb[0].mxu0
  %v2810 = vpop.f32.mrb[0].mxu0
  %v2811 = vadd.f32 0.0, %v2810
  %v2812 = vpop.f32.mrb[0].mxu0
  %2813 = vmatprep.mubr.bf16.mxu0 0
  %2814 = vmatmul.mubr.bf16.gmra.mrb[0].mxu0 %v2745
  %v2815 = vpop.f32.mrb[0].mxu0
  %v2816 = vadd.f32 0.0, %v2815
  %v2817 = vpop.f32.mrb[0].mxu0
  %v2818 = vpop.f32.mrb[0].mxu0
  %v2819 = vadd.f32 0.0, %v2818
  %v2820 = vpop.f32.mrb[0].mxu0
  %2821 = vmatprep.mubr.bf16.mxu0 0
  %2822 = vmatmul.mubr.bf16.gmra.mrb[0].mxu0 %v2748
  %v2823 = vpop.f32.mrb[0].mxu0
  %v2824 = vadd.f32 0.0, %v2823
  %v2825 = vpop.f32.mrb[0].mxu0
  %v2826 = vpop.f32.mrb[0].mxu0
  %v2827 = vadd.f32 0.0, %v2826
  %v2828 = vpop.f32.mrb[0].mxu0
  %2829 = vmatprep.mubr.bf16.mxu0 0
  %2830 = vmatmul.mubr.bf16.gmra.mrb[0].mxu0 %v2751
  %v2831 = vpop.f32.mrb[0].mxu0
  %v2832 = vadd.f32 0.0, %v2831
  %v2833 = vpop.f32.mrb[0].mxu0
  %v2834 = vpop.f32.mrb[0].mxu0
  %v2835 = vadd.f32 0.0, %v2834
  %v2836 = vpop.f32.mrb[0].mxu0
  %2837 = vmatprep.mubr.bf16.mxu0 0
  %2838 = vmatmul.mubr.bf16.gmra.mrb[0].mxu0 %v2754
  %v2839 = vpop.f32.mrb[0].mxu0
  %v2840 = vadd.f32 0.0, %v2839
  %v2841 = vpop.f32.mrb[0].mxu0
  %v2842 = vpop.f32.mrb[0].mxu0
  %v2843 = vadd.f32 0.0, %v2842
  %v2844 = vpop.f32.mrb[0].mxu0
  %2845 = vmatprep.mubr.bf16.mxu0 0
  %2846 = vmatmul.mubr.bf16.gmra.mrb[0].mxu0 %v2757
  %v2847 = vpop.f32.mrb[0].mxu0
  %v2848 = vadd.f32 0.0, %v2847
  %v2849 = vpop.f32.mrb[0].mxu0
  %v2850 = vpop.f32.mrb[0].mxu0
  %v2851 = vadd.f32 0.0, %v2850
  %v2852 = vpop.f32.mrb[0].mxu0
  %2853 = vmatprep.mubr.bf16.mxu0 0
  %2854 = vmatmul.mubr.bf16.gmra.mrb[0].mxu0 %v2760
  %v2855 = vpop.f32.mrb[0].mxu0
  %v2856 = vadd.f32 0.0, %v2855
  %v2857 = vpop.f32.mrb[0].mxu0
  %v2858 = vpop.f32.mrb[0].mxu0
  %v2859 = vadd.f32 0.0, %v2858
  %v2860 = vpop.f32.mrb[0].mxu0
  %2861 = vdwg.mxu0
  %v2862 = vadd.f32 %v2695, %v2800
  %v2863 = vadd.f32 %v2696, %v2803
  %v2864 = vadd.f32 %v2697, %v2808
  %v2865 = vadd.f32 %v2698, %v2811
  %v2866 = vadd.f32 %v2699, %v2816
  %v2867 = vadd.f32 %v2700, %v2819
  %v2868 = vadd.f32 %v2701, %v2824
  %v2869 = vadd.f32 %v2702, %v2827
  %v2870 = vadd.f32 %v2703, %v2832
  %v2871 = vadd.f32 %v2704, %v2835
  %v2872 = vadd.f32 %v2705, %v2840
  %v2873 = vadd.f32 %v2706, %v2843
  %v2874 = vadd.f32 %v2707, %v2848
  %v2875 = vadd.f32 %v2708, %v2851
  %v2876 = vadd.f32 %v2709, %v2856
  %v2877 = vadd.f32 %v2710, %v2859
  %v2878 = vld [vmem:[%s2711 + $0x1] sm:$0xff]
  %v2879 = vld [vmem:[%s2711 + $0x11] sm:$0xff]
  %v2880 = vld [vmem:[%s2711 + $0x21] sm:$0xff]
  %v2881 = vld [vmem:[%s2711 + $0x31] sm:$0xff]
  %v2882 = vld [vmem:[%s2711 + $0x41] sm:$0xff]
  %v2883 = vld [vmem:[%s2711 + $0x51] sm:$0xff]
  %v2884 = vld [vmem:[%s2711 + $0x61] sm:$0xff]
  %v2885 = vld [vmem:[%s2711 + $0x71] sm:$0xff]
  %v2886 = vld [vmem:[%s2711 + $0xa1] sm:$0xff]
  %v2887 = vld [vmem:[%s2711 + $0xb1] sm:$0xff]
  %v2888 = vld [vmem:[%s2711 + $0xc1] sm:$0xff]
  %v2889 = vld [vmem:[%s2711 + $0xd1] sm:$0xff]
  %v2890 = vld [vmem:[%s2711 + $0xe1] sm:$0xff]
  %v2891 = vld [vmem:[%s2711 + $0xf1] sm:$0xff]
  %v2892 = vld [vmem:[%s2711 + $0x101] sm:$0xff]
  %v2893 = vld [vmem:[%s2711 + $0x111] sm:$0xff]
  %v2894 = vpack.c.bf16 %v2879, %v2878
  %v2895 = vpack.c.bf16 %v2881, %v2880
  %v2896 = vpack.c.bf16 %v2883, %v2882
  %v2897 = vpack.c.bf16 %v2885, %v2884
  %v2898 = vpack.c.bf16 %v2887, %v2886
  %v2899 = vpack.c.bf16 %v2889, %v2888
  %v2900 = vpack.c.bf16 %v2891, %v2890
  %v2901 = vpack.c.bf16 %v2893, %v2892
  %s2902 = scalar_lea.vmem %s2, 28
  %v2903 = vld [vmem:[%s2902] sm:$0xf]
  %v2905 = vsel %vm1500, %v2894, 0
  %v2908 = vsel %vm1500, %v2895, 0
  %v2911 = vsel %vm1500, %v2896, 0
  %v2914 = vsel %vm1500, %v2897, 0
  %v2917 = vsel %vm1500, %v2898, 0
  %v2920 = vsel %vm1500, %v2899, 0
  %v2923 = vsel %vm1500, %v2900, 0
  %v2926 = vsel %vm1500, %v2901, 0
  %v2929 = vsel %vm1822, %v2903, 0
  %2931 = vmatprep.subr.bf16.mxu0 0
  %2932 = vmatpush1.bf16.msra.mxu0 %v2929
  %2933 = vmatprep.subr.bf16.mxu0 0
  %2934 = vmatpush1.bf16.msra.mxu0 0
  %2935 = vmatprep.subr.bf16.mxu0 0
  %2936 = vmatpush1.bf16.msra.mxu0 0
  %2937 = vmatprep.subr.bf16.mxu0 0
  %2938 = vmatpush1.bf16.msra.mxu0 0
  %2939 = vmatprep.subr.bf16.mxu0 0
  %2940 = vmatpush1.bf16.msra.mxu0 0
  %2941 = vmatprep.subr.bf16.mxu0 0
  %2942 = vmatpush1.bf16.msra.mxu0 0
  %2943 = vmatprep.subr.bf16.mxu0 0
  %2944 = vmatpush1.bf16.msra.mxu0 0
  %2945 = vmatprep.subr.bf16.mxu0 0
  %2946 = vmatpush1.bf16.msra.mxu0 0
  %2947 = vmatprep.subr.bf16.mxu0 0
  %2948 = vmatpush1.bf16.msra.mxu0 0
  %2949 = vmatprep.subr.bf16.mxu0 0
  %2950 = vmatpush1.bf16.msra.mxu0 0
  %2951 = vmatprep.subr.bf16.mxu0 0
  %2952 = vmatpush1.bf16.msra.mxu0 0
  %2953 = vmatprep.subr.bf16.mxu0 0
  %2954 = vmatpush1.bf16.msra.mxu0 0
  %2955 = vmatprep.subr.bf16.mxu0 0
  %2956 = vmatpush1.bf16.msra.mxu0 0
  %2957 = vmatprep.subr.bf16.mxu0 0
  %2958 = vmatpush1.bf16.msra.mxu0 0
  %2959 = vmatprep.subr.bf16.mxu0 0
  %2960 = vmatpush1.bf16.msra.mxu0 0
  %2961 = vmatprep.subr.bf16.mxu0 0
  %2962 = vmatpush1.bf16.msra.mxu0 0
  %2963 = vmatprep.mubr.bf16.mxu0 0
  %2964 = vmatmul.mubr.bf16.gmra.mrb[0].mxu0 %v2905
  %v2965 = vpop.f32.mrb[0].mxu0
  %v2966 = vadd.f32 0.0, %v2965
  %v2967 = vpop.f32.mrb[0].mxu0
  %v2968 = vpop.f32.mrb[0].mxu0
  %v2969 = vadd.f32 0.0, %v2968
  %v2970 = vpop.f32.mrb[0].mxu0
  %2971 = vmatprep.mubr.bf16.mxu0 0
  %2972 = vmatmul.mubr.bf16.gmra.mrb[0].mxu0 %v2908
  %v2973 = vpop.f32.mrb[0].mxu0
  %v2974 = vadd.f32 0.0, %v2973
  %v2975 = vpop.f32.mrb[0].mxu0
  %v2976 = vpop.f32.mrb[0].mxu0
  %v2977 = vadd.f32 0.0, %v2976
  %v2978 = vpop.f32.mrb[0].mxu0
  %2979 = vmatprep.mubr.bf16.mxu0 0
  %2980 = vmatmul.mubr.bf16.gmra.mrb[0].mxu0 %v2911
  %v2981 = vpop.f32.mrb[0].mxu0
  %v2982 = vadd.f32 0.0, %v2981
  %v2983 = vpop.f32.mrb[0].mxu0
  %v2984 = vpop.f32.mrb[0].mxu0
  %v2985 = vadd.f32 0.0, %v2984
  %v2986 = vpop.f32.mrb[0].mxu0
  %2987 = vmatprep.mubr.bf16.mxu0 0
  %2988 = vmatmul.mubr.bf16.gmra.mrb[0].mxu0 %v2914
  %v2989 = vpop.f32.mrb[0].mxu0
  %v2990 = vadd.f32 0.0, %v2989
  %v2991 = vpop.f32.mrb[0].mxu0
  %v2992 = vpop.f32.mrb[0].mxu0
  %v2993 = vadd.f32 0.0, %v2992
  %v2994 = vpop.f32.mrb[0].mxu0
  %2995 = vmatprep.mubr.bf16.mxu0 0
  %2996 = vmatmul.mubr.bf16.gmra.mrb[0].mxu0 %v2917
  %v2997 = vpop.f32.mrb[0].mxu0
  %v2998 = vadd.f32 0.0, %v2997
  %v2999 = vpop.f32.mrb[0].mxu0
  %v3000 = vpop.f32.mrb[0].mxu0
  %v3001 = vadd.f32 0.0, %v3000
  %v3002 = vpop.f32.mrb[0].mxu0
  %3003 = vmatprep.mubr.bf16.mxu0 0
  %3004 = vmatmul.mubr.bf16.gmra.mrb[0].mxu0 %v2920
  %v3005 = vpop.f32.mrb[0].mxu0
  %v3006 = vadd.f32 0.0, %v3005
  %v3007 = vpop.f32.mrb[0].mxu0
  %v3008 = vpop.f32.mrb[0].mxu0
  %v3009 = vadd.f32 0.0, %v3008
  %v3010 = vpop.f32.mrb[0].mxu0
  %3011 = vmatprep.mubr.bf16.mxu0 0
  %3012 = vmatmul.mubr.bf16.gmra.mrb[0].mxu0 %v2923
  %v3013 = vpop.f32.mrb[0].mxu0
  %v3014 = vadd.f32 0.0, %v3013
  %v3015 = vpop.f32.mrb[0].mxu0
  %v3016 = vpop.f32.mrb[0].mxu0
  %v3017 = vadd.f32 0.0, %v3016
  %v3018 = vpop.f32.mrb[0].mxu0
  %3019 = vmatprep.mubr.bf16.mxu0 0
  %3020 = vmatmul.mubr.bf16.gmra.mrb[0].mxu0 %v2926
  %v3021 = vpop.f32.mrb[0].mxu0
  %v3022 = vadd.f32 0.0, %v3021
  %v3023 = vpop.f32.mrb[0].mxu0
  %v3024 = vpop.f32.mrb[0].mxu0
  %v3025 = vadd.f32 0.0, %v3024
  %v3026 = vpop.f32.mrb[0].mxu0
  %3027 = vdwg.mxu0
  %v3028 = vadd.f32 %v2862, %v2966
  %v3029 = vadd.f32 %v2863, %v2969
  %v3030 = vadd.f32 %v2864, %v2974
  %v3031 = vadd.f32 %v2865, %v2977
  %v3032 = vadd.f32 %v2866, %v2982
  %v3033 = vadd.f32 %v2867, %v2985
  %v3034 = vadd.f32 %v2868, %v2990
  %v3035 = vadd.f32 %v2869, %v2993
  %v3036 = vadd.f32 %v2870, %v2998
  %v3037 = vadd.f32 %v2871, %v3001
  %v3038 = vadd.f32 %v2872, %v3006
  %v3039 = vadd.f32 %v2873, %v3009
  %v3040 = vadd.f32 %v2874, %v3014
  %v3041 = vadd.f32 %v2875, %v3017
  %v3042 = vadd.f32 %v2876, %v3022
  %v3043 = vadd.f32 %v2877, %v3025
  %v3044 = vld [vmem:[%s2711 + $0x2] sm:$0xff]
  %v3045 = vld [vmem:[%s2711 + $0x12] sm:$0xff]
  %v3046 = vld [vmem:[%s2711 + $0x22] sm:$0xff]
  %v3047 = vld [vmem:[%s2711 + $0x32] sm:$0xff]
  %v3048 = vld [vmem:[%s2711 + $0x42] sm:$0xff]
  %v3049 = vld [vmem:[%s2711 + $0x52] sm:$0xff]
  %v3050 = vld [vmem:[%s2711 + $0x62] sm:$0xff]
  %v3051 = vld [vmem:[%s2711 + $0x72] sm:$0xff]
  %v3052 = vld [vmem:[%s2711 + $0xa2] sm:$0xff]
  %v3053 = vld [vmem:[%s2711 + $0xb2] sm:$0xff]
  %v3054 = vld [vmem:[%s2711 + $0xc2] sm:$0xff]
  %v3055 = vld [vmem:[%s2711 + $0xd2] sm:$0xff]
  %v3056 = vld [vmem:[%s2711 + $0xe2] sm:$0xff]
  %v3057 = vld [vmem:[%s2711 + $0xf2] sm:$0xff]
  %v3058 = vld [vmem:[%s2711 + $0x102] sm:$0xff]
  %v3059 = vld [vmem:[%s2711 + $0x112] sm:$0xff]
  %v3060 = vpack.c.bf16 %v3045, %v3044
  %v3061 = vpack.c.bf16 %v3047, %v3046
  %v3062 = vpack.c.bf16 %v3049, %v3048
  %v3063 = vpack.c.bf16 %v3051, %v3050
  %v3064 = vpack.c.bf16 %v3053, %v3052
  %v3065 = vpack.c.bf16 %v3055, %v3054
  %v3066 = vpack.c.bf16 %v3057, %v3056
  %v3067 = vpack.c.bf16 %v3059, %v3058
  %s3068 = scalar_lea.vmem %s2, 32
  %v3069 = vld [vmem:[%s3068] sm:$0xf]
  %v3071 = vsel %vm1500, %v3060, 0
  %v3074 = vsel %vm1500, %v3061, 0
  %v3077 = vsel %vm1500, %v3062, 0
  %v3080 = vsel %vm1500, %v3063, 0
  %v3083 = vsel %vm1500, %v3064, 0
  %v3086 = vsel %vm1500, %v3065, 0
  %v3089 = vsel %vm1500, %v3066, 0
  %v3092 = vsel %vm1500, %v3067, 0
  %v3095 = vsel %vm1822, %v3069, 0
  %3097 = vmatprep.subr.bf16.mxu0 0
  %3098 = vmatpush1.bf16.msra.mxu0 %v3095
  %3099 = vmatprep.subr.bf16.mxu0 0
  %3100 = vmatpush1.bf16.msra.mxu0 0
  %3101 = vmatprep.subr.bf16.mxu0 0
  %3102 = vmatpush1.bf16.msra.mxu0 0
  %3103 = vmatprep.subr.bf16.mxu0 0
  %3104 = vmatpush1.bf16.msra.mxu0 0
  %3105 = vmatprep.subr.bf16.mxu0 0
  %3106 = vmatpush1.bf16.msra.mxu0 0
  %3107 = vmatprep.subr.bf16.mxu0 0
  %3108 = vmatpush1.bf16.msra.mxu0 0
  %3109 = vmatprep.subr.bf16.mxu0 0
  %3110 = vmatpush1.bf16.msra.mxu0 0
  %3111 = vmatprep.subr.bf16.mxu0 0
  %3112 = vmatpush1.bf16.msra.mxu0 0
  %3113 = vmatprep.subr.bf16.mxu0 0
  %3114 = vmatpush1.bf16.msra.mxu0 0
  %3115 = vmatprep.subr.bf16.mxu0 0
  %3116 = vmatpush1.bf16.msra.mxu0 0
  %3117 = vmatprep.subr.bf16.mxu0 0
  %3118 = vmatpush1.bf16.msra.mxu0 0
  %3119 = vmatprep.subr.bf16.mxu0 0
  %3120 = vmatpush1.bf16.msra.mxu0 0
  %3121 = vmatprep.subr.bf16.mxu0 0
  %3122 = vmatpush1.bf16.msra.mxu0 0
  %3123 = vmatprep.subr.bf16.mxu0 0
  %3124 = vmatpush1.bf16.msra.mxu0 0
  %3125 = vmatprep.subr.bf16.mxu0 0
  %3126 = vmatpush1.bf16.msra.mxu0 0
  %3127 = vmatprep.subr.bf16.mxu0 0
  %3128 = vmatpush1.bf16.msra.mxu0 0
  %3129 = vmatprep.mubr.bf16.mxu0 0
  %3130 = vmatmul.mubr.bf16.gmra.mrb[0].mxu0 %v3071
  %v3131 = vpop.f32.mrb[0].mxu0
  %v3132 = vadd.f32 0.0, %v3131
  %v3133 = vpop.f32.mrb[0].mxu0
  %v3134 = vpop.f32.mrb[0].mxu0
  %v3135 = vadd.f32 0.0, %v3134
  %v3136 = vpop.f32.mrb[0].mxu0
  %3137 = vmatprep.mubr.bf16.mxu0 0
  %3138 = vmatmul.mubr.bf16.gmra.mrb[0].mxu0 %v3074
  %v3139 = vpop.f32.mrb[0].mxu0
  %v3140 = vadd.f32 0.0, %v3139
  %v3141 = vpop.f32.mrb[0].mxu0
  %v3142 = vpop.f32.mrb[0].mxu0
  %v3143 = vadd.f32 0.0, %v3142
  %v3144 = vpop.f32.mrb[0].mxu0
  %3145 = vmatprep.mubr.bf16.mxu0 0
  %3146 = vmatmul.mubr.bf16.gmra.mrb[0].mxu0 %v3077
  %v3147 = vpop.f32.mrb[0].mxu0
  %v3148 = vadd.f32 0.0, %v3147
  %v3149 = vpop.f32.mrb[0].mxu0
  %v3150 = vpop.f32.mrb[0].mxu0
  %v3151 = vadd.f32 0.0, %v3150
  %v3152 = vpop.f32.mrb[0].mxu0
  %3153 = vmatprep.mubr.bf16.mxu0 0
  %3154 = vmatmul.mubr.bf16.gmra.mrb[0].mxu0 %v3080
  %v3155 = vpop.f32.mrb[0].mxu0
  %v3156 = vadd.f32 0.0, %v3155
  %v3157 = vpop.f32.mrb[0].mxu0
  %v3158 = vpop.f32.mrb[0].mxu0
  %v3159 = vadd.f32 0.0, %v3158
  %v3160 = vpop.f32.mrb[0].mxu0
  %3161 = vmatprep.mubr.bf16.mxu0 0
  %3162 = vmatmul.mubr.bf16.gmra.mrb[0].mxu0 %v3083
  %v3163 = vpop.f32.mrb[0].mxu0
  %v3164 = vadd.f32 0.0, %v3163
  %v3165 = vpop.f32.mrb[0].mxu0
  %v3166 = vpop.f32.mrb[0].mxu0
  %v3167 = vadd.f32 0.0, %v3166
  %v3168 = vpop.f32.mrb[0].mxu0
  %3169 = vmatprep.mubr.bf16.mxu0 0
  %3170 = vmatmul.mubr.bf16.gmra.mrb[0].mxu0 %v3086
  %v3171 = vpop.f32.mrb[0].mxu0
  %v3172 = vadd.f32 0.0, %v3171
  %v3173 = vpop.f32.mrb[0].mxu0
  %v3174 = vpop.f32.mrb[0].mxu0
  %v3175 = vadd.f32 0.0, %v3174
  %v3176 = vpop.f32.mrb[0].mxu0
  %3177 = vmatprep.mubr.bf16.mxu0 0
  %3178 = vmatmul.mubr.bf16.gmra.mrb[0].mxu0 %v3089
  %v3179 = vpop.f32.mrb[0].mxu0
  %v3180 = vadd.f32 0.0, %v3179
  %v3181 = vpop.f32.mrb[0].mxu0
  %v3182 = vpop.f32.mrb[0].mxu0
  %v3183 = vadd.f32 0.0, %v3182
  %v3184 = vpop.f32.mrb[0].mxu0
  %3185 = vmatprep.mubr.bf16.mxu0 0
  %3186 = vmatmul.mubr.bf16.gmra.mrb[0].mxu0 %v3092
  %v3187 = vpop.f32.mrb[0].mxu0
  %v3188 = vadd.f32 0.0, %v3187
  %v3189 = vpop.f32.mrb[0].mxu0
  %v3190 = vpop.f32.mrb[0].mxu0
  %v3191 = vadd.f32 0.0, %v3190
  %v3192 = vpop.f32.mrb[0].mxu0
  %3193 = vdwg.mxu0
  %v3194 = vadd.f32 %v3028, %v3132
  %v3195 = vadd.f32 %v3029, %v3135
  %v3196 = vadd.f32 %v3030, %v3140
  %v3197 = vadd.f32 %v3031, %v3143
  %v3198 = vadd.f32 %v3032, %v3148
  %v3199 = vadd.f32 %v3033, %v3151
  %v3200 = vadd.f32 %v3034, %v3156
  %v3201 = vadd.f32 %v3035, %v3159
  %v3202 = vadd.f32 %v3036, %v3164
  %v3203 = vadd.f32 %v3037, %v3167
  %v3204 = vadd.f32 %v3038, %v3172
  %v3205 = vadd.f32 %v3039, %v3175
  %v3206 = vadd.f32 %v3040, %v3180
  %v3207 = vadd.f32 %v3041, %v3183
  %v3208 = vadd.f32 %v3042, %v3188
  %v3209 = vadd.f32 %v3043, %v3191
  %v3210 = vld [vmem:[%s4] sm:$0x1]
  %v3211 = vld [vmem:[%s5] sm:$0x1]
  %v3212 = vsel %vm1500, %v3194, 0.0
  %v3213 = vsel %vm1500, %v3195, 0.0
  %v3214 = vadd.f32 %v3212, %v3213
  %v3215 = vsel %vm1500, %v3196, 0.0
  %v3216 = vadd.f32 %v3214, %v3215
  %v3217 = vsel %vm1500, %v3197, 0.0
  %v3218 = vadd.f32 %v3216, %v3217
  %v3219 = vsel %vm1500, %v3198, 0.0
  %v3220 = vadd.f32 %v3218, %v3219
  %v3221 = vsel %vm1500, %v3199, 0.0
  %v3222 = vadd.f32 %v3220, %v3221
  %v3223 = vsel %vm1500, %v3200, 0.0
  %v3224 = vadd.f32 %v3222, %v3223
  %v3225 = vsel %vm1500, %v3201, 0.0
  %v3226 = vadd.f32 %v3224, %v3225
  %v3227 = vsel %vm1500, %v3202, 0.0
  %v3228 = vadd.f32 %v3226, %v3227
  %v3229 = vsel %vm1500, %v3203, 0.0
  %v3230 = vadd.f32 %v3228, %v3229
  %v3231 = vsel %vm1500, %v3204, 0.0
  %v3232 = vadd.f32 %v3230, %v3231
  %v3233 = vsel %vm1500, %v3205, 0.0
  %v3234 = vadd.f32 %v3232, %v3233
  %v3235 = vsel %vm1500, %v3206, 0.0
  %v3236 = vadd.f32 %v3234, %v3235
  %v3237 = vsel %vm1500, %v3207, 0.0
  %v3238 = vadd.f32 %v3236, %v3237
  %v3239 = vsel %vm1500, %v3208, 0.0
  %v3240 = vadd.f32 %v3238, %v3239
  %v3241 = vsel %vm1500, %v3209, 0.0
  %v3242 = vadd.f32 %v3240, %v3241
  %v3243 = vrot.slane %v3242, 4
  %v3244 = vadd.f32 %v3242, %v3243
  %v3245 = vrot.slane %v3244, 2
  %v3246 = vadd.f32 %v3244, %v3245
  %v3247 = vrot.slane %v3246, 1
  %v3248 = vadd.f32 %v3246, %v3247
  %v3249 = vmul.f32 %v3248, 0.0078125
  %v3250 = vmul.f32 %v3194, %v3194
  %v3251 = vmul.f32 %v3195, %v3195
  %v3252 = vmul.f32 %v3196, %v3196
  %v3253 = vmul.f32 %v3197, %v3197
  %v3254 = vmul.f32 %v3198, %v3198
  %v3255 = vmul.f32 %v3199, %v3199
  %v3256 = vmul.f32 %v3200, %v3200
  %v3257 = vmul.f32 %v3201, %v3201
  %v3258 = vmul.f32 %v3202, %v3202
  %v3259 = vmul.f32 %v3203, %v3203
  %v3260 = vmul.f32 %v3204, %v3204
  %v3261 = vmul.f32 %v3205, %v3205
  %v3262 = vmul.f32 %v3206, %v3206
  %v3263 = vmul.f32 %v3207, %v3207
  %v3264 = vmul.f32 %v3208, %v3208
  %v3265 = vmul.f32 %v3209, %v3209
  %v3266 = vsel %vm1500, %v3250, 0.0
  %v3267 = vsel %vm1500, %v3251, 0.0
  %v3268 = vadd.f32 %v3266, %v3267
  %v3269 = vsel %vm1500, %v3252, 0.0
  %v3270 = vadd.f32 %v3268, %v3269
  %v3271 = vsel %vm1500, %v3253, 0.0
  %v3272 = vadd.f32 %v3270, %v3271
  %v3273 = vsel %vm1500, %v3254, 0.0
  %v3274 = vadd.f32 %v3272, %v3273
  %v3275 = vsel %vm1500, %v3255, 0.0
  %v3276 = vadd.f32 %v3274, %v3275
  %v3277 = vsel %vm1500, %v3256, 0.0
  %v3278 = vadd.f32 %v3276, %v3277
  %v3279 = vsel %vm1500, %v3257, 0.0
  %v3280 = vadd.f32 %v3278, %v3279
  %v3281 = vsel %vm1500, %v3258, 0.0
  %v3282 = vadd.f32 %v3280, %v3281
  %v3283 = vsel %vm1500, %v3259, 0.0
  %v3284 = vadd.f32 %v3282, %v3283
  %v3285 = vsel %vm1500, %v3260, 0.0
  %v3286 = vadd.f32 %v3284, %v3285
  %v3287 = vsel %vm1500, %v3261, 0.0
  %v3288 = vadd.f32 %v3286, %v3287
  %v3289 = vsel %vm1500, %v3262, 0.0
  %v3290 = vadd.f32 %v3288, %v3289
  %v3291 = vsel %vm1500, %v3263, 0.0
  %v3292 = vadd.f32 %v3290, %v3291
  %v3293 = vsel %vm1500, %v3264, 0.0
  %v3294 = vadd.f32 %v3292, %v3293
  %v3295 = vsel %vm1500, %v3265, 0.0
  %v3296 = vadd.f32 %v3294, %v3295
  %v3297 = vrot.slane %v3296, 4
  %v3298 = vadd.f32 %v3296, %v3297
  %v3299 = vrot.slane %v3298, 2
  %v3300 = vadd.f32 %v3298, %v3299
  %v3301 = vrot.slane %v3300, 1
  %v3302 = vadd.f32 %v3300, %v3301
  %v3303 = vmul.f32 %v3302, 0.0078125
  %v3304 = vmul.f32 %v3249, %v3249
  %v3305 = vsub.f32 %v3303, %v3304
  %v3306 = vsub.f32 %v3194, %v3249
  %v3307 = vsub.f32 %v3195, %v3249
  %v3308 = vsub.f32 %v3196, %v3249
  %v3309 = vsub.f32 %v3197, %v3249
  %v3310 = vsub.f32 %v3198, %v3249
  %v3311 = vsub.f32 %v3199, %v3249
  %v3312 = vsub.f32 %v3200, %v3249
  %v3313 = vsub.f32 %v3201, %v3249
  %v3314 = vsub.f32 %v3202, %v3249
  %v3315 = vsub.f32 %v3203, %v3249
  %v3316 = vsub.f32 %v3204, %v3249
  %v3317 = vsub.f32 %v3205, %v3249
  %v3318 = vsub.f32 %v3206, %v3249
  %v3319 = vsub.f32 %v3207, %v3249
  %v3320 = vsub.f32 %v3208, %v3249
  %v3321 = vsub.f32 %v3209, %v3249
  %v3322 = vadd.f32 %v3305, 1e-05
  %v3323 = vrsqrt.pop %v3322
  %v3324 = vmul.f32 %v3306, %v3323
  %v3325 = vmul.f32 %v3307, %v3323
  %v3326 = vmul.f32 %v3308, %v3323
  %v3327 = vmul.f32 %v3309, %v3323
  %v3328 = vmul.f32 %v3310, %v3323
  %v3329 = vmul.f32 %v3311, %v3323
  %v3330 = vmul.f32 %v3312, %v3323
  %v3331 = vmul.f32 %v3313, %v3323
  %v3332 = vmul.f32 %v3314, %v3323
  %v3333 = vmul.f32 %v3315, %v3323
  %v3334 = vmul.f32 %v3316, %v3323
  %v3335 = vmul.f32 %v3317, %v3323
  %v3336 = vmul.f32 %v3318, %v3323
  %v3337 = vmul.f32 %v3319, %v3323
  %v3338 = vmul.f32 %v3320, %v3323
  %v3339 = vmul.f32 %v3321, %v3323
  %v3341 = vlaneseq
  %v3342 = vshrl.u32 %v3341, 7
  %v3343 = vsub.s32 0, %v3342
  %v3344 = vrot.slane %v3210, %v3343
  %v3346 = vmul.f32 %v3324, %v3344
  %v3347 = vmul.f32 %v3325, %v3344
  %v3348 = vmul.f32 %v3326, %v3344
  %v3349 = vmul.f32 %v3327, %v3344
  %v3350 = vmul.f32 %v3328, %v3344
  %v3351 = vmul.f32 %v3329, %v3344
  %v3352 = vmul.f32 %v3330, %v3344
  %v3353 = vmul.f32 %v3331, %v3344
  %v3354 = vmul.f32 %v3332, %v3344
  %v3355 = vmul.f32 %v3333, %v3344
  %v3356 = vmul.f32 %v3334, %v3344
  %v3357 = vmul.f32 %v3335, %v3344
  %v3358 = vmul.f32 %v3336, %v3344
  %v3359 = vmul.f32 %v3337, %v3344
  %v3360 = vmul.f32 %v3338, %v3344
  %v3361 = vmul.f32 %v3339, %v3344
  %v3363 = vlaneseq
  %v3364 = vshrl.u32 %v3363, 7
  %v3365 = vsub.s32 0, %v3364
  %v3366 = vrot.slane %v3211, %v3365
  %v3368 = vadd.f32 %v3346, %v3366
  %v3369 = vadd.f32 %v3347, %v3366
  %v3370 = vadd.f32 %v3348, %v3366
  %v3371 = vadd.f32 %v3349, %v3366
  %v3372 = vadd.f32 %v3350, %v3366
  %v3373 = vadd.f32 %v3351, %v3366
  %v3374 = vadd.f32 %v3352, %v3366
  %v3375 = vadd.f32 %v3353, %v3366
  %v3376 = vadd.f32 %v3354, %v3366
  %v3377 = vadd.f32 %v3355, %v3366
  %v3378 = vadd.f32 %v3356, %v3366
  %v3379 = vadd.f32 %v3357, %v3366
  %v3380 = vadd.f32 %v3358, %v3366
  %v3381 = vadd.f32 %v3359, %v3366
  %v3382 = vadd.f32 %v3360, %v3366
  %v3383 = vadd.f32 %v3361, %v3366
  %v3384 = vmax.f32 %v3368, 0.0
  %v3385 = vmax.f32 %v3369, 0.0
  %v3386 = vmax.f32 %v3370, 0.0
  %v3387 = vmax.f32 %v3371, 0.0
  %v3388 = vmax.f32 %v3372, 0.0
  %v3389 = vmax.f32 %v3373, 0.0
  %v3390 = vmax.f32 %v3374, 0.0
  %v3391 = vmax.f32 %v3375, 0.0
  %v3392 = vmax.f32 %v3376, 0.0
  %v3393 = vmax.f32 %v3377, 0.0
  %v3394 = vmax.f32 %v3378, 0.0
  %v3395 = vmax.f32 %v3379, 0.0
  %v3396 = vmax.f32 %v3380, 0.0
  %v3397 = vmax.f32 %v3381, 0.0
  %v3398 = vmax.f32 %v3382, 0.0
  %v3399 = vmax.f32 %v3383, 0.0
  %v3400 = vld [vmem:[%s665] sm:$0xff]
  %v3401 = vld [vmem:[%s665 + $0x10] sm:$0xff]
  %v3402 = vld [vmem:[%s665 + $0x20] sm:$0xff]
  %v3403 = vld [vmem:[%s665 + $0x30] sm:$0xff]
  %v3404 = vld [vmem:[%s665 + $0x40] sm:$0xff]
  %v3405 = vld [vmem:[%s665 + $0x50] sm:$0xff]
  %v3406 = vld [vmem:[%s665 + $0x60] sm:$0xff]
  %v3407 = vld [vmem:[%s665 + $0x70] sm:$0xff]
  %v3408 = vld [vmem:[%s665 + $0x90] sm:$0xff]
  %v3409 = vld [vmem:[%s665 + $0xa0] sm:$0xff]
  %v3410 = vld [vmem:[%s665 + $0xb0] sm:$0xff]
  %v3411 = vld [vmem:[%s665 + $0xc0] sm:$0xff]
  %v3412 = vld [vmem:[%s665 + $0xd0] sm:$0xff]
  %v3413 = vld [vmem:[%s665 + $0xe0] sm:$0xff]
  %v3414 = vld [vmem:[%s665 + $0xf0] sm:$0xff]
  %v3415 = vld [vmem:[%s665 + $0x100] sm:$0xff]
  %v3416 = vpack.c.bf16 %v3401, %v3400
  %v3417 = vpack.c.bf16 %v3403, %v3402
  %v3418 = vpack.c.bf16 %v3405, %v3404
  %v3419 = vpack.c.bf16 %v3407, %v3406
  %v3420 = vpack.c.bf16 %v3409, %v3408
  %v3421 = vpack.c.bf16 %v3411, %v3410
  %v3422 = vpack.c.bf16 %v3413, %v3412
  %v3423 = vpack.c.bf16 %v3415, %v3414
  %v3424 = vld [vmem:[%s3] sm:$0x3]
  %v3426 = vsel %vm82, %v3416, 0
  %v3429 = vsel %vm82, %v3417, 0
  %v3432 = vsel %vm82, %v3418, 0
  %v3435 = vsel %vm82, %v3419, 0
  %v3438 = vsel %vm82, %v3420, 0
  %v3441 = vsel %vm82, %v3421, 0
  %v3444 = vsel %vm82, %v3422, 0
  %v3447 = vsel %vm82, %v3423, 0
  %v3450 = vsel %vm107, %v3424, 0
  %3452 = vmatprep.subr.bf16.mxu0 0
  %3453 = vmatpush1.bf16.msra.mxu0 %v3450
  %3454 = vmatprep.subr.bf16.mxu0 0
  %3455 = vmatpush1.bf16.msra.mxu0 0
  %3456 = vmatprep.subr.bf16.mxu0 0
  %3457 = vmatpush1.bf16.msra.mxu0 0
  %3458 = vmatprep.subr.bf16.mxu0 0
  %3459 = vmatpush1.bf16.msra.mxu0 0
  %3460 = vmatprep.subr.bf16.mxu0 0
  %3461 = vmatpush1.bf16.msra.mxu0 0
  %3462 = vmatprep.subr.bf16.mxu0 0
  %3463 = vmatpush1.bf16.msra.mxu0 0
  %3464 = vmatprep.subr.bf16.mxu0 0
  %3465 = vmatpush1.bf16.msra.mxu0 0
  %3466 = vmatprep.subr.bf16.mxu0 0
  %3467 = vmatpush1.bf16.msra.mxu0 0
  %3468 = vmatprep.subr.bf16.mxu0 0
  %3469 = vmatpush1.bf16.msra.mxu0 0
  %3470 = vmatprep.subr.bf16.mxu0 0
  %3471 = vmatpush1.bf16.msra.mxu0 0
  %3472 = vmatprep.subr.bf16.mxu0 0
  %3473 = vmatpush1.bf16.msra.mxu0 0
  %3474 = vmatprep.subr.bf16.mxu0 0
  %3475 = vmatpush1.bf16.msra.mxu0 0
  %3476 = vmatprep.subr.bf16.mxu0 0
  %3477 = vmatpush1.bf16.msra.mxu0 0
  %3478 = vmatprep.subr.bf16.mxu0 0
  %3479 = vmatpush1.bf16.msra.mxu0 0
  %3480 = vmatprep.subr.bf16.mxu0 0
  %3481 = vmatpush1.bf16.msra.mxu0 0
  %3482 = vmatprep.subr.bf16.mxu0 0
  %3483 = vmatpush1.bf16.msra.mxu0 0
  %3484 = vmatprep.mubr.bf16.mxu0 0
  %3485 = vmatmul.mubr.bf16.gmra.mrb[0].mxu0 %v3426
  %v3486 = vpop.f32.mrb[0].mxu0
  %v3487 = vadd.f32 0.0, %v3486
  %v3488 = vpop.f32.mrb[0].mxu0
  %v3489 = vpop.f32.mrb[0].mxu0
  %v3490 = vadd.f32 0.0, %v3489
  %v3491 = vpop.f32.mrb[0].mxu0
  %3492 = vmatprep.mubr.bf16.mxu0 0
  %3493 = vmatmul.mubr.bf16.gmra.mrb[0].mxu0 %v3429
  %v3494 = vpop.f32.mrb[0].mxu0
  %v3495 = vadd.f32 0.0, %v3494
  %v3496 = vpop.f32.mrb[0].mxu0
  %v3497 = vpop.f32.mrb[0].mxu0
  %v3498 = vadd.f32 0.0, %v3497
  %v3499 = vpop.f32.mrb[0].mxu0
  %3500 = vmatprep.mubr.bf16.mxu0 0
  %3501 = vmatmul.mubr.bf16.gmra.mrb[0].mxu0 %v3432
  %v3502 = vpop.f32.mrb[0].mxu0
  %v3503 = vadd.f32 0.0, %v3502
  %v3504 = vpop.f32.mrb[0].mxu0
  %v3505 = vpop.f32.mrb[0].mxu0
  %v3506 = vadd.f32 0.0, %v3505
  %v3507 = vpop.f32.mrb[0].mxu0
  %3508 = vmatprep.mubr.bf16.mxu0 0
  %3509 = vmatmul.mubr.bf16.gmra.mrb[0].mxu0 %v3435
  %v3510 = vpop.f32.mrb[0].mxu0
  %v3511 = vadd.f32 0.0, %v3510
  %v3512 = vpop.f32.mrb[0].mxu0
  %v3513 = vpop.f32.mrb[0].mxu0
  %v3514 = vadd.f32 0.0, %v3513
  %v3515 = vpop.f32.mrb[0].mxu0
  %3516 = vmatprep.mubr.bf16.mxu0 0
  %3517 = vmatmul.mubr.bf16.gmra.mrb[0].mxu0 %v3438
  %v3518 = vpop.f32.mrb[0].mxu0
  %v3519 = vadd.f32 0.0, %v3518
  %v3520 = vpop.f32.mrb[0].mxu0
  %v3521 = vpop.f32.mrb[0].mxu0
  %v3522 = vadd.f32 0.0, %v3521
  %v3523 = vpop.f32.mrb[0].mxu0
  %3524 = vmatprep.mubr.bf16.mxu0 0
  %3525 = vmatmul.mubr.bf16.gmra.mrb[0].mxu0 %v3441
  %v3526 = vpop.f32.mrb[0].mxu0
  %v3527 = vadd.f32 0.0, %v3526
  %v3528 = vpop.f32.mrb[0].mxu0
  %v3529 = vpop.f32.mrb[0].mxu0
  %v3530 = vadd.f32 0.0, %v3529
  %v3531 = vpop.f32.mrb[0].mxu0
  %3532 = vmatprep.mubr.bf16.mxu0 0
  %3533 = vmatmul.mubr.bf16.gmra.mrb[0].mxu0 %v3444
  %v3534 = vpop.f32.mrb[0].mxu0
  %v3535 = vadd.f32 0.0, %v3534
  %v3536 = vpop.f32.mrb[0].mxu0
  %v3537 = vpop.f32.mrb[0].mxu0
  %v3538 = vadd.f32 0.0, %v3537
  %v3539 = vpop.f32.mrb[0].mxu0
  %3540 = vmatprep.mubr.bf16.mxu0 0
  %3541 = vmatmul.mubr.bf16.gmra.mrb[0].mxu0 %v3447
  %v3542 = vpop.f32.mrb[0].mxu0
  %v3543 = vadd.f32 0.0, %v3542
  %v3544 = vpop.f32.mrb[0].mxu0
  %v3545 = vpop.f32.mrb[0].mxu0
  %v3546 = vadd.f32 0.0, %v3545
  %v3547 = vpop.f32.mrb[0].mxu0
  %3548 = vdwg.mxu0
  %v3549 = vld [vmem:[%s6] sm:$0x1]
  %v3550 = vld [vmem:[%s7] sm:$0x1]
  %v3551 = vsel %vm1500, %v3487, 0.0
  %v3552 = vsel %vm1500, %v3490, 0.0
  %v3553 = vadd.f32 %v3551, %v3552
  %v3554 = vsel %vm1500, %v3495, 0.0
  %v3555 = vadd.f32 %v3553, %v3554
  %v3556 = vsel %vm1500, %v3498, 0.0
  %v3557 = vadd.f32 %v3555, %v3556
  %v3558 = vsel %vm1500, %v3503, 0.0
  %v3559 = vadd.f32 %v3557, %v3558
  %v3560 = vsel %vm1500, %v3506, 0.0
  %v3561 = vadd.f32 %v3559, %v3560
  %v3562 = vsel %vm1500, %v3511, 0.0
  %v3563 = vadd.f32 %v3561, %v3562
  %v3564 = vsel %vm1500, %v3514, 0.0
  %v3565 = vadd.f32 %v3563, %v3564
  %v3566 = vsel %vm1500, %v3519, 0.0
  %v3567 = vadd.f32 %v3565, %v3566
  %v3568 = vsel %vm1500, %v3522, 0.0
  %v3569 = vadd.f32 %v3567, %v3568
  %v3570 = vsel %vm1500, %v3527, 0.0
  %v3571 = vadd.f32 %v3569, %v3570
  %v3572 = vsel %vm1500, %v3530, 0.0
  %v3573 = vadd.f32 %v3571, %v3572
  %v3574 = vsel %vm1500, %v3535, 0.0
  %v3575 = vadd.f32 %v3573, %v3574
  %v3576 = vsel %vm1500, %v3538, 0.0
  %v3577 = vadd.f32 %v3575, %v3576
  %v3578 = vsel %vm1500, %v3543, 0.0
  %v3579 = vadd.f32 %v3577, %v3578
  %v3580 = vsel %vm1500, %v3546, 0.0
  %v3581 = vadd.f32 %v3579, %v3580
  %v3582 = vrot.slane %v3581, 4
  %v3583 = vadd.f32 %v3581, %v3582
  %v3584 = vrot.slane %v3583, 2
  %v3585 = vadd.f32 %v3583, %v3584
  %v3586 = vrot.slane %v3585, 1
  %v3587 = vadd.f32 %v3585, %v3586
  %v3588 = vmul.f32 %v3587, 0.0078125
  %v3589 = vmul.f32 %v3487, %v3487
  %v3590 = vmul.f32 %v3490, %v3490
  %v3591 = vmul.f32 %v3495, %v3495
  %v3592 = vmul.f32 %v3498, %v3498
  %v3593 = vmul.f32 %v3503, %v3503
  %v3594 = vmul.f32 %v3506, %v3506
  %v3595 = vmul.f32 %v3511, %v3511
  %v3596 = vmul.f32 %v3514, %v3514
  %v3597 = vmul.f32 %v3519, %v3519
  %v3598 = vmul.f32 %v3522, %v3522
  %v3599 = vmul.f32 %v3527, %v3527
  %v3600 = vmul.f32 %v3530, %v3530
  %v3601 = vmul.f32 %v3535, %v3535
  %v3602 = vmul.f32 %v3538, %v3538
  %v3603 = vmul.f32 %v3543, %v3543
  %v3604 = vmul.f32 %v3546, %v3546
  %v3605 = vsel %vm1500, %v3589, 0.0
  %v3606 = vsel %vm1500, %v3590, 0.0
  %v3607 = vadd.f32 %v3605, %v3606
  %v3608 = vsel %vm1500, %v3591, 0.0
  %v3609 = vadd.f32 %v3607, %v3608
  %v3610 = vsel %vm1500, %v3592, 0.0
  %v3611 = vadd.f32 %v3609, %v3610
  %v3612 = vsel %vm1500, %v3593, 0.0
  %v3613 = vadd.f32 %v3611, %v3612
  %v3614 = vsel %vm1500, %v3594, 0.0
  %v3615 = vadd.f32 %v3613, %v3614
  %v3616 = vsel %vm1500, %v3595, 0.0
  %v3617 = vadd.f32 %v3615, %v3616
  %v3618 = vsel %vm1500, %v3596, 0.0
  %v3619 = vadd.f32 %v3617, %v3618
  %v3620 = vsel %vm1500, %v3597, 0.0
  %v3621 = vadd.f32 %v3619, %v3620
  %v3622 = vsel %vm1500, %v3598, 0.0
  %v3623 = vadd.f32 %v3621, %v3622
  %v3624 = vsel %vm1500, %v3599, 0.0
  %v3625 = vadd.f32 %v3623, %v3624
  %v3626 = vsel %vm1500, %v3600, 0.0
  %v3627 = vadd.f32 %v3625, %v3626
  %v3628 = vsel %vm1500, %v3601, 0.0
  %v3629 = vadd.f32 %v3627, %v3628
  %v3630 = vsel %vm1500, %v3602, 0.0
  %v3631 = vadd.f32 %v3629, %v3630
  %v3632 = vsel %vm1500, %v3603, 0.0
  %v3633 = vadd.f32 %v3631, %v3632
  %v3634 = vsel %vm1500, %v3604, 0.0
  %v3635 = vadd.f32 %v3633, %v3634
  %v3636 = vrot.slane %v3635, 4
  %v3637 = vadd.f32 %v3635, %v3636
  %v3638 = vrot.slane %v3637, 2
  %v3639 = vadd.f32 %v3637, %v3638
  %v3640 = vrot.slane %v3639, 1
  %v3641 = vadd.f32 %v3639, %v3640
  %v3642 = vmul.f32 %v3641, 0.0078125
  %v3643 = vmul.f32 %v3588, %v3588
  %v3644 = vsub.f32 %v3642, %v3643
  %v3645 = vsub.f32 %v3487, %v3588
  %v3646 = vsub.f32 %v3490, %v3588
  %v3647 = vsub.f32 %v3495, %v3588
  %v3648 = vsub.f32 %v3498, %v3588
  %v3649 = vsub.f32 %v3503, %v3588
  %v3650 = vsub.f32 %v3506, %v3588
  %v3651 = vsub.f32 %v3511, %v3588
  %v3652 = vsub.f32 %v3514, %v3588
  %v3653 = vsub.f32 %v3519, %v3588
  %v3654 = vsub.f32 %v3522, %v3588
  %v3655 = vsub.f32 %v3527, %v3588
  %v3656 = vsub.f32 %v3530, %v3588
  %v3657 = vsub.f32 %v3535, %v3588
  %v3658 = vsub.f32 %v3538, %v3588
  %v3659 = vsub.f32 %v3543, %v3588
  %v3660 = vsub.f32 %v3546, %v3588
  %v3661 = vadd.f32 %v3644, 1e-05
  %v3662 = vrsqrt.pop %v3661
  %v3663 = vmul.f32 %v3645, %v3662
  %v3664 = vmul.f32 %v3646, %v3662
  %v3665 = vmul.f32 %v3647, %v3662
  %v3666 = vmul.f32 %v3648, %v3662
  %v3667 = vmul.f32 %v3649, %v3662
  %v3668 = vmul.f32 %v3650, %v3662
  %v3669 = vmul.f32 %v3651, %v3662
  %v3670 = vmul.f32 %v3652, %v3662
  %v3671 = vmul.f32 %v3653, %v3662
  %v3672 = vmul.f32 %v3654, %v3662
  %v3673 = vmul.f32 %v3655, %v3662
  %v3674 = vmul.f32 %v3656, %v3662
  %v3675 = vmul.f32 %v3657, %v3662
  %v3676 = vmul.f32 %v3658, %v3662
  %v3677 = vmul.f32 %v3659, %v3662
  %v3678 = vmul.f32 %v3660, %v3662
  %v3680 = vlaneseq
  %v3681 = vshrl.u32 %v3680, 7
  %v3682 = vsub.s32 0, %v3681
  %v3683 = vrot.slane %v3549, %v3682
  %v3685 = vmul.f32 %v3663, %v3683
  %v3686 = vmul.f32 %v3664, %v3683
  %v3687 = vmul.f32 %v3665, %v3683
  %v3688 = vmul.f32 %v3666, %v3683
  %v3689 = vmul.f32 %v3667, %v3683
  %v3690 = vmul.f32 %v3668, %v3683
  %v3691 = vmul.f32 %v3669, %v3683
  %v3692 = vmul.f32 %v3670, %v3683
  %v3693 = vmul.f32 %v3671, %v3683
  %v3694 = vmul.f32 %v3672, %v3683
  %v3695 = vmul.f32 %v3673, %v3683
  %v3696 = vmul.f32 %v3674, %v3683
  %v3697 = vmul.f32 %v3675, %v3683
  %v3698 = vmul.f32 %v3676, %v3683
  %v3699 = vmul.f32 %v3677, %v3683
  %v3700 = vmul.f32 %v3678, %v3683
  %v3702 = vlaneseq
  %v3703 = vshrl.u32 %v3702, 7
  %v3704 = vsub.s32 0, %v3703
  %v3705 = vrot.slane %v3550, %v3704
  %v3707 = vadd.f32 %v3685, %v3705
  %v3708 = vadd.f32 %v3686, %v3705
  %v3709 = vadd.f32 %v3687, %v3705
  %v3710 = vadd.f32 %v3688, %v3705
  %v3711 = vadd.f32 %v3689, %v3705
  %v3712 = vadd.f32 %v3690, %v3705
  %v3713 = vadd.f32 %v3691, %v3705
  %v3714 = vadd.f32 %v3692, %v3705
  %v3715 = vadd.f32 %v3693, %v3705
  %v3716 = vadd.f32 %v3694, %v3705
  %v3717 = vadd.f32 %v3695, %v3705
  %v3718 = vadd.f32 %v3696, %v3705
  %v3719 = vadd.f32 %v3697, %v3705
  %v3720 = vadd.f32 %v3698, %v3705
  %v3721 = vadd.f32 %v3699, %v3705
  %v3722 = vadd.f32 %v3700, %v3705
  %v3723 = vadd.f32 %v3707, %v3384
  %v3724 = vadd.f32 %v3708, %v3385
  %v3725 = vadd.f32 %v3709, %v3386
  %v3726 = vadd.f32 %v3710, %v3387
  %v3727 = vadd.f32 %v3711, %v3388
  %v3728 = vadd.f32 %v3712, %v3389
  %v3729 = vadd.f32 %v3713, %v3390
  %v3730 = vadd.f32 %v3714, %v3391
  %v3731 = vadd.f32 %v3715, %v3392
  %v3732 = vadd.f32 %v3716, %v3393
  %v3733 = vadd.f32 %v3717, %v3394
  %v3734 = vadd.f32 %v3718, %v3395
  %v3735 = vadd.f32 %v3719, %v3396
  %v3736 = vadd.f32 %v3720, %v3397
  %v3737 = vadd.f32 %v3721, %v3398
  %v3738 = vadd.f32 %v3722, %v3399
  %v3739 = vlaneseq
  %v3740 = vshrl.u32 %v3739, 7
  %v3741 = vlaneseq
  %v3742 = vand.u32 %v3741, 127
  %vm3743 = vcmp.eq.s32.totalorder %v3740, %v3742
  %v3744 = vsel %vm3743, 1, 0
  %v3745 = vcvt.s32.f32 %v3744
  %v3747 = vsel %vm1500, %v3745, 0
  %v3750 = vsel %vm1500, %v3723, 0
  %v3753 = vsel %vm1500, %v3724, 0
  %v3756 = vsel %vm1500, %v3725, 0
  %v3759 = vsel %vm1500, %v3726, 0
  %v3762 = vsel %vm1500, %v3727, 0
  %v3765 = vsel %vm1500, %v3728, 0
  %v3768 = vsel %vm1500, %v3729, 0
  %v3771 = vsel %vm1500, %v3730, 0
  %v3774 = vsel %vm1500, %v3731, 0
  %v3777 = vsel %vm1500, %v3732, 0
  %v3780 = vsel %vm1500, %v3733, 0
  %v3783 = vsel %vm1500, %v3734, 0
  %v3786 = vsel %vm1500, %v3735, 0
  %v3789 = vsel %vm1500, %v3736, 0
  %v3792 = vsel %vm1500, %v3737, 0
  %v3795 = vsel %vm1500, %v3738, 0
  %3797 = vmatprep.subr.mxu0 0.0
  %3798 = vmatpush1.xpose.msra.mxu0 %v3750
  %3799 = vmatprep.subr.mxu0 0.0
  %3800 = vmatpush1.xpose.msra.mxu0 %v3753
  %3801 = vmatprep.subr.mxu0 0.0
  %3802 = vmatpush1.xpose.msra.mxu0 %v3756
  %3803 = vmatprep.subr.mxu0 0.0
  %3804 = vmatpush1.xpose.msra.mxu0 %v3759
  %3805 = vmatprep.subr.mxu0 0.0
  %3806 = vmatpush1.xpose.msra.mxu0 %v3762
  %3807 = vmatprep.subr.mxu0 0.0
  %3808 = vmatpush1.xpose.msra.mxu0 %v3765
  %3809 = vmatprep.subr.mxu0 0.0
  %3810 = vmatpush1.xpose.msra.mxu0 %v3768
  %3811 = vmatprep.subr.mxu0 0.0
  %3812 = vmatpush1.xpose.msra.mxu0 %v3771
  %3813 = vmatprep.subr.mxu0 0.0
  %3814 = vmatpush1.xpose.msra.mxu0 %v3774
  %3815 = vmatprep.subr.mxu0 0.0
  %3816 = vmatpush1.xpose.msra.mxu0 %v3777
  %3817 = vmatprep.subr.mxu0 0.0
  %3818 = vmatpush1.xpose.msra.mxu0 %v3780
  %3819 = vmatprep.subr.mxu0 0.0
  %3820 = vmatpush1.xpose.msra.mxu0 %v3783
  %3821 = vmatprep.subr.mxu0 0.0
  %3822 = vmatpush1.xpose.msra.mxu0 %v3786
  %3823 = vmatprep.subr.mxu0 0.0
  %3824 = vmatpush1.xpose.msra.mxu0 %v3789
  %3825 = vmatprep.subr.mxu0 0.0
  %3826 = vmatpush1.xpose.msra.mxu0 %v3792
  %3827 = vmatprep.subr.mxu0 0.0
  %3828 = vmatpush1.xpose.msra.mxu0 %v3795
  %3829 = vmatprep.subr.mxu0 0.0
  %3830 = vmatpush1.xpose.msra.mxu0 0.0
  %3831 = vmatprep.subr.mxu0 0.0
  %3832 = vmatpush1.xpose.msra.mxu0 0.0
  %3833 = vmatprep.subr.mxu0 0.0
  %3834 = vmatpush1.xpose.msra.mxu0 0.0
  %3835 = vmatprep.subr.mxu0 0.0
  %3836 = vmatpush1.xpose.msra.mxu0 0.0
  %3837 = vmatprep.subr.mxu0 0.0
  %3838 = vmatpush1.xpose.msra.mxu0 0.0
  %3839 = vmatprep.subr.mxu0 0.0
  %3840 = vmatpush1.xpose.msra.mxu0 0.0
  %3841 = vmatprep.subr.mxu0 0.0
  %3842 = vmatpush1.xpose.msra.mxu0 0.0
  %3843 = vmatprep.subr.mxu0 0.0
  %3844 = vmatpush1.xpose.msra.mxu0 0.0
  %3845 = vmatprep.subr.mxu0 0.0
  %3846 = vmatpush1.xpose.msra.mxu0 0.0
  %3847 = vmatprep.subr.mxu0 0.0
  %3848 = vmatpush1.xpose.msra.mxu0 0.0
  %3849 = vmatprep.subr.mxu0 0.0
  %3850 = vmatpush1.xpose.msra.mxu0 0.0
  %3851 = vmatprep.subr.mxu0 0.0
  %3852 = vmatpush1.xpose.msra.mxu0 0.0
  %3853 = vmatprep.subr.mxu0 0.0
  %3854 = vmatpush1.xpose.msra.mxu0 0.0
  %3855 = vmatprep.subr.mxu0 0.0
  %3856 = vmatpush1.xpose.msra.mxu0 0.0
  %3857 = vmatprep.subr.mxu0 0.0
  %3858 = vmatpush1.xpose.msra.mxu0 0.0
  %3859 = vmatprep.subr.mxu0 0.0
  %3860 = vmatpush1.xpose.msra.mxu0 0.0
  %3861 = vmatprep.mubr.f32.mxu0 0.0
  %3862 = vmatmul.mubr.f32.gmra.mrb[0].mxu0 %v3747
  %v3863 = vpop.f32.mrb[0].mxu0
  %v3864 = vadd.f32 0.0, %v3863
  %v3865 = vpop.f32.mrb[0].mxu0
  %3866 = vdwg.mxu0
  %3867 = vst [vmem:[%s8] sm:$0xff] %v3864
  // Predicated region
  $region34: #{resblk_forward.1} parent=0 // pred_check
    _
  $region35: #{resblk_forward.1} parent=0 // pred_check_branch
    %3869 = sbr.rel (0) target = $region37
  $region36: #{resblk_forward.1} parent=0 // pred_region
    _
  $region37: #{resblk_forward.1} parent=0 // pred_fallthru
    _
  // Predicated region
  $region38: #{resblk_forward.1} parent=0 // pred_check
    _
  $region39: #{resblk_forward.1} parent=0 // pred_check_branch
    %3871 = sbr.rel (0) target = $region41
  $region40: #{resblk_forward.1} parent=0 // pred_region
    _
  $region41: #{resblk_forward.1} parent=0 // pred_fallthru
    _

</llo_original>
